<compile_context>
chip_gen: v6e
topology: v6e:2x2x1
jax: 0.10.0
libtpu: 0.0.40
codegen_flags: <defaults>
</compile_context>

<pallas_src>
import functools

import numpy as np
import jax
import jax.numpy as jnp
from jax.experimental import pallas as pl
from jax.experimental.pallas import tpu as pltpu


def _gennet_kernel(x_ref, w_ref, b_ref, o_ref, *, Hp, Wp, Cin, Cout):
    """One batch element per grid step.

    x_ref: (1, 4, Hp+1, Wp+1, Cin)  padded input, space-to-depth by (row, col)
                                    parity; plane p = 2*(row%2) + (col%2)
    w_ref: (9, Cin, Cout)           conv taps, k = 3*dy + dx
    b_ref: (1, Cout)                conv bias
    o_ref: (1, Cout, Hp*Wp)         pooled output, channel-major (PyTorch order)
    """
    bias = b_ref[...]                                    # (1, Cout), resident
    pooled = jnp.zeros((Hp * Wp, Cout), jnp.float32)

    for a in range(2):                                   # pooling-window row parity
        for b in range(2):                               # pooling-window col parity
            acc = jnp.zeros((Hp * Wp, Cout), jnp.float32)
            for dy in range(3):
                for dx in range(3):
                    u, v = a + dy, b + dx
                    p = (u % 2) * 2 + (v % 2)
                    i0, j0 = u // 2, v // 2
                    # contiguous static slice -> (Hp, Wp, Cin)
                    xs = x_ref[0, p, i0:i0 + Hp, j0:j0 + Wp, :]
                    # leading-dim merge only (layout-preserving), then MXU dot
                    acc = acc + jnp.dot(xs.reshape(Hp * Wp, Cin),
                                        w_ref[3 * dy + dx],
                                        preferred_element_type=jnp.float32)
            # bias + ReLU per conv pixel, then accumulate the 2x2 pool sum (VPU)
            pooled = pooled + jnp.maximum(acc + bias, 0.0)

    # channel-major store: row = co, lane = hp*Wp + wp  (matches NCHW flatten)
    o_ref[0] = (0.25 * pooled).T                         # (Cout, Hp*Wp)


def gennet_forward(x_nchw, conv_w, conv_b):
    """x_nchw: (N, Cin, H, W) f32; conv_w: (Cout, Cin, 3, 3); conv_b: (Cout,)."""
    N, Cin, H, W = x_nchw.shape
    Cout = conv_w.shape[0]
    assert H % 2 == 0 and W % 2 == 0, "AvgPool2d(2) needs even spatial dims"
    Hp, Wp = H // 2, W // 2

    # ---- glue (pure layout, ~1x input bytes): pad + space-to-depth by parity ----
    x_nhwc = jnp.transpose(x_nchw, (0, 2, 3, 1))                       # (N, H, W, Cin)
    x_pad = jnp.pad(x_nhwc, ((0, 0), (1, 1), (1, 1), (0, 0)))          # (N, H+2, W+2, Cin)
    x_s2d = x_pad.reshape(N, Hp + 1, 2, Wp + 1, 2, Cin)
    x_prep = jnp.transpose(x_s2d, (0, 2, 4, 1, 3, 5)).reshape(
        N, 4, Hp + 1, Wp + 1, Cin)                                     # [n, p, i, j, ci]

    # PyTorch OIHW weight -> (k = 3*dy + dx, ci, co); bias -> (1, Cout)
    w_mat = jnp.transpose(conv_w, (2, 3, 1, 0)).reshape(9, Cin, Cout)
    b_mat = conv_b.reshape(1, Cout)

    kernel = functools.partial(_gennet_kernel, Hp=Hp, Wp=Wp, Cin=Cin, Cout=Cout)

    flops = 2 * N * 9 * 4 * Hp * Wp * Cin * Cout                # 36 taps x (HpWp,Cin)@(Cin,Cout)
    bytes_accessed = 4 * (x_prep.size + w_mat.size + b_mat.size + N * Cout * Hp * Wp)

    out = pl.pallas_call(
        kernel,
        out_shape=jax.ShapeDtypeStruct((N, Cout, Hp * Wp), jnp.float32),
        grid=(N,),                                              # one image per step
        in_specs=[
            pl.BlockSpec((1, 4, Hp + 1, Wp + 1, Cin), lambda n: (n, 0, 0, 0, 0)),
            pl.BlockSpec((9, Cin, Cout), lambda n: (0, 0, 0)),  # weights stay resident
            pl.BlockSpec((1, Cout), lambda n: (0, 0)),          # bias stays resident
        ],
        out_specs=pl.BlockSpec((1, Cout, Hp * Wp), lambda n: (n, 0, 0)),
        compiler_params=pltpu.CompilerParams(
            dimension_semantics=("parallel",),                  # megacore over batch (v7x)
            vmem_limit_bytes=32 * 1024 * 1024),                 # safe on v5e/v6e/v7x
        cost_estimate=pl.CostEstimate(flops=flops, transcendentals=0,
                                      bytes_accessed=bytes_accessed),
    )(x_prep, w_mat, b_mat)

    # already in (n, co, hp*Wp + wp) order -> flatten is a free reshape (== .view(N, -1))
    return out.reshape(N, Cout * Hp * Wp)


def gennet_reference(x, conv_w, conv_b):
    """Pure-JAX reference of feat_layer(x).view(N, -1) in PyTorch NCHW semantics."""
    y = jax.lax.conv_general_dilated(
        x, conv_w, window_strides=(1, 1), padding=((1, 1), (1, 1)),
        dimension_numbers=('NCHW', 'OIHW', 'NCHW'))
    y = jnp.maximum(y + conv_b[None, :, None, None], 0.0)
    y = jax.lax.reduce_window(y, 0.0, jax.lax.add,
                              (1, 1, 2, 2), (1, 1, 2, 2), 'VALID') / 4.0
    return y.reshape(y.shape[0], -1)


if __name__ == "__main__":
    key = jax.random.PRNGKey(0)
    kx, kw, kb = jax.random.split(key, 3)

    N, Cin, H, W, Cout = 2, 4, 16, 16, 8
    x = jax.random.normal(kx, (N, Cin, H, W), dtype=jnp.float32)
    # deterministic synthetic "pre_model" feat_layer parameters
    conv_w = 0.1 * jax.random.normal(kw, (Cout, Cin, 3, 3), dtype=jnp.float32)
    conv_b = 0.1 * jax.random.normal(kb, (Cout,), dtype=jnp.float32)

    out = jax.block_until_ready(gennet_forward(x, conv_w, conv_b))
    ref = jax.block_until_ready(gennet_reference(x, conv_w, conv_b))

    assert out.shape == (N, Cout * (H // 2) * (W // 2)), out.shape
    np.testing.assert_allclose(np.asarray(out), np.asarray(ref), rtol=1e-4, atol=1e-4)
    print("KERNEL_OK")
</pallas_src>

<mosaic_0001>
module attributes {stable_mosaic.version = 11 : i64} {
  func.func @_gennet_kernel(%arg0: i32, %arg1: memref<1x4x9x9x4xf32, #tpu.memory_space<vmem>>, %arg2: memref<9x4x8xf32, #tpu.memory_space<vmem>>, %arg3: memref<1x8xf32, #tpu.memory_space<vmem>>, %arg4: memref<1x8x64xf32, #tpu.memory_space<vmem>>) attributes {dimension_semantics = [#tpu.dimension_semantics<parallel>], iteration_bounds = array<i64: 2>, scalar_prefetch = 0 : i64, scratch_operands = 0 : i64, tpu.core_type = #tpu.core_type<tc>, window_params = [{transform_indices = @transform_0, window_bounds = array<i64: 1, 4, 9, 9, 4>}, {pipeline_mode = #tpu.pipeline_mode<synchronous>, transform_indices = @transform_1, window_bounds = array<i64: 9, 4, 8>}, {pipeline_mode = #tpu.pipeline_mode<synchronous>, transform_indices = @transform_2, window_bounds = array<i64: 1, 8>}, {transform_indices = @transform_3, window_bounds = array<i64: 1, 8, 64>}]} {
    %c0 = arith.constant 0 : index
    %c0_0 = arith.constant 0 : index
    %0 = vector.load %arg3[%c0, %c0_0] : memref<1x8xf32, #tpu.memory_space<vmem>>, vector<1x8xf32>
    %cst = arith.constant 0.000000e+00 : f32
    %1 = vector.broadcast %cst : f32 to vector<64x8xf32>
    %cst_1 = arith.constant 0.000000e+00 : f32
    %2 = vector.broadcast %cst_1 : f32 to vector<64x8xf32>
    %c0_2 = arith.constant 0 : index
    %c0_3 = arith.constant 0 : index
    %c0_4 = arith.constant 0 : index
    %c0_5 = arith.constant 0 : index
    %c0_6 = arith.constant 0 : index
    %3 = vector.load %arg1[%c0_2, %c0_3, %c0_4, %c0_5, %c0_6] : memref<1x4x9x9x4xf32, #tpu.memory_space<vmem>>, vector<1x1x8x8x4xf32>
    %4 = vector.shape_cast %3 : vector<1x1x8x8x4xf32> to vector<8x8x4xf32>
    %5 = vector.shape_cast %4 : vector<8x8x4xf32> to vector<64x4xf32>
    %c0_7 = arith.constant 0 : index
    %c0_8 = arith.constant 0 : index
    %c0_9 = arith.constant 0 : index
    %6 = vector.load %arg2[%c0_7, %c0_8, %c0_9] : memref<9x4x8xf32, #tpu.memory_space<vmem>>, vector<1x4x8xf32>
    %7 = vector.shape_cast %6 : vector<1x4x8xf32> to vector<4x8xf32>
    %cst_10 = arith.constant dense<0.000000e+00> : vector<64x8xf32>
    %8 = tpu.matmul %5, %7, %cst_10 {dimension_numbers = #tpu.dot_dimension_numbers<[1], [0], [0], [1], [0, 0, 1, 1], [], []>} : vector<64x4xf32>, vector<4x8xf32>, vector<64x8xf32> -> vector<64x8xf32>
    %9 = arith.addf %2, %8 : vector<64x8xf32>
    %c0_11 = arith.constant 0 : index
    %c1 = arith.constant 1 : index
    %c0_12 = arith.constant 0 : index
    %c0_13 = arith.constant 0 : index
    %c0_14 = arith.constant 0 : index
    %10 = vector.load %arg1[%c0_11, %c1, %c0_12, %c0_13, %c0_14] : memref<1x4x9x9x4xf32, #tpu.memory_space<vmem>>, vector<1x1x8x8x4xf32>
    %11 = vector.shape_cast %10 : vector<1x1x8x8x4xf32> to vector<8x8x4xf32>
    %12 = vector.shape_cast %11 : vector<8x8x4xf32> to vector<64x4xf32>
    %c1_15 = arith.constant 1 : index
    %c0_16 = arith.constant 0 : index
    %c0_17 = arith.constant 0 : index
    %13 = vector.load %arg2[%c1_15, %c0_16, %c0_17] : memref<9x4x8xf32, #tpu.memory_space<vmem>>, vector<1x4x8xf32>
    %14 = vector.shape_cast %13 : vector<1x4x8xf32> to vector<4x8xf32>
    %cst_18 = arith.constant dense<0.000000e+00> : vector<64x8xf32>
    %15 = tpu.matmul %12, %14, %cst_18 {dimension_numbers = #tpu.dot_dimension_numbers<[1], [0], [0], [1], [0, 0, 1, 1], [], []>} : vector<64x4xf32>, vector<4x8xf32>, vector<64x8xf32> -> vector<64x8xf32>
    %16 = arith.addf %9, %15 : vector<64x8xf32>
    %c0_19 = arith.constant 0 : index
    %c0_20 = arith.constant 0 : index
    %c0_21 = arith.constant 0 : index
    %c1_22 = arith.constant 1 : index
    %c0_23 = arith.constant 0 : index
    %17 = vector.load %arg1[%c0_19, %c0_20, %c0_21, %c1_22, %c0_23] : memref<1x4x9x9x4xf32, #tpu.memory_space<vmem>>, vector<1x1x8x8x4xf32>
    %18 = vector.shape_cast %17 : vector<1x1x8x8x4xf32> to vector<8x8x4xf32>
    %19 = vector.shape_cast %18 : vector<8x8x4xf32> to vector<64x4xf32>
    %c2 = arith.constant 2 : index
    %c0_24 = arith.constant 0 : index
    %c0_25 = arith.constant 0 : index
    %20 = vector.load %arg2[%c2, %c0_24, %c0_25] : memref<9x4x8xf32, #tpu.memory_space<vmem>>, vector<1x4x8xf32>
    %21 = vector.shape_cast %20 : vector<1x4x8xf32> to vector<4x8xf32>
    %cst_26 = arith.constant dense<0.000000e+00> : vector<64x8xf32>
    %22 = tpu.matmul %19, %21, %cst_26 {dimension_numbers = #tpu.dot_dimension_numbers<[1], [0], [0], [1], [0, 0, 1, 1], [], []>} : vector<64x4xf32>, vector<4x8xf32>, vector<64x8xf32> -> vector<64x8xf32>
    %23 = arith.addf %16, %22 : vector<64x8xf32>
    %c0_27 = arith.constant 0 : index
    %c2_28 = arith.constant 2 : index
    %c0_29 = arith.constant 0 : index
    %c0_30 = arith.constant 0 : index
    %c0_31 = arith.constant 0 : index
    %24 = vector.load %arg1[%c0_27, %c2_28, %c0_29, %c0_30, %c0_31] : memref<1x4x9x9x4xf32, #tpu.memory_space<vmem>>, vector<1x1x8x8x4xf32>
    %25 = vector.shape_cast %24 : vector<1x1x8x8x4xf32> to vector<8x8x4xf32>
    %26 = vector.shape_cast %25 : vector<8x8x4xf32> to vector<64x4xf32>
    %c3 = arith.constant 3 : index
    %c0_32 = arith.constant 0 : index
    %c0_33 = arith.constant 0 : index
    %27 = vector.load %arg2[%c3, %c0_32, %c0_33] : memref<9x4x8xf32, #tpu.memory_space<vmem>>, vector<1x4x8xf32>
    %28 = vector.shape_cast %27 : vector<1x4x8xf32> to vector<4x8xf32>
    %cst_34 = arith.constant dense<0.000000e+00> : vector<64x8xf32>
    %29 = tpu.matmul %26, %28, %cst_34 {dimension_numbers = #tpu.dot_dimension_numbers<[1], [0], [0], [1], [0, 0, 1, 1], [], []>} : vector<64x4xf32>, vector<4x8xf32>, vector<64x8xf32> -> vector<64x8xf32>
    %30 = arith.addf %23, %29 : vector<64x8xf32>
    %c0_35 = arith.constant 0 : index
    %c3_36 = arith.constant 3 : index
    %c0_37 = arith.constant 0 : index
    %c0_38 = arith.constant 0 : index
    %c0_39 = arith.constant 0 : index
    %31 = vector.load %arg1[%c0_35, %c3_36, %c0_37, %c0_38, %c0_39] : memref<1x4x9x9x4xf32, #tpu.memory_space<vmem>>, vector<1x1x8x8x4xf32>
    %32 = vector.shape_cast %31 : vector<1x1x8x8x4xf32> to vector<8x8x4xf32>
    %33 = vector.shape_cast %32 : vector<8x8x4xf32> to vector<64x4xf32>
    %c4 = arith.constant 4 : index
    %c0_40 = arith.constant 0 : index
    %c0_41 = arith.constant 0 : index
    %34 = vector.load %arg2[%c4, %c0_40, %c0_41] : memref<9x4x8xf32, #tpu.memory_space<vmem>>, vector<1x4x8xf32>
    %35 = vector.shape_cast %34 : vector<1x4x8xf32> to vector<4x8xf32>
    %cst_42 = arith.constant dense<0.000000e+00> : vector<64x8xf32>
    %36 = tpu.matmul %33, %35, %cst_42 {dimension_numbers = #tpu.dot_dimension_numbers<[1], [0], [0], [1], [0, 0, 1, 1], [], []>} : vector<64x4xf32>, vector<4x8xf32>, vector<64x8xf32> -> vector<64x8xf32>
    %37 = arith.addf %30, %36 : vector<64x8xf32>
    %c0_43 = arith.constant 0 : index
    %c2_44 = arith.constant 2 : index
    %c0_45 = arith.constant 0 : index
    %c1_46 = arith.constant 1 : index
    %c0_47 = arith.constant 0 : index
    %38 = vector.load %arg1[%c0_43, %c2_44, %c0_45, %c1_46, %c0_47] : memref<1x4x9x9x4xf32, #tpu.memory_space<vmem>>, vector<1x1x8x8x4xf32>
    %39 = vector.shape_cast %38 : vector<1x1x8x8x4xf32> to vector<8x8x4xf32>
    %40 = vector.shape_cast %39 : vector<8x8x4xf32> to vector<64x4xf32>
    %c5 = arith.constant 5 : index
    %c0_48 = arith.constant 0 : index
    %c0_49 = arith.constant 0 : index
    %41 = vector.load %arg2[%c5, %c0_48, %c0_49] : memref<9x4x8xf32, #tpu.memory_space<vmem>>, vector<1x4x8xf32>
    %42 = vector.shape_cast %41 : vector<1x4x8xf32> to vector<4x8xf32>
    %cst_50 = arith.constant dense<0.000000e+00> : vector<64x8xf32>
    %43 = tpu.matmul %40, %42, %cst_50 {dimension_numbers = #tpu.dot_dimension_numbers<[1], [0], [0], [1], [0, 0, 1, 1], [], []>} : vector<64x4xf32>, vector<4x8xf32>, vector<64x8xf32> -> vector<64x8xf32>
    %44 = arith.addf %37, %43 : vector<64x8xf32>
    %c0_51 = arith.constant 0 : index
    %c0_52 = arith.constant 0 : index
    %c1_53 = arith.constant 1 : index
    %c0_54 = arith.constant 0 : index
    %c0_55 = arith.constant 0 : index
    %45 = vector.load %arg1[%c0_51, %c0_52, %c1_53, %c0_54, %c0_55] : memref<1x4x9x9x4xf32, #tpu.memory_space<vmem>>, vector<1x1x8x8x4xf32>
    %46 = vector.shape_cast %45 : vector<1x1x8x8x4xf32> to vector<8x8x4xf32>
    %47 = vector.shape_cast %46 : vector<8x8x4xf32> to vector<64x4xf32>
    %c6 = arith.constant 6 : index
    %c0_56 = arith.constant 0 : index
    %c0_57 = arith.constant 0 : index
    %48 = vector.load %arg2[%c6, %c0_56, %c0_57] : memref<9x4x8xf32, #tpu.memory_space<vmem>>, vector<1x4x8xf32>
    %49 = vector.shape_cast %48 : vector<1x4x8xf32> to vector<4x8xf32>
    %cst_58 = arith.constant dense<0.000000e+00> : vector<64x8xf32>
    %50 = tpu.matmul %47, %49, %cst_58 {dimension_numbers = #tpu.dot_dimension_numbers<[1], [0], [0], [1], [0, 0, 1, 1], [], []>} : vector<64x4xf32>, vector<4x8xf32>, vector<64x8xf32> -> vector<64x8xf32>
    %51 = arith.addf %44, %50 : vector<64x8xf32>
    %c0_59 = arith.constant 0 : index
    %c1_60 = arith.constant 1 : index
    %c1_61 = arith.constant 1 : index
    %c0_62 = arith.constant 0 : index
    %c0_63 = arith.constant 0 : index
    %52 = vector.load %arg1[%c0_59, %c1_60, %c1_61, %c0_62, %c0_63] : memref<1x4x9x9x4xf32, #tpu.memory_space<vmem>>, vector<1x1x8x8x4xf32>
    %53 = vector.shape_cast %52 : vector<1x1x8x8x4xf32> to vector<8x8x4xf32>
    %54 = vector.shape_cast %53 : vector<8x8x4xf32> to vector<64x4xf32>
    %c7 = arith.constant 7 : index
    %c0_64 = arith.constant 0 : index
    %c0_65 = arith.constant 0 : index
    %55 = vector.load %arg2[%c7, %c0_64, %c0_65] : memref<9x4x8xf32, #tpu.memory_space<vmem>>, vector<1x4x8xf32>
    %56 = vector.shape_cast %55 : vector<1x4x8xf32> to vector<4x8xf32>
    %cst_66 = arith.constant dense<0.000000e+00> : vector<64x8xf32>
    %57 = tpu.matmul %54, %56, %cst_66 {dimension_numbers = #tpu.dot_dimension_numbers<[1], [0], [0], [1], [0, 0, 1, 1], [], []>} : vector<64x4xf32>, vector<4x8xf32>, vector<64x8xf32> -> vector<64x8xf32>
    %58 = arith.addf %51, %57 : vector<64x8xf32>
    %c0_67 = arith.constant 0 : index
    %c0_68 = arith.constant 0 : index
    %c1_69 = arith.constant 1 : index
    %c1_70 = arith.constant 1 : index
    %c0_71 = arith.constant 0 : index
    %59 = vector.load %arg1[%c0_67, %c0_68, %c1_69, %c1_70, %c0_71] : memref<1x4x9x9x4xf32, #tpu.memory_space<vmem>>, vector<1x1x8x8x4xf32>
    %60 = vector.shape_cast %59 : vector<1x1x8x8x4xf32> to vector<8x8x4xf32>
    %61 = vector.shape_cast %60 : vector<8x8x4xf32> to vector<64x4xf32>
    %c8 = arith.constant 8 : index
    %c0_72 = arith.constant 0 : index
    %c0_73 = arith.constant 0 : index
    %62 = vector.load %arg2[%c8, %c0_72, %c0_73] : memref<9x4x8xf32, #tpu.memory_space<vmem>>, vector<1x4x8xf32>
    %63 = vector.shape_cast %62 : vector<1x4x8xf32> to vector<4x8xf32>
    %cst_74 = arith.constant dense<0.000000e+00> : vector<64x8xf32>
    %64 = tpu.matmul %61, %63, %cst_74 {dimension_numbers = #tpu.dot_dimension_numbers<[1], [0], [0], [1], [0, 0, 1, 1], [], []>} : vector<64x4xf32>, vector<4x8xf32>, vector<64x8xf32> -> vector<64x8xf32>
    %65 = arith.addf %58, %64 : vector<64x8xf32>
    %66 = vector.broadcast %0 : vector<1x8xf32> to vector<64x8xf32>
    %67 = arith.addf %65, %66 : vector<64x8xf32>
    %cst_75 = arith.constant 0.000000e+00 : f32
    %68 = vector.broadcast %cst_75 : f32 to vector<64x8xf32>
    %69 = arith.maximumf %67, %68 : vector<64x8xf32>
    %70 = arith.addf %1, %69 : vector<64x8xf32>
    %cst_76 = arith.constant 0.000000e+00 : f32
    %71 = vector.broadcast %cst_76 : f32 to vector<64x8xf32>
    %c0_77 = arith.constant 0 : index
    %c1_78 = arith.constant 1 : index
    %c0_79 = arith.constant 0 : index
    %c0_80 = arith.constant 0 : index
    %c0_81 = arith.constant 0 : index
    %72 = vector.load %arg1[%c0_77, %c1_78, %c0_79, %c0_80, %c0_81] : memref<1x4x9x9x4xf32, #tpu.memory_space<vmem>>, vector<1x1x8x8x4xf32>
    %73 = vector.shape_cast %72 : vector<1x1x8x8x4xf32> to vector<8x8x4xf32>
    %74 = vector.shape_cast %73 : vector<8x8x4xf32> to vector<64x4xf32>
    %c0_82 = arith.constant 0 : index
    %c0_83 = arith.constant 0 : index
    %c0_84 = arith.constant 0 : index
    %75 = vector.load %arg2[%c0_82, %c0_83, %c0_84] : memref<9x4x8xf32, #tpu.memory_space<vmem>>, vector<1x4x8xf32>
    %76 = vector.shape_cast %75 : vector<1x4x8xf32> to vector<4x8xf32>
    %cst_85 = arith.constant dense<0.000000e+00> : vector<64x8xf32>
    %77 = tpu.matmul %74, %76, %cst_85 {dimension_numbers = #tpu.dot_dimension_numbers<[1], [0], [0], [1], [0, 0, 1, 1], [], []>} : vector<64x4xf32>, vector<4x8xf32>, vector<64x8xf32> -> vector<64x8xf32>
    %78 = arith.addf %71, %77 : vector<64x8xf32>
    %c0_86 = arith.constant 0 : index
    %c0_87 = arith.constant 0 : index
    %c0_88 = arith.constant 0 : index
    %c1_89 = arith.constant 1 : index
    %c0_90 = arith.constant 0 : index
    %79 = vector.load %arg1[%c0_86, %c0_87, %c0_88, %c1_89, %c0_90] : memref<1x4x9x9x4xf32, #tpu.memory_space<vmem>>, vector<1x1x8x8x4xf32>
    %80 = vector.shape_cast %79 : vector<1x1x8x8x4xf32> to vector<8x8x4xf32>
    %81 = vector.shape_cast %80 : vector<8x8x4xf32> to vector<64x4xf32>
    %c1_91 = arith.constant 1 : index
    %c0_92 = arith.constant 0 : index
    %c0_93 = arith.constant 0 : index
    %82 = vector.load %arg2[%c1_91, %c0_92, %c0_93] : memref<9x4x8xf32, #tpu.memory_space<vmem>>, vector<1x4x8xf32>
    %83 = vector.shape_cast %82 : vector<1x4x8xf32> to vector<4x8xf32>
    %cst_94 = arith.constant dense<0.000000e+00> : vector<64x8xf32>
    %84 = tpu.matmul %81, %83, %cst_94 {dimension_numbers = #tpu.dot_dimension_numbers<[1], [0], [0], [1], [0, 0, 1, 1], [], []>} : vector<64x4xf32>, vector<4x8xf32>, vector<64x8xf32> -> vector<64x8xf32>
    %85 = arith.addf %78, %84 : vector<64x8xf32>
    %c0_95 = arith.constant 0 : index
    %c1_96 = arith.constant 1 : index
    %c0_97 = arith.constant 0 : index
    %c1_98 = arith.constant 1 : index
    %c0_99 = arith.constant 0 : index
    %86 = vector.load %arg1[%c0_95, %c1_96, %c0_97, %c1_98, %c0_99] : memref<1x4x9x9x4xf32, #tpu.memory_space<vmem>>, vector<1x1x8x8x4xf32>
    %87 = vector.shape_cast %86 : vector<1x1x8x8x4xf32> to vector<8x8x4xf32>
    %88 = vector.shape_cast %87 : vector<8x8x4xf32> to vector<64x4xf32>
    %c2_100 = arith.constant 2 : index
    %c0_101 = arith.constant 0 : index
    %c0_102 = arith.constant 0 : index
    %89 = vector.load %arg2[%c2_100, %c0_101, %c0_102] : memref<9x4x8xf32, #tpu.memory_space<vmem>>, vector<1x4x8xf32>
    %90 = vector.shape_cast %89 : vector<1x4x8xf32> to vector<4x8xf32>
    %cst_103 = arith.constant dense<0.000000e+00> : vector<64x8xf32>
    %91 = tpu.matmul %88, %90, %cst_103 {dimension_numbers = #tpu.dot_dimension_numbers<[1], [0], [0], [1], [0, 0, 1, 1], [], []>} : vector<64x4xf32>, vector<4x8xf32>, vector<64x8xf32> -> vector<64x8xf32>
    %92 = arith.addf %85, %91 : vector<64x8xf32>
    %c0_104 = arith.constant 0 : index
    %c3_105 = arith.constant 3 : index
    %c0_106 = arith.constant 0 : index
    %c0_107 = arith.constant 0 : index
    %c0_108 = arith.constant 0 : index
    %93 = vector.load %arg1[%c0_104, %c3_105, %c0_106, %c0_107, %c0_108] : memref<1x4x9x9x4xf32, #tpu.memory_space<vmem>>, vector<1x1x8x8x4xf32>
    %94 = vector.shape_cast %93 : vector<1x1x8x8x4xf32> to vector<8x8x4xf32>
    %95 = vector.shape_cast %94 : vector<8x8x4xf32> to vector<64x4xf32>
    %c3_109 = arith.constant 3 : index
    %c0_110 = arith.constant 0 : index
    %c0_111 = arith.constant 0 : index
    %96 = vector.load %arg2[%c3_109, %c0_110, %c0_111] : memref<9x4x8xf32, #tpu.memory_space<vmem>>, vector<1x4x8xf32>
    %97 = vector.shape_cast %96 : vector<1x4x8xf32> to vector<4x8xf32>
    %cst_112 = arith.constant dense<0.000000e+00> : vector<64x8xf32>
    %98 = tpu.matmul %95, %97, %cst_112 {dimension_numbers = #tpu.dot_dimension_numbers<[1], [0], [0], [1], [0, 0, 1, 1], [], []>} : vector<64x4xf32>, vector<4x8xf32>, vector<64x8xf32> -> vector<64x8xf32>
    %99 = arith.addf %92, %98 : vector<64x8xf32>
    %c0_113 = arith.constant 0 : index
    %c2_114 = arith.constant 2 : index
    %c0_115 = arith.constant 0 : index
    %c1_116 = arith.constant 1 : index
    %c0_117 = arith.constant 0 : index
    %100 = vector.load %arg1[%c0_113, %c2_114, %c0_115, %c1_116, %c0_117] : memref<1x4x9x9x4xf32, #tpu.memory_space<vmem>>, vector<1x1x8x8x4xf32>
    %101 = vector.shape_cast %100 : vector<1x1x8x8x4xf32> to vector<8x8x4xf32>
    %102 = vector.shape_cast %101 : vector<8x8x4xf32> to vector<64x4xf32>
    %c4_118 = arith.constant 4 : index
    %c0_119 = arith.constant 0 : index
    %c0_120 = arith.constant 0 : index
    %103 = vector.load %arg2[%c4_118, %c0_119, %c0_120] : memref<9x4x8xf32, #tpu.memory_space<vmem>>, vector<1x4x8xf32>
    %104 = vector.shape_cast %103 : vector<1x4x8xf32> to vector<4x8xf32>
    %cst_121 = arith.constant dense<0.000000e+00> : vector<64x8xf32>
    %105 = tpu.matmul %102, %104, %cst_121 {dimension_numbers = #tpu.dot_dimension_numbers<[1], [0], [0], [1], [0, 0, 1, 1], [], []>} : vector<64x4xf32>, vector<4x8xf32>, vector<64x8xf32> -> vector<64x8xf32>
    %106 = arith.addf %99, %105 : vector<64x8xf32>
    %c0_122 = arith.constant 0 : index
    %c3_123 = arith.constant 3 : index
    %c0_124 = arith.constant 0 : index
    %c1_125 = arith.constant 1 : index
    %c0_126 = arith.constant 0 : index
    %107 = vector.load %arg1[%c0_122, %c3_123, %c0_124, %c1_125, %c0_126] : memref<1x4x9x9x4xf32, #tpu.memory_space<vmem>>, vector<1x1x8x8x4xf32>
    %108 = vector.shape_cast %107 : vector<1x1x8x8x4xf32> to vector<8x8x4xf32>
    %109 = vector.shape_cast %108 : vector<8x8x4xf32> to vector<64x4xf32>
    %c5_127 = arith.constant 5 : index
    %c0_128 = arith.constant 0 : index
    %c0_129 = arith.constant 0 : index
    %110 = vector.load %arg2[%c5_127, %c0_128, %c0_129] : memref<9x4x8xf32, #tpu.memory_space<vmem>>, vector<1x4x8xf32>
    %111 = vector.shape_cast %110 : vector<1x4x8xf32> to vector<4x8xf32>
    %cst_130 = arith.constant dense<0.000000e+00> : vector<64x8xf32>
    %112 = tpu.matmul %109, %111, %cst_130 {dimension_numbers = #tpu.dot_dimension_numbers<[1], [0], [0], [1], [0, 0, 1, 1], [], []>} : vector<64x4xf32>, vector<4x8xf32>, vector<64x8xf32> -> vector<64x8xf32>
    %113 = arith.addf %106, %112 : vector<64x8xf32>
    %c0_131 = arith.constant 0 : index
    %c1_132 = arith.constant 1 : index
    %c1_133 = arith.constant 1 : index
    %c0_134 = arith.constant 0 : index
    %c0_135 = arith.constant 0 : index
    %114 = vector.load %arg1[%c0_131, %c1_132, %c1_133, %c0_134, %c0_135] : memref<1x4x9x9x4xf32, #tpu.memory_space<vmem>>, vector<1x1x8x8x4xf32>
    %115 = vector.shape_cast %114 : vector<1x1x8x8x4xf32> to vector<8x8x4xf32>
    %116 = vector.shape_cast %115 : vector<8x8x4xf32> to vector<64x4xf32>
    %c6_136 = arith.constant 6 : index
    %c0_137 = arith.constant 0 : index
    %c0_138 = arith.constant 0 : index
    %117 = vector.load %arg2[%c6_136, %c0_137, %c0_138] : memref<9x4x8xf32, #tpu.memory_space<vmem>>, vector<1x4x8xf32>
    %118 = vector.shape_cast %117 : vector<1x4x8xf32> to vector<4x8xf32>
    %cst_139 = arith.constant dense<0.000000e+00> : vector<64x8xf32>
    %119 = tpu.matmul %116, %118, %cst_139 {dimension_numbers = #tpu.dot_dimension_numbers<[1], [0], [0], [1], [0, 0, 1, 1], [], []>} : vector<64x4xf32>, vector<4x8xf32>, vector<64x8xf32> -> vector<64x8xf32>
    %120 = arith.addf %113, %119 : vector<64x8xf32>
    %c0_140 = arith.constant 0 : index
    %c0_141 = arith.constant 0 : index
    %c1_142 = arith.constant 1 : index
    %c1_143 = arith.constant 1 : index
    %c0_144 = arith.constant 0 : index
    %121 = vector.load %arg1[%c0_140, %c0_141, %c1_142, %c1_143, %c0_144] : memref<1x4x9x9x4xf32, #tpu.memory_space<vmem>>, vector<1x1x8x8x4xf32>
    %122 = vector.shape_cast %121 : vector<1x1x8x8x4xf32> to vector<8x8x4xf32>
    %123 = vector.shape_cast %122 : vector<8x8x4xf32> to vector<64x4xf32>
    %c7_145 = arith.constant 7 : index
    %c0_146 = arith.constant 0 : index
    %c0_147 = arith.constant 0 : index
    %124 = vector.load %arg2[%c7_145, %c0_146, %c0_147] : memref<9x4x8xf32, #tpu.memory_space<vmem>>, vector<1x4x8xf32>
    %125 = vector.shape_cast %124 : vector<1x4x8xf32> to vector<4x8xf32>
    %cst_148 = arith.constant dense<0.000000e+00> : vector<64x8xf32>
    %126 = tpu.matmul %123, %125, %cst_148 {dimension_numbers = #tpu.dot_dimension_numbers<[1], [0], [0], [1], [0, 0, 1, 1], [], []>} : vector<64x4xf32>, vector<4x8xf32>, vector<64x8xf32> -> vector<64x8xf32>
    %127 = arith.addf %120, %126 : vector<64x8xf32>
    %c0_149 = arith.constant 0 : index
    %c1_150 = arith.constant 1 : index
    %c1_151 = arith.constant 1 : index
    %c1_152 = arith.constant 1 : index
    %c0_153 = arith.constant 0 : index
    %128 = vector.load %arg1[%c0_149, %c1_150, %c1_151, %c1_152, %c0_153] : memref<1x4x9x9x4xf32, #tpu.memory_space<vmem>>, vector<1x1x8x8x4xf32>
    %129 = vector.shape_cast %128 : vector<1x1x8x8x4xf32> to vector<8x8x4xf32>
    %130 = vector.shape_cast %129 : vector<8x8x4xf32> to vector<64x4xf32>
    %c8_154 = arith.constant 8 : index
    %c0_155 = arith.constant 0 : index
    %c0_156 = arith.constant 0 : index
    %131 = vector.load %arg2[%c8_154, %c0_155, %c0_156] : memref<9x4x8xf32, #tpu.memory_space<vmem>>, vector<1x4x8xf32>
    %132 = vector.shape_cast %131 : vector<1x4x8xf32> to vector<4x8xf32>
    %cst_157 = arith.constant dense<0.000000e+00> : vector<64x8xf32>
    %133 = tpu.matmul %130, %132, %cst_157 {dimension_numbers = #tpu.dot_dimension_numbers<[1], [0], [0], [1], [0, 0, 1, 1], [], []>} : vector<64x4xf32>, vector<4x8xf32>, vector<64x8xf32> -> vector<64x8xf32>
    %134 = arith.addf %127, %133 : vector<64x8xf32>
    %135 = vector.broadcast %0 : vector<1x8xf32> to vector<64x8xf32>
    %136 = arith.addf %134, %135 : vector<64x8xf32>
    %cst_158 = arith.constant 0.000000e+00 : f32
    %137 = vector.broadcast %cst_158 : f32 to vector<64x8xf32>
    %138 = arith.maximumf %136, %137 : vector<64x8xf32>
    %139 = arith.addf %70, %138 : vector<64x8xf32>
    %cst_159 = arith.constant 0.000000e+00 : f32
    %140 = vector.broadcast %cst_159 : f32 to vector<64x8xf32>
    %c0_160 = arith.constant 0 : index
    %c2_161 = arith.constant 2 : index
    %c0_162 = arith.constant 0 : index
    %c0_163 = arith.constant 0 : index
    %c0_164 = arith.constant 0 : index
    %141 = vector.load %arg1[%c0_160, %c2_161, %c0_162, %c0_163, %c0_164] : memref<1x4x9x9x4xf32, #tpu.memory_space<vmem>>, vector<1x1x8x8x4xf32>
    %142 = vector.shape_cast %141 : vector<1x1x8x8x4xf32> to vector<8x8x4xf32>
    %143 = vector.shape_cast %142 : vector<8x8x4xf32> to vector<64x4xf32>
    %c0_165 = arith.constant 0 : index
    %c0_166 = arith.constant 0 : index
    %c0_167 = arith.constant 0 : index
    %144 = vector.load %arg2[%c0_165, %c0_166, %c0_167] : memref<9x4x8xf32, #tpu.memory_space<vmem>>, vector<1x4x8xf32>
    %145 = vector.shape_cast %144 : vector<1x4x8xf32> to vector<4x8xf32>
    %cst_168 = arith.constant dense<0.000000e+00> : vector<64x8xf32>
    %146 = tpu.matmul %143, %145, %cst_168 {dimension_numbers = #tpu.dot_dimension_numbers<[1], [0], [0], [1], [0, 0, 1, 1], [], []>} : vector<64x4xf32>, vector<4x8xf32>, vector<64x8xf32> -> vector<64x8xf32>
    %147 = arith.addf %140, %146 : vector<64x8xf32>
    %c0_169 = arith.constant 0 : index
    %c3_170 = arith.constant 3 : index
    %c0_171 = arith.constant 0 : index
    %c0_172 = arith.constant 0 : index
    %c0_173 = arith.constant 0 : index
    %148 = vector.load %arg1[%c0_169, %c3_170, %c0_171, %c0_172, %c0_173] : memref<1x4x9x9x4xf32, #tpu.memory_space<vmem>>, vector<1x1x8x8x4xf32>
    %149 = vector.shape_cast %148 : vector<1x1x8x8x4xf32> to vector<8x8x4xf32>
    %150 = vector.shape_cast %149 : vector<8x8x4xf32> to vector<64x4xf32>
    %c1_174 = arith.constant 1 : index
    %c0_175 = arith.constant 0 : index
    %c0_176 = arith.constant 0 : index
    %151 = vector.load %arg2[%c1_174, %c0_175, %c0_176] : memref<9x4x8xf32, #tpu.memory_space<vmem>>, vector<1x4x8xf32>
    %152 = vector.shape_cast %151 : vector<1x4x8xf32> to vector<4x8xf32>
    %cst_177 = arith.constant dense<0.000000e+00> : vector<64x8xf32>
    %153 = tpu.matmul %150, %152, %cst_177 {dimension_numbers = #tpu.dot_dimension_numbers<[1], [0], [0], [1], [0, 0, 1, 1], [], []>} : vector<64x4xf32>, vector<4x8xf32>, vector<64x8xf32> -> vector<64x8xf32>
    %154 = arith.addf %147, %153 : vector<64x8xf32>
    %c0_178 = arith.constant 0 : index
    %c2_179 = arith.constant 2 : index
    %c0_180 = arith.constant 0 : index
    %c1_181 = arith.constant 1 : index
    %c0_182 = arith.constant 0 : index
    %155 = vector.load %arg1[%c0_178, %c2_179, %c0_180, %c1_181, %c0_182] : memref<1x4x9x9x4xf32, #tpu.memory_space<vmem>>, vector<1x1x8x8x4xf32>
    %156 = vector.shape_cast %155 : vector<1x1x8x8x4xf32> to vector<8x8x4xf32>
    %157 = vector.shape_cast %156 : vector<8x8x4xf32> to vector<64x4xf32>
    %c2_183 = arith.constant 2 : index
    %c0_184 = arith.constant 0 : index
    %c0_185 = arith.constant 0 : index
    %158 = vector.load %arg2[%c2_183, %c0_184, %c0_185] : memref<9x4x8xf32, #tpu.memory_space<vmem>>, vector<1x4x8xf32>
    %159 = vector.shape_cast %158 : vector<1x4x8xf32> to vector<4x8xf32>
    %cst_186 = arith.constant dense<0.000000e+00> : vector<64x8xf32>
    %160 = tpu.matmul %157, %159, %cst_186 {dimension_numbers = #tpu.dot_dimension_numbers<[1], [0], [0], [1], [0, 0, 1, 1], [], []>} : vector<64x4xf32>, vector<4x8xf32>, vector<64x8xf32> -> vector<64x8xf32>
    %161 = arith.addf %154, %160 : vector<64x8xf32>
    %c0_187 = arith.constant 0 : index
    %c0_188 = arith.constant 0 : index
    %c1_189 = arith.constant 1 : index
    %c0_190 = arith.constant 0 : index
    %c0_191 = arith.constant 0 : index
    %162 = vector.load %arg1[%c0_187, %c0_188, %c1_189, %c0_190, %c0_191] : memref<1x4x9x9x4xf32, #tpu.memory_space<vmem>>, vector<1x1x8x8x4xf32>
    %163 = vector.shape_cast %162 : vector<1x1x8x8x4xf32> to vector<8x8x4xf32>
    %164 = vector.shape_cast %163 : vector<8x8x4xf32> to vector<64x4xf32>
    %c3_192 = arith.constant 3 : index
    %c0_193 = arith.constant 0 : index
    %c0_194 = arith.constant 0 : index
    %165 = vector.load %arg2[%c3_192, %c0_193, %c0_194] : memref<9x4x8xf32, #tpu.memory_space<vmem>>, vector<1x4x8xf32>
    %166 = vector.shape_cast %165 : vector<1x4x8xf32> to vector<4x8xf32>
    %cst_195 = arith.constant dense<0.000000e+00> : vector<64x8xf32>
    %167 = tpu.matmul %164, %166, %cst_195 {dimension_numbers = #tpu.dot_dimension_numbers<[1], [0], [0], [1], [0, 0, 1, 1], [], []>} : vector<64x4xf32>, vector<4x8xf32>, vector<64x8xf32> -> vector<64x8xf32>
    %168 = arith.addf %161, %167 : vector<64x8xf32>
    %c0_196 = arith.constant 0 : index
    %c1_197 = arith.constant 1 : index
    %c1_198 = arith.constant 1 : index
    %c0_199 = arith.constant 0 : index
    %c0_200 = arith.constant 0 : index
    %169 = vector.load %arg1[%c0_196, %c1_197, %c1_198, %c0_199, %c0_200] : memref<1x4x9x9x4xf32, #tpu.memory_space<vmem>>, vector<1x1x8x8x4xf32>
    %170 = vector.shape_cast %169 : vector<1x1x8x8x4xf32> to vector<8x8x4xf32>
    %171 = vector.shape_cast %170 : vector<8x8x4xf32> to vector<64x4xf32>
    %c4_201 = arith.constant 4 : index
    %c0_202 = arith.constant 0 : index
    %c0_203 = arith.constant 0 : index
    %172 = vector.load %arg2[%c4_201, %c0_202, %c0_203] : memref<9x4x8xf32, #tpu.memory_space<vmem>>, vector<1x4x8xf32>
    %173 = vector.shape_cast %172 : vector<1x4x8xf32> to vector<4x8xf32>
    %cst_204 = arith.constant dense<0.000000e+00> : vector<64x8xf32>
    %174 = tpu.matmul %171, %173, %cst_204 {dimension_numbers = #tpu.dot_dimension_numbers<[1], [0], [0], [1], [0, 0, 1, 1], [], []>} : vector<64x4xf32>, vector<4x8xf32>, vector<64x8xf32> -> vector<64x8xf32>
    %175 = arith.addf %168, %174 : vector<64x8xf32>
    %c0_205 = arith.constant 0 : index
    %c0_206 = arith.constant 0 : index
    %c1_207 = arith.constant 1 : index
    %c1_208 = arith.constant 1 : index
    %c0_209 = arith.constant 0 : index
    %176 = vector.load %arg1[%c0_205, %c0_206, %c1_207, %c1_208, %c0_209] : memref<1x4x9x9x4xf32, #tpu.memory_space<vmem>>, vector<1x1x8x8x4xf32>
    %177 = vector.shape_cast %176 : vector<1x1x8x8x4xf32> to vector<8x8x4xf32>
    %178 = vector.shape_cast %177 : vector<8x8x4xf32> to vector<64x4xf32>
    %c5_210 = arith.constant 5 : index
    %c0_211 = arith.constant 0 : index
    %c0_212 = arith.constant 0 : index
    %179 = vector.load %arg2[%c5_210, %c0_211, %c0_212] : memref<9x4x8xf32, #tpu.memory_space<vmem>>, vector<1x4x8xf32>
    %180 = vector.shape_cast %179 : vector<1x4x8xf32> to vector<4x8xf32>
    %cst_213 = arith.constant dense<0.000000e+00> : vector<64x8xf32>
    %181 = tpu.matmul %178, %180, %cst_213 {dimension_numbers = #tpu.dot_dimension_numbers<[1], [0], [0], [1], [0, 0, 1, 1], [], []>} : vector<64x4xf32>, vector<4x8xf32>, vector<64x8xf32> -> vector<64x8xf32>
    %182 = arith.addf %175, %181 : vector<64x8xf32>
    %c0_214 = arith.constant 0 : index
    %c2_215 = arith.constant 2 : index
    %c1_216 = arith.constant 1 : index
    %c0_217 = arith.constant 0 : index
    %c0_218 = arith.constant 0 : index
    %183 = vector.load %arg1[%c0_214, %c2_215, %c1_216, %c0_217, %c0_218] : memref<1x4x9x9x4xf32, #tpu.memory_space<vmem>>, vector<1x1x8x8x4xf32>
    %184 = vector.shape_cast %183 : vector<1x1x8x8x4xf32> to vector<8x8x4xf32>
    %185 = vector.shape_cast %184 : vector<8x8x4xf32> to vector<64x4xf32>
    %c6_219 = arith.constant 6 : index
    %c0_220 = arith.constant 0 : index
    %c0_221 = arith.constant 0 : index
    %186 = vector.load %arg2[%c6_219, %c0_220, %c0_221] : memref<9x4x8xf32, #tpu.memory_space<vmem>>, vector<1x4x8xf32>
    %187 = vector.shape_cast %186 : vector<1x4x8xf32> to vector<4x8xf32>
    %cst_222 = arith.constant dense<0.000000e+00> : vector<64x8xf32>
    %188 = tpu.matmul %185, %187, %cst_222 {dimension_numbers = #tpu.dot_dimension_numbers<[1], [0], [0], [1], [0, 0, 1, 1], [], []>} : vector<64x4xf32>, vector<4x8xf32>, vector<64x8xf32> -> vector<64x8xf32>
    %189 = arith.addf %182, %188 : vector<64x8xf32>
    %c0_223 = arith.constant 0 : index
    %c3_224 = arith.constant 3 : index
    %c1_225 = arith.constant 1 : index
    %c0_226 = arith.constant 0 : index
    %c0_227 = arith.constant 0 : index
    %190 = vector.load %arg1[%c0_223, %c3_224, %c1_225, %c0_226, %c0_227] : memref<1x4x9x9x4xf32, #tpu.memory_space<vmem>>, vector<1x1x8x8x4xf32>
    %191 = vector.shape_cast %190 : vector<1x1x8x8x4xf32> to vector<8x8x4xf32>
    %192 = vector.shape_cast %191 : vector<8x8x4xf32> to vector<64x4xf32>
    %c7_228 = arith.constant 7 : index
    %c0_229 = arith.constant 0 : index
    %c0_230 = arith.constant 0 : index
    %193 = vector.load %arg2[%c7_228, %c0_229, %c0_230] : memref<9x4x8xf32, #tpu.memory_space<vmem>>, vector<1x4x8xf32>
    %194 = vector.shape_cast %193 : vector<1x4x8xf32> to vector<4x8xf32>
    %cst_231 = arith.constant dense<0.000000e+00> : vector<64x8xf32>
    %195 = tpu.matmul %192, %194, %cst_231 {dimension_numbers = #tpu.dot_dimension_numbers<[1], [0], [0], [1], [0, 0, 1, 1], [], []>} : vector<64x4xf32>, vector<4x8xf32>, vector<64x8xf32> -> vector<64x8xf32>
    %196 = arith.addf %189, %195 : vector<64x8xf32>
    %c0_232 = arith.constant 0 : index
    %c2_233 = arith.constant 2 : index
    %c1_234 = arith.constant 1 : index
    %c1_235 = arith.constant 1 : index
    %c0_236 = arith.constant 0 : index
    %197 = vector.load %arg1[%c0_232, %c2_233, %c1_234, %c1_235, %c0_236] : memref<1x4x9x9x4xf32, #tpu.memory_space<vmem>>, vector<1x1x8x8x4xf32>
    %198 = vector.shape_cast %197 : vector<1x1x8x8x4xf32> to vector<8x8x4xf32>
    %199 = vector.shape_cast %198 : vector<8x8x4xf32> to vector<64x4xf32>
    %c8_237 = arith.constant 8 : index
    %c0_238 = arith.constant 0 : index
    %c0_239 = arith.constant 0 : index
    %200 = vector.load %arg2[%c8_237, %c0_238, %c0_239] : memref<9x4x8xf32, #tpu.memory_space<vmem>>, vector<1x4x8xf32>
    %201 = vector.shape_cast %200 : vector<1x4x8xf32> to vector<4x8xf32>
    %cst_240 = arith.constant dense<0.000000e+00> : vector<64x8xf32>
    %202 = tpu.matmul %199, %201, %cst_240 {dimension_numbers = #tpu.dot_dimension_numbers<[1], [0], [0], [1], [0, 0, 1, 1], [], []>} : vector<64x4xf32>, vector<4x8xf32>, vector<64x8xf32> -> vector<64x8xf32>
    %203 = arith.addf %196, %202 : vector<64x8xf32>
    %204 = vector.broadcast %0 : vector<1x8xf32> to vector<64x8xf32>
    %205 = arith.addf %203, %204 : vector<64x8xf32>
    %cst_241 = arith.constant 0.000000e+00 : f32
    %206 = vector.broadcast %cst_241 : f32 to vector<64x8xf32>
    %207 = arith.maximumf %205, %206 : vector<64x8xf32>
    %208 = arith.addf %139, %207 : vector<64x8xf32>
    %cst_242 = arith.constant 0.000000e+00 : f32
    %209 = vector.broadcast %cst_242 : f32 to vector<64x8xf32>
    %c0_243 = arith.constant 0 : index
    %c3_244 = arith.constant 3 : index
    %c0_245 = arith.constant 0 : index
    %c0_246 = arith.constant 0 : index
    %c0_247 = arith.constant 0 : index
    %210 = vector.load %arg1[%c0_243, %c3_244, %c0_245, %c0_246, %c0_247] : memref<1x4x9x9x4xf32, #tpu.memory_space<vmem>>, vector<1x1x8x8x4xf32>
    %211 = vector.shape_cast %210 : vector<1x1x8x8x4xf32> to vector<8x8x4xf32>
    %212 = vector.shape_cast %211 : vector<8x8x4xf32> to vector<64x4xf32>
    %c0_248 = arith.constant 0 : index
    %c0_249 = arith.constant 0 : index
    %c0_250 = arith.constant 0 : index
    %213 = vector.load %arg2[%c0_248, %c0_249, %c0_250] : memref<9x4x8xf32, #tpu.memory_space<vmem>>, vector<1x4x8xf32>
    %214 = vector.shape_cast %213 : vector<1x4x8xf32> to vector<4x8xf32>
    %cst_251 = arith.constant dense<0.000000e+00> : vector<64x8xf32>
    %215 = tpu.matmul %212, %214, %cst_251 {dimension_numbers = #tpu.dot_dimension_numbers<[1], [0], [0], [1], [0, 0, 1, 1], [], []>} : vector<64x4xf32>, vector<4x8xf32>, vector<64x8xf32> -> vector<64x8xf32>
    %216 = arith.addf %209, %215 : vector<64x8xf32>
    %c0_252 = arith.constant 0 : index
    %c2_253 = arith.constant 2 : index
    %c0_254 = arith.constant 0 : index
    %c1_255 = arith.constant 1 : index
    %c0_256 = arith.constant 0 : index
    %217 = vector.load %arg1[%c0_252, %c2_253, %c0_254, %c1_255, %c0_256] : memref<1x4x9x9x4xf32, #tpu.memory_space<vmem>>, vector<1x1x8x8x4xf32>
    %218 = vector.shape_cast %217 : vector<1x1x8x8x4xf32> to vector<8x8x4xf32>
    %219 = vector.shape_cast %218 : vector<8x8x4xf32> to vector<64x4xf32>
    %c1_257 = arith.constant 1 : index
    %c0_258 = arith.constant 0 : index
    %c0_259 = arith.constant 0 : index
    %220 = vector.load %arg2[%c1_257, %c0_258, %c0_259] : memref<9x4x8xf32, #tpu.memory_space<vmem>>, vector<1x4x8xf32>
    %221 = vector.shape_cast %220 : vector<1x4x8xf32> to vector<4x8xf32>
    %cst_260 = arith.constant dense<0.000000e+00> : vector<64x8xf32>
    %222 = tpu.matmul %219, %221, %cst_260 {dimension_numbers = #tpu.dot_dimension_numbers<[1], [0], [0], [1], [0, 0, 1, 1], [], []>} : vector<64x4xf32>, vector<4x8xf32>, vector<64x8xf32> -> vector<64x8xf32>
    %223 = arith.addf %216, %222 : vector<64x8xf32>
    %c0_261 = arith.constant 0 : index
    %c3_262 = arith.constant 3 : index
    %c0_263 = arith.constant 0 : index
    %c1_264 = arith.constant 1 : index
    %c0_265 = arith.constant 0 : index
    %224 = vector.load %arg1[%c0_261, %c3_262, %c0_263, %c1_264, %c0_265] : memref<1x4x9x9x4xf32, #tpu.memory_space<vmem>>, vector<1x1x8x8x4xf32>
    %225 = vector.shape_cast %224 : vector<1x1x8x8x4xf32> to vector<8x8x4xf32>
    %226 = vector.shape_cast %225 : vector<8x8x4xf32> to vector<64x4xf32>
    %c2_266 = arith.constant 2 : index
    %c0_267 = arith.constant 0 : index
    %c0_268 = arith.constant 0 : index
    %227 = vector.load %arg2[%c2_266, %c0_267, %c0_268] : memref<9x4x8xf32, #tpu.memory_space<vmem>>, vector<1x4x8xf32>
    %228 = vector.shape_cast %227 : vector<1x4x8xf32> to vector<4x8xf32>
    %cst_269 = arith.constant dense<0.000000e+00> : vector<64x8xf32>
    %229 = tpu.matmul %226, %228, %cst_269 {dimension_numbers = #tpu.dot_dimension_numbers<[1], [0], [0], [1], [0, 0, 1, 1], [], []>} : vector<64x4xf32>, vector<4x8xf32>, vector<64x8xf32> -> vector<64x8xf32>
    %230 = arith.addf %223, %229 : vector<64x8xf32>
    %c0_270 = arith.constant 0 : index
    %c1_271 = arith.constant 1 : index
    %c1_272 = arith.constant 1 : index
    %c0_273 = arith.constant 0 : index
    %c0_274 = arith.constant 0 : index
    %231 = vector.load %arg1[%c0_270, %c1_271, %c1_272, %c0_273, %c0_274] : memref<1x4x9x9x4xf32, #tpu.memory_space<vmem>>, vector<1x1x8x8x4xf32>
    %232 = vector.shape_cast %231 : vector<1x1x8x8x4xf32> to vector<8x8x4xf32>
    %233 = vector.shape_cast %232 : vector<8x8x4xf32> to vector<64x4xf32>
    %c3_275 = arith.constant 3 : index
    %c0_276 = arith.constant 0 : index
    %c0_277 = arith.constant 0 : index
    %234 = vector.load %arg2[%c3_275, %c0_276, %c0_277] : memref<9x4x8xf32, #tpu.memory_space<vmem>>, vector<1x4x8xf32>
    %235 = vector.shape_cast %234 : vector<1x4x8xf32> to vector<4x8xf32>
    %cst_278 = arith.constant dense<0.000000e+00> : vector<64x8xf32>
    %236 = tpu.matmul %233, %235, %cst_278 {dimension_numbers = #tpu.dot_dimension_numbers<[1], [0], [0], [1], [0, 0, 1, 1], [], []>} : vector<64x4xf32>, vector<4x8xf32>, vector<64x8xf32> -> vector<64x8xf32>
    %237 = arith.addf %230, %236 : vector<64x8xf32>
    %c0_279 = arith.constant 0 : index
    %c0_280 = arith.constant 0 : index
    %c1_281 = arith.constant 1 : index
    %c1_282 = arith.constant 1 : index
    %c0_283 = arith.constant 0 : index
    %238 = vector.load %arg1[%c0_279, %c0_280, %c1_281, %c1_282, %c0_283] : memref<1x4x9x9x4xf32, #tpu.memory_space<vmem>>, vector<1x1x8x8x4xf32>
    %239 = vector.shape_cast %238 : vector<1x1x8x8x4xf32> to vector<8x8x4xf32>
    %240 = vector.shape_cast %239 : vector<8x8x4xf32> to vector<64x4xf32>
    %c4_284 = arith.constant 4 : index
    %c0_285 = arith.constant 0 : index
    %c0_286 = arith.constant 0 : index
    %241 = vector.load %arg2[%c4_284, %c0_285, %c0_286] : memref<9x4x8xf32, #tpu.memory_space<vmem>>, vector<1x4x8xf32>
    %242 = vector.shape_cast %241 : vector<1x4x8xf32> to vector<4x8xf32>
    %cst_287 = arith.constant dense<0.000000e+00> : vector<64x8xf32>
    %243 = tpu.matmul %240, %242, %cst_287 {dimension_numbers = #tpu.dot_dimension_numbers<[1], [0], [0], [1], [0, 0, 1, 1], [], []>} : vector<64x4xf32>, vector<4x8xf32>, vector<64x8xf32> -> vector<64x8xf32>
    %244 = arith.addf %237, %243 : vector<64x8xf32>
    %c0_288 = arith.constant 0 : index
    %c1_289 = arith.constant 1 : index
    %c1_290 = arith.constant 1 : index
    %c1_291 = arith.constant 1 : index
    %c0_292 = arith.constant 0 : index
    %245 = vector.load %arg1[%c0_288, %c1_289, %c1_290, %c1_291, %c0_292] : memref<1x4x9x9x4xf32, #tpu.memory_space<vmem>>, vector<1x1x8x8x4xf32>
    %246 = vector.shape_cast %245 : vector<1x1x8x8x4xf32> to vector<8x8x4xf32>
    %247 = vector.shape_cast %246 : vector<8x8x4xf32> to vector<64x4xf32>
    %c5_293 = arith.constant 5 : index
    %c0_294 = arith.constant 0 : index
    %c0_295 = arith.constant 0 : index
    %248 = vector.load %arg2[%c5_293, %c0_294, %c0_295] : memref<9x4x8xf32, #tpu.memory_space<vmem>>, vector<1x4x8xf32>
    %249 = vector.shape_cast %248 : vector<1x4x8xf32> to vector<4x8xf32>
    %cst_296 = arith.constant dense<0.000000e+00> : vector<64x8xf32>
    %250 = tpu.matmul %247, %249, %cst_296 {dimension_numbers = #tpu.dot_dimension_numbers<[1], [0], [0], [1], [0, 0, 1, 1], [], []>} : vector<64x4xf32>, vector<4x8xf32>, vector<64x8xf32> -> vector<64x8xf32>
    %251 = arith.addf %244, %250 : vector<64x8xf32>
    %c0_297 = arith.constant 0 : index
    %c3_298 = arith.constant 3 : index
    %c1_299 = arith.constant 1 : index
    %c0_300 = arith.constant 0 : index
    %c0_301 = arith.constant 0 : index
    %252 = vector.load %arg1[%c0_297, %c3_298, %c1_299, %c0_300, %c0_301] : memref<1x4x9x9x4xf32, #tpu.memory_space<vmem>>, vector<1x1x8x8x4xf32>
    %253 = vector.shape_cast %252 : vector<1x1x8x8x4xf32> to vector<8x8x4xf32>
    %254 = vector.shape_cast %253 : vector<8x8x4xf32> to vector<64x4xf32>
    %c6_302 = arith.constant 6 : index
    %c0_303 = arith.constant 0 : index
    %c0_304 = arith.constant 0 : index
    %255 = vector.load %arg2[%c6_302, %c0_303, %c0_304] : memref<9x4x8xf32, #tpu.memory_space<vmem>>, vector<1x4x8xf32>
    %256 = vector.shape_cast %255 : vector<1x4x8xf32> to vector<4x8xf32>
    %cst_305 = arith.constant dense<0.000000e+00> : vector<64x8xf32>
    %257 = tpu.matmul %254, %256, %cst_305 {dimension_numbers = #tpu.dot_dimension_numbers<[1], [0], [0], [1], [0, 0, 1, 1], [], []>} : vector<64x4xf32>, vector<4x8xf32>, vector<64x8xf32> -> vector<64x8xf32>
    %258 = arith.addf %251, %257 : vector<64x8xf32>
    %c0_306 = arith.constant 0 : index
    %c2_307 = arith.constant 2 : index
    %c1_308 = arith.constant 1 : index
    %c1_309 = arith.constant 1 : index
    %c0_310 = arith.constant 0 : index
    %259 = vector.load %arg1[%c0_306, %c2_307, %c1_308, %c1_309, %c0_310] : memref<1x4x9x9x4xf32, #tpu.memory_space<vmem>>, vector<1x1x8x8x4xf32>
    %260 = vector.shape_cast %259 : vector<1x1x8x8x4xf32> to vector<8x8x4xf32>
    %261 = vector.shape_cast %260 : vector<8x8x4xf32> to vector<64x4xf32>
    %c7_311 = arith.constant 7 : index
    %c0_312 = arith.constant 0 : index
    %c0_313 = arith.constant 0 : index
    %262 = vector.load %arg2[%c7_311, %c0_312, %c0_313] : memref<9x4x8xf32, #tpu.memory_space<vmem>>, vector<1x4x8xf32>
    %263 = vector.shape_cast %262 : vector<1x4x8xf32> to vector<4x8xf32>
    %cst_314 = arith.constant dense<0.000000e+00> : vector<64x8xf32>
    %264 = tpu.matmul %261, %263, %cst_314 {dimension_numbers = #tpu.dot_dimension_numbers<[1], [0], [0], [1], [0, 0, 1, 1], [], []>} : vector<64x4xf32>, vector<4x8xf32>, vector<64x8xf32> -> vector<64x8xf32>
    %265 = arith.addf %258, %264 : vector<64x8xf32>
    %c0_315 = arith.constant 0 : index
    %c3_316 = arith.constant 3 : index
    %c1_317 = arith.constant 1 : index
    %c1_318 = arith.constant 1 : index
    %c0_319 = arith.constant 0 : index
    %266 = vector.load %arg1[%c0_315, %c3_316, %c1_317, %c1_318, %c0_319] : memref<1x4x9x9x4xf32, #tpu.memory_space<vmem>>, vector<1x1x8x8x4xf32>
    %267 = vector.shape_cast %266 : vector<1x1x8x8x4xf32> to vector<8x8x4xf32>
    %268 = vector.shape_cast %267 : vector<8x8x4xf32> to vector<64x4xf32>
    %c8_320 = arith.constant 8 : index
    %c0_321 = arith.constant 0 : index
    %c0_322 = arith.constant 0 : index
    %269 = vector.load %arg2[%c8_320, %c0_321, %c0_322] : memref<9x4x8xf32, #tpu.memory_space<vmem>>, vector<1x4x8xf32>
    %270 = vector.shape_cast %269 : vector<1x4x8xf32> to vector<4x8xf32>
    %cst_323 = arith.constant dense<0.000000e+00> : vector<64x8xf32>
    %271 = tpu.matmul %268, %270, %cst_323 {dimension_numbers = #tpu.dot_dimension_numbers<[1], [0], [0], [1], [0, 0, 1, 1], [], []>} : vector<64x4xf32>, vector<4x8xf32>, vector<64x8xf32> -> vector<64x8xf32>
    %272 = arith.addf %265, %271 : vector<64x8xf32>
    %273 = vector.broadcast %0 : vector<1x8xf32> to vector<64x8xf32>
    %274 = arith.addf %272, %273 : vector<64x8xf32>
    %cst_324 = arith.constant 0.000000e+00 : f32
    %275 = vector.broadcast %cst_324 : f32 to vector<64x8xf32>
    %276 = arith.maximumf %274, %275 : vector<64x8xf32>
    %277 = arith.addf %208, %276 : vector<64x8xf32>
    %cst_325 = arith.constant 2.500000e-01 : f32
    %278 = vector.broadcast %cst_325 : f32 to vector<64x8xf32>
    %279 = arith.mulf %278, %277 : vector<64x8xf32>
    %280 = tpu.transpose %279, [1, 0] : vector<64x8xf32> -> vector<8x64xf32>
    %c0_326 = arith.constant 0 : index
    %c0_327 = arith.constant 0 : index
    %c0_328 = arith.constant 0 : index
    %281 = vector.load %arg4[%c0_326, %c0_327, %c0_328] : memref<1x8x64xf32, #tpu.memory_space<vmem>>, vector<1x8x64xf32>
    %282 = vector.shape_cast %281 : vector<1x8x64xf32> to vector<8x64xf32>
    %283 = vector.shape_cast %280 : vector<8x64xf32> to vector<1x8x64xf32>
    tpu.vector_store %arg4[%c0_326, %c0_327, %c0_328], %283 {strides = array<i32>} : memref<1x8x64xf32, #tpu.memory_space<vmem>>, vector<1x8x64xf32>,
    return
  }
  func.func @transform_0(%arg0: i32) -> (i32, i32, i32, i32, i32) {
    %c0_i32 = arith.constant 0 : i32
    %c0_i32_0 = arith.constant 0 : i32
    %c0_i32_1 = arith.constant 0 : i32
    %c0_i32_2 = arith.constant 0 : i32
    %c0_i32_3 = arith.constant 0 : i32
    return %arg0, %c0_i32, %c0_i32_0, %c0_i32_1, %c0_i32_2 : i32, i32, i32, i32, i32
  }
  func.func @transform_1(%arg0: i32) -> (i32, i32, i32) {
    %c0_i32 = arith.constant 0 : i32
    %c0_i32_0 = arith.constant 0 : i32
    %c0_i32_1 = arith.constant 0 : i32
    %c0_i32_2 = arith.constant 0 : i32
    return %c0_i32, %c0_i32_0, %c0_i32_1 : i32, i32, i32
  }
  func.func @transform_2(%arg0: i32) -> (i32, i32) {
    %c0_i32 = arith.constant 0 : i32
    %c0_i32_0 = arith.constant 0 : i32
    %c0_i32_1 = arith.constant 0 : i32
    return %c0_i32, %c0_i32_0 : i32, i32
  }
  func.func @transform_3(%arg0: i32) -> (i32, i32, i32) {
    %c0_i32 = arith.constant 0 : i32
    %c0_i32_0 = arith.constant 0 : i32
    %c0_i32_1 = arith.constant 0 : i32
    return %arg0, %c0_i32, %c0_i32_0 : i32, i32, i32
  }
}

</mosaic_0001>

<llo_original>
// kernel: tpu_custom_call.1
$region0: #{tpu_custom_call.1}
  #allocation0 [shape = 'u32[]', space=smem, size = 0x4, offset = 0x4, fixed_abs, tag = 'smem constant byte address 0x4 - core index']
  #allocation1 [shape = 'u32[144,128]{1,0:T(1,128)}', space=vmem, size = 0x12000, scoped, tag = 'internal scratch']
  %s0 = inlined_call_operand.vmem [shape: f32[2,4,9,9,4], index: 0, kind: input, shape index: {}]
  %s1 = inlined_call_operand.vmem [shape: f32[9,4,8], index: 1, kind: input, shape index: {}]
  %s2 = inlined_call_operand.vmem [shape: f32[1,8], index: 2, kind: input, shape index: {}]
  %s3 = inlined_call_operand.hbm [shape: f32[2,8,64], index: 3, kind: output, shape index: {}]
  %s4 = sld [smem:[#allocation0]]
  $region45: #{tpu_custom_call.1} parent=0
    _
  %s6 = ssub.s32 1, %s4
  %s7 = scalar_select 0, %s6, %s4
  $region1: #{tpu_custom_call.1} parent=0
    #allocation2 [shape = 'u8[8192]{0}', space=vmem, size = 0x2000, scoped, tag = 'output window, operand 0']
    #allocation3 [shape = 's32[2]{0}', space=sflag, size = 0x8, scoped, tag = 'scoped memory for tpu_custom_call.1']
    %8 = vsyncpa [#allocation3], 0
    %s9 = scalar_lea.sflag [#allocation3], 1
    %10 = vsyncpa %s9, 0
    loop: start=0, step=1, limit=4
    $region2: #{tpu_custom_call.1} parent=1 // loop_pre_header
      _
    $region3: #{tpu_custom_call.1} parent=1 // loop_header
      %s12 = sphi 0, %s16
      %p13 = scmp.ge.s32.totalorder %s12, 4
      %s22 = sphi 0, %s24
      %s25 = sphi 0, %s22
      %s26 = sphi 0, %s25
      %s42 = sphi 0, %s26
      %s46 = sphi 0, %s46
      %s48 = sphi 0, %s46
      %s49 = sphi 0, %s48
      %s63 = sphi 0, %s49
      %s67 = sphi 0, %s67
      %s69 = sphi 0, %s67
      %s70 = sphi 0, %s69
      %s84 = sphi 0, %s70
      %s90 = sphi 0, %s92
      %s93 = sphi 0, %s90
      %s94 = sphi 0, %s93
      %s110 = sphi 0, %s94
    $region4: #{tpu_custom_call.1} parent=1 // loop_header_branch
      %15 = sbr.rel (%p13) target = $region8
    $region5: #{tpu_custom_call.1} parent=1 // loop_body
      %s17 = ssub.s32 %s12, 1
      %s18 = ssub.s32 %s12, 2
      %s19 = sadd.s32 %s12, 1
      %s20 = ssub.s32 %s12, %s19
      %p21 = scmp.eq.s32.totalorder %s20, 0
      %s23 = sadd.s32 %s22, 1
      %s24 = scalar_select %p21, %s22, %s23
      %p27 = pneg %p21
      %p28 = scmp.eq.s32.totalorder %s12, 1
      %p29 = por %p27, %p28
      %p30 = scmp.ne.s32.totalorder %s22, %s25
      %p31 = scmp.eq.s32.totalorder %s12, 0
      %p32 = por %p30, %p31
      %p33 = scmp.ne.s32.totalorder %s22, %s25
      %p34 = scmp.eq.s32.totalorder %s17, 1
      %p35 = por %p33, %p34
      %p36 = scmp.ne.s32.totalorder %s25, %s26
      %p37 = scmp.eq.s32.totalorder %s17, 0
      %p38 = por %p36, %p37
      %p39 = scmp.ne.s32.totalorder %s25, %s26
      %p40 = scmp.eq.s32.totalorder %s18, 1
      %p41 = por %p39, %p40
      %p43 = scmp.ne.s32.totalorder %s26, %s42
      %p44 = scmp.eq.s32.totalorder %s18, 0
      %p45 = por %p43, %p44
      %s47 = sadd.s32 %s46, 1
      %p50 = scmp.eq.s32.totalorder %s12, 1
      %p51 = scmp.ne.s32.totalorder %s46, %s48
      %p52 = scmp.eq.s32.totalorder %s12, 0
      %p53 = por %p51, %p52
      %p54 = scmp.ne.s32.totalorder %s46, %s48
      %p55 = scmp.eq.s32.totalorder %s17, 1
      %p56 = por %p54, %p55
      %p57 = scmp.ne.s32.totalorder %s48, %s49
      %p58 = scmp.eq.s32.totalorder %s17, 0
      %p59 = por %p57, %p58
      %p60 = scmp.ne.s32.totalorder %s48, %s49
      %p61 = scmp.eq.s32.totalorder %s18, 1
      %p62 = por %p60, %p61
      %p64 = scmp.ne.s32.totalorder %s49, %s63
      %p65 = scmp.eq.s32.totalorder %s18, 0
      %p66 = por %p64, %p65
      %s68 = sadd.s32 %s67, 1
      %p71 = scmp.eq.s32.totalorder %s12, 1
      %p72 = scmp.ne.s32.totalorder %s67, %s69
      %p73 = scmp.eq.s32.totalorder %s12, 0
      %p74 = por %p72, %p73
      %p75 = scmp.ne.s32.totalorder %s67, %s69
      %p76 = scmp.eq.s32.totalorder %s17, 1
      %p77 = por %p75, %p76
      %p78 = scmp.ne.s32.totalorder %s69, %s70
      %p79 = scmp.eq.s32.totalorder %s17, 0
      %p80 = por %p78, %p79
      %p81 = scmp.ne.s32.totalorder %s69, %s70
      %p82 = scmp.eq.s32.totalorder %s18, 1
      %p83 = por %p81, %p82
      %p85 = scmp.ne.s32.totalorder %s70, %s84
      %p86 = scmp.eq.s32.totalorder %s18, 0
      %p87 = por %p85, %p86
      %s88 = ssub.s32 %s12, %s19
      %p89 = scmp.eq.s32.totalorder %s88, 0
      %s91 = sadd.s32 %s90, 1
      %s92 = scalar_select %p89, %s90, %s91
      %p95 = pneg %p89
      %p96 = scmp.eq.s32.totalorder %s12, 1
      %p97 = por %p95, %p96
      %p98 = scmp.ne.s32.totalorder %s90, %s93
      %p99 = scmp.eq.s32.totalorder %s12, 0
      %p100 = por %p98, %p99
      %p101 = scmp.ne.s32.totalorder %s90, %s93
      %p102 = scmp.eq.s32.totalorder %s17, 1
      %p103 = por %p101, %p102
      %p104 = scmp.ne.s32.totalorder %s93, %s94
      %p105 = scmp.eq.s32.totalorder %s17, 0
      %p106 = por %p104, %p105
      %p107 = scmp.ne.s32.totalorder %s93, %s94
      %p108 = scmp.eq.s32.totalorder %s18, 1
      %p109 = por %p107, %p108
      %p111 = scmp.ne.s32.totalorder %s94, %s110
      %p112 = scmp.eq.s32.totalorder %s18, 0
      %p113 = por %p111, %p112
      %p114 = scmp.le.s32.totalorder 1, %s12
      %p115 = scmp.lt.s32.totalorder %s12, 3
      %p116 = pnand %p114, %p115
      %p117 = pneg %p116
      // Predicated region
      $region9: #{tpu_custom_call.1} parent=5 // pred_check
        _
      $region10: #{tpu_custom_call.1} parent=5 // pred_check_branch
        %119 = sbr.rel (%p116) target = $region12
      $region11: #{tpu_custom_call.1} parent=5 // pred_region
        %s120 = ssub.s32 %s12, 1
        // Predicated region
        $region13: #{tpu_custom_call.1} parent=11 // pred_check
          %p121 = pneg %p59
        $region14: #{tpu_custom_call.1} parent=11 // pred_check_branch
          %123 = sbr.rel (%p121) target = $region16
        $region15: #{tpu_custom_call.1} parent=11 // pred_region
          _
        $region16: #{tpu_custom_call.1} parent=11 // pred_fallthru
          _
        // Predicated region
        $region17: #{tpu_custom_call.1} parent=11 // pred_check
          %p124 = pneg %p80
        $region18: #{tpu_custom_call.1} parent=11 // pred_check_branch
          %126 = sbr.rel (%p124) target = $region20
        $region19: #{tpu_custom_call.1} parent=11 // pred_region
          _
        $region20: #{tpu_custom_call.1} parent=11 // pred_fallthru
          _
      $region12: #{tpu_custom_call.1} parent=5 // pred_fallthru
        _
      %p127 = scmp.lt.s32.totalorder %s12, 2
      // Predicated region
      $region21: #{tpu_custom_call.1} parent=5 // pred_check
        %p128 = pneg %p127
      $region22: #{tpu_custom_call.1} parent=5 // pred_check_branch
        %130 = sbr.rel (%p128) target = $region24
      $region23: #{tpu_custom_call.1} parent=5 // pred_region
        // Predicated region
        $region25: #{tpu_custom_call.1} parent=23 // pred_check
          %p131 = pneg %p32
        $region26: #{tpu_custom_call.1} parent=23 // pred_check_branch
          %133 = sbr.rel (%p131) target = $region28
        $region27: #{tpu_custom_call.1} parent=23 // pred_region
          %p134 = scmp.lt.s32.totalorder %s12, 1
          %s135 = scalar_select %p134, %s12, 1
          %s136 = smul.addr %s135, 72
          %s137 = smul.addr %s136, 8
          %s138 = scalar_lea.vmem %s0, %s137
        $region28: #{tpu_custom_call.1} parent=23 // pred_fallthru
          _
      $region24: #{tpu_custom_call.1} parent=5 // pred_fallthru
        _
      %p139 = scmp.le.s32.totalorder 1, %s12
      %p140 = scmp.lt.s32.totalorder %s12, 3
      %p141 = pnand %p139, %p140
      %p142 = pneg %p141
      // Predicated region
      $region29: #{tpu_custom_call.1} parent=5 // pred_check
        _
      $region30: #{tpu_custom_call.1} parent=5 // pred_check_branch
        %144 = sbr.rel (%p141) target = $region32
      $region31: #{tpu_custom_call.1} parent=5 // pred_region
        %s145 = ssub.s32 %s12, 1
        %p146 = scmp.lt.s32.totalorder %s17, 1
        %s147 = scalar_select %p146, %s17, 1
        %s148 = smul.addr %s147, 72
        %s149 = smul.addr %s148, 8
        %s150 = scalar_lea.vmem %s0, %s149
        %p151 = pneg %p38
        %p152 = pneg %p35
        %p153 = pneg %p59
        %p154 = pneg %p56
        %p155 = pneg %p80
        %p156 = pneg %p77
        %p157 = pneg %p106
        %p158 = pneg %p103
        %s159 = sand.u32 %s93, 1
        %s160 = scalar_lea.sflag [#allocation3], %s159
        %s161 = sand.u32 %s93, 1
        %s162 = smul.addr %s161, 8
        %s163 = scalar_lea.vmem [#allocation2], %s162
        %p164 = scmp.lt.s32.totalorder %s17, 1
        %s165 = scalar_select %p164, %s17, 1
        %s166 = smul.addr %s165, 72
        %s167 = smul.addr %s166, 8
        %s168 = scalar_lea.vmem %s0, %s167
        %v169 = vld [vmem:[%s2] sm:$0x1]
        %v170 = vld [vmem:[%s168] sm:$0xff]
        %v171 = vld [vmem:[%s168 + $0x10] sm:$0xff]
        %v172 = vld [vmem:[%s168 + $0x20] sm:$0xff]
        %v173 = vld [vmem:[%s168 + $0x30] sm:$0xff]
        %v174 = vld [vmem:[%s168 + $0x40] sm:$0xff]
        %v175 = vld [vmem:[%s168 + $0x50] sm:$0xff]
        %v176 = vld [vmem:[%s168 + $0x60] sm:$0xff]
        %v177 = vld [vmem:[%s168 + $0x70] sm:$0xff]
        %v178 = vld [vmem:[%s1] sm:$0xf]
        %s179 = scalar_lea.vmem %s168, 144
        %v180 = vld [vmem:[%s179] sm:$0xff]
        %v181 = vld [vmem:[%s179 + $0x10] sm:$0xff]
        %v182 = vld [vmem:[%s179 + $0x20] sm:$0xff]
        %v183 = vld [vmem:[%s179 + $0x30] sm:$0xff]
        %v184 = vld [vmem:[%s179 + $0x40] sm:$0xff]
        %v185 = vld [vmem:[%s179 + $0x50] sm:$0xff]
        %v186 = vld [vmem:[%s179 + $0x60] sm:$0xff]
        %v187 = vld [vmem:[%s179 + $0x70] sm:$0xff]
        %s188 = scalar_lea.vmem %s1, 4
        %v189 = vld [vmem:[%s188] sm:$0xf]
        %vm190 = vcmask 31744
        %v192 = vsel %vm190, %v180, 0
        %v195 = vsel %vm190, %v181, 0
        %v198 = vsel %vm190, %v182, 0
        %v201 = vsel %vm190, %v183, 0
        %v204 = vsel %vm190, %v184, 0
        %v207 = vsel %vm190, %v185, 0
        %v210 = vsel %vm190, %v186, 0
        %v213 = vsel %vm190, %v187, 0
        %vm215 = vcmask 1043456
        %v217 = vsel %vm215, %v189, 0
        %219 = vmatprep.subr.mxu0 0.0
        %220 = vmatpush1.msra.mxu0 0.0
        %221 = vmatprep.subr.mxu0 0.0
        %222 = vmatpush1.msra.mxu0 0.0
        %223 = vmatprep.subr.mxu0 0.0
        %224 = vmatpush1.msra.mxu0 0.0
        %225 = vmatprep.subr.mxu0 0.0
        %226 = vmatpush1.msra.mxu0 0.0
        %227 = vmatprep.subr.mxu0 0.0
        %228 = vmatpush1.msra.mxu0 0.0
        %229 = vmatprep.subr.mxu0 0.0
        %230 = vmatpush1.msra.mxu0 0.0
        %231 = vmatprep.subr.mxu0 0.0
        %232 = vmatpush1.msra.mxu0 0.0
        %233 = vmatprep.subr.mxu0 0.0
        %234 = vmatpush1.msra.mxu0 0.0
        %235 = vmatprep.subr.mxu0 0.0
        %236 = vmatpush1.msra.mxu0 0.0
        %237 = vmatprep.subr.mxu0 0.0
        %238 = vmatpush1.msra.mxu0 0.0
        %239 = vmatprep.subr.mxu0 0.0
        %240 = vmatpush1.msra.mxu0 0.0
        %241 = vmatprep.subr.mxu0 0.0
        %242 = vmatpush1.msra.mxu0 0.0
        %243 = vmatprep.subr.mxu0 0.0
        %244 = vmatpush1.msra.mxu0 0.0
        %245 = vmatprep.subr.mxu0 0.0
        %246 = vmatpush1.msra.mxu0 0.0
        %247 = vmatprep.subr.mxu0 0.0
        %248 = vmatpush1.msra.mxu0 0.0
        %249 = vmatprep.subr.mxu0 0.0
        %250 = vmatpush1.msra.mxu0 %v217
        %251 = vmatprep.subr.mxu0 0.0
        %252 = vmatpush2.msra.mxu0 0.0
        %253 = vmatprep.subr.mxu0 0.0
        %254 = vmatpush2.msra.mxu0 0.0
        %255 = vmatprep.subr.mxu0 0.0
        %256 = vmatpush2.msra.mxu0 0.0
        %257 = vmatprep.subr.mxu0 0.0
        %258 = vmatpush2.msra.mxu0 0.0
        %259 = vmatprep.subr.mxu0 0.0
        %260 = vmatpush2.msra.mxu0 0.0
        %261 = vmatprep.subr.mxu0 0.0
        %262 = vmatpush2.msra.mxu0 0.0
        %263 = vmatprep.subr.mxu0 0.0
        %264 = vmatpush2.msra.mxu0 0.0
        %265 = vmatprep.subr.mxu0 0.0
        %266 = vmatpush2.msra.mxu0 0.0
        %267 = vmatprep.subr.mxu0 0.0
        %268 = vmatpush2.msra.mxu0 0.0
        %269 = vmatprep.subr.mxu0 0.0
        %270 = vmatpush2.msra.mxu0 0.0
        %271 = vmatprep.subr.mxu0 0.0
        %272 = vmatpush2.msra.mxu0 0.0
        %273 = vmatprep.subr.mxu0 0.0
        %274 = vmatpush2.msra.mxu0 0.0
        %275 = vmatprep.subr.mxu0 0.0
        %276 = vmatpush2.msra.mxu0 0.0
        %277 = vmatprep.subr.mxu0 0.0
        %278 = vmatpush2.msra.mxu0 0.0
        %279 = vmatprep.subr.mxu0 0.0
        %280 = vmatpush2.msra.mxu0 0.0
        %281 = vmatprep.subr.mxu0 0.0
        %282 = vmatpush2.msra.mxu0 0.0
        %283 = vmatprep.mubr.f32.mxu0 0.0
        %284 = vmatmul.mubr.f32.gmra.mxu0 %v192
        %v285 = vpop.f32.mrf.mxu0
        %v286 = vadd.f32 0.0, %v285
        %v287 = vpop.f32.mrf.mxu0
        %288 = vmatprep.mubr.f32.mxu0 0.0
        %289 = vmatmul.mubr.f32.gmra.mxu0 %v195
        %v290 = vpop.f32.mrf.mxu0
        %v291 = vadd.f32 0.0, %v290
        %v292 = vpop.f32.mrf.mxu0
        %293 = vmatprep.mubr.f32.mxu0 0.0
        %294 = vmatmul.mubr.f32.gmra.mxu0 %v198
        %v295 = vpop.f32.mrf.mxu0
        %v296 = vadd.f32 0.0, %v295
        %v297 = vpop.f32.mrf.mxu0
        %298 = vmatprep.mubr.f32.mxu0 0.0
        %299 = vmatmul.mubr.f32.gmra.mxu0 %v201
        %v300 = vpop.f32.mrf.mxu0
        %v301 = vadd.f32 0.0, %v300
        %v302 = vpop.f32.mrf.mxu0
        %303 = vmatprep.mubr.f32.mxu0 0.0
        %304 = vmatmul.mubr.f32.gmra.mxu0 %v204
        %v305 = vpop.f32.mrf.mxu0
        %v306 = vadd.f32 0.0, %v305
        %v307 = vpop.f32.mrf.mxu0
        %308 = vmatprep.mubr.f32.mxu0 0.0
        %309 = vmatmul.mubr.f32.gmra.mxu0 %v207
        %v310 = vpop.f32.mrf.mxu0
        %v311 = vadd.f32 0.0, %v310
        %v312 = vpop.f32.mrf.mxu0
        %313 = vmatprep.mubr.f32.mxu0 0.0
        %314 = vmatmul.mubr.f32.gmra.mxu0 %v210
        %v315 = vpop.f32.mrf.mxu0
        %v316 = vadd.f32 0.0, %v315
        %v317 = vpop.f32.mrf.mxu0
        %318 = vmatprep.mubr.f32.mxu0 0.0
        %319 = vmatmul.mubr.f32.gmra.mxu0 %v213
        %v320 = vpop.f32.mrf.mxu0
        %v321 = vadd.f32 0.0, %v320
        %v322 = vpop.f32.mrf.mxu0
        %323 = vdwg.mxu0
        %v325 = vsel %vm190, %v170, 0
        %v328 = vsel %vm190, %v171, 0
        %v331 = vsel %vm190, %v172, 0
        %v334 = vsel %vm190, %v173, 0
        %v337 = vsel %vm190, %v174, 0
        %v340 = vsel %vm190, %v175, 0
        %v343 = vsel %vm190, %v176, 0
        %v346 = vsel %vm190, %v177, 0
        %v349 = vsel %vm215, %v178, 0
        %351 = vmatprep.subr.mxu0 0.0
        %352 = vmatpush1.msra.mxu0 0.0
        %353 = vmatprep.subr.mxu0 0.0
        %354 = vmatpush1.msra.mxu0 0.0
        %355 = vmatprep.subr.mxu0 0.0
        %356 = vmatpush1.msra.mxu0 0.0
        %357 = vmatprep.subr.mxu0 0.0
        %358 = vmatpush1.msra.mxu0 0.0
        %359 = vmatprep.subr.mxu0 0.0
        %360 = vmatpush1.msra.mxu0 0.0
        %361 = vmatprep.subr.mxu0 0.0
        %362 = vmatpush1.msra.mxu0 0.0
        %363 = vmatprep.subr.mxu0 0.0
        %364 = vmatpush1.msra.mxu0 0.0
        %365 = vmatprep.subr.mxu0 0.0
        %366 = vmatpush1.msra.mxu0 0.0
        %367 = vmatprep.subr.mxu0 0.0
        %368 = vmatpush1.msra.mxu0 0.0
        %369 = vmatprep.subr.mxu0 0.0
        %370 = vmatpush1.msra.mxu0 0.0
        %371 = vmatprep.subr.mxu0 0.0
        %372 = vmatpush1.msra.mxu0 0.0
        %373 = vmatprep.subr.mxu0 0.0
        %374 = vmatpush1.msra.mxu0 0.0
        %375 = vmatprep.subr.mxu0 0.0
        %376 = vmatpush1.msra.mxu0 0.0
        %377 = vmatprep.subr.mxu0 0.0
        %378 = vmatpush1.msra.mxu0 0.0
        %379 = vmatprep.subr.mxu0 0.0
        %380 = vmatpush1.msra.mxu0 0.0
        %381 = vmatprep.subr.mxu0 0.0
        %382 = vmatpush1.msra.mxu0 %v349
        %383 = vmatprep.subr.mxu0 0.0
        %384 = vmatpush2.msra.mxu0 0.0
        %385 = vmatprep.subr.mxu0 0.0
        %386 = vmatpush2.msra.mxu0 0.0
        %387 = vmatprep.subr.mxu0 0.0
        %388 = vmatpush2.msra.mxu0 0.0
        %389 = vmatprep.subr.mxu0 0.0
        %390 = vmatpush2.msra.mxu0 0.0
        %391 = vmatprep.subr.mxu0 0.0
        %392 = vmatpush2.msra.mxu0 0.0
        %393 = vmatprep.subr.mxu0 0.0
        %394 = vmatpush2.msra.mxu0 0.0
        %395 = vmatprep.subr.mxu0 0.0
        %396 = vmatpush2.msra.mxu0 0.0
        %397 = vmatprep.subr.mxu0 0.0
        %398 = vmatpush2.msra.mxu0 0.0
        %399 = vmatprep.subr.mxu0 0.0
        %400 = vmatpush2.msra.mxu0 0.0
        %401 = vmatprep.subr.mxu0 0.0
        %402 = vmatpush2.msra.mxu0 0.0
        %403 = vmatprep.subr.mxu0 0.0
        %404 = vmatpush2.msra.mxu0 0.0
        %405 = vmatprep.subr.mxu0 0.0
        %406 = vmatpush2.msra.mxu0 0.0
        %407 = vmatprep.subr.mxu0 0.0
        %408 = vmatpush2.msra.mxu0 0.0
        %409 = vmatprep.subr.mxu0 0.0
        %410 = vmatpush2.msra.mxu0 0.0
        %411 = vmatprep.subr.mxu0 0.0
        %412 = vmatpush2.msra.mxu0 0.0
        %413 = vmatprep.subr.mxu0 0.0
        %414 = vmatpush2.msra.mxu0 0.0
        %415 = vmatprep.mubr.f32.mxu0 0.0
        %416 = vmatmul.mubr.f32.gmra.mxu0 %v325
        %v417 = vpop.f32.mrf.mxu0
        %v418 = vadd.f32 %v286, %v417
        %v419 = vpop.f32.mrf.mxu0
        %420 = vmatprep.mubr.f32.mxu0 0.0
        %421 = vmatmul.mubr.f32.gmra.mxu0 %v328
        %v422 = vpop.f32.mrf.mxu0
        %v423 = vadd.f32 %v291, %v422
        %v424 = vpop.f32.mrf.mxu0
        %425 = vmatprep.mubr.f32.mxu0 0.0
        %426 = vmatmul.mubr.f32.gmra.mxu0 %v331
        %v427 = vpop.f32.mrf.mxu0
        %v428 = vadd.f32 %v296, %v427
        %v429 = vpop.f32.mrf.mxu0
        %430 = vmatprep.mubr.f32.mxu0 0.0
        %431 = vmatmul.mubr.f32.gmra.mxu0 %v334
        %v432 = vpop.f32.mrf.mxu0
        %v433 = vadd.f32 %v301, %v432
        %v434 = vpop.f32.mrf.mxu0
        %435 = vmatprep.mubr.f32.mxu0 0.0
        %436 = vmatmul.mubr.f32.gmra.mxu0 %v337
        %v437 = vpop.f32.mrf.mxu0
        %v438 = vadd.f32 %v306, %v437
        %v439 = vpop.f32.mrf.mxu0
        %440 = vmatprep.mubr.f32.mxu0 0.0
        %441 = vmatmul.mubr.f32.gmra.mxu0 %v340
        %v442 = vpop.f32.mrf.mxu0
        %v443 = vadd.f32 %v311, %v442
        %v444 = vpop.f32.mrf.mxu0
        %445 = vmatprep.mubr.f32.mxu0 0.0
        %446 = vmatmul.mubr.f32.gmra.mxu0 %v343
        %v447 = vpop.f32.mrf.mxu0
        %v448 = vadd.f32 %v316, %v447
        %v449 = vpop.f32.mrf.mxu0
        %450 = vmatprep.mubr.f32.mxu0 0.0
        %451 = vmatmul.mubr.f32.gmra.mxu0 %v346
        %v452 = vpop.f32.mrf.mxu0
        %v453 = vadd.f32 %v321, %v452
        %v454 = vpop.f32.mrf.mxu0
        %455 = vdwg.mxu0
        %v456 = vld [vmem:[%s168 + $0x1] sm:$0xff]
        %v457 = vld [vmem:[%s168 + $0x11] sm:$0xff]
        %v458 = vld [vmem:[%s168 + $0x21] sm:$0xff]
        %v459 = vld [vmem:[%s168 + $0x31] sm:$0xff]
        %v460 = vld [vmem:[%s168 + $0x41] sm:$0xff]
        %v461 = vld [vmem:[%s168 + $0x51] sm:$0xff]
        %v462 = vld [vmem:[%s168 + $0x61] sm:$0xff]
        %v463 = vld [vmem:[%s168 + $0x71] sm:$0xff]
        %s464 = scalar_lea.vmem %s1, 8
        %v465 = vld [vmem:[%s464] sm:$0xf]
        %v467 = vsel %vm190, %v456, 0
        %v470 = vsel %vm190, %v457, 0
        %v473 = vsel %vm190, %v458, 0
        %v476 = vsel %vm190, %v459, 0
        %v479 = vsel %vm190, %v460, 0
        %v482 = vsel %vm190, %v461, 0
        %v485 = vsel %vm190, %v462, 0
        %v488 = vsel %vm190, %v463, 0
        %v491 = vsel %vm215, %v465, 0
        %493 = vmatprep.subr.mxu0 0.0
        %494 = vmatpush1.msra.mxu0 0.0
        %495 = vmatprep.subr.mxu0 0.0
        %496 = vmatpush1.msra.mxu0 0.0
        %497 = vmatprep.subr.mxu0 0.0
        %498 = vmatpush1.msra.mxu0 0.0
        %499 = vmatprep.subr.mxu0 0.0
        %500 = vmatpush1.msra.mxu0 0.0
        %501 = vmatprep.subr.mxu0 0.0
        %502 = vmatpush1.msra.mxu0 0.0
        %503 = vmatprep.subr.mxu0 0.0
        %504 = vmatpush1.msra.mxu0 0.0
        %505 = vmatprep.subr.mxu0 0.0
        %506 = vmatpush1.msra.mxu0 0.0
        %507 = vmatprep.subr.mxu0 0.0
        %508 = vmatpush1.msra.mxu0 0.0
        %509 = vmatprep.subr.mxu0 0.0
        %510 = vmatpush1.msra.mxu0 0.0
        %511 = vmatprep.subr.mxu0 0.0
        %512 = vmatpush1.msra.mxu0 0.0
        %513 = vmatprep.subr.mxu0 0.0
        %514 = vmatpush1.msra.mxu0 0.0
        %515 = vmatprep.subr.mxu0 0.0
        %516 = vmatpush1.msra.mxu0 0.0
        %517 = vmatprep.subr.mxu0 0.0
        %518 = vmatpush1.msra.mxu0 0.0
        %519 = vmatprep.subr.mxu0 0.0
        %520 = vmatpush1.msra.mxu0 0.0
        %521 = vmatprep.subr.mxu0 0.0
        %522 = vmatpush1.msra.mxu0 0.0
        %523 = vmatprep.subr.mxu0 0.0
        %524 = vmatpush1.msra.mxu0 %v491
        %525 = vmatprep.subr.mxu0 0.0
        %526 = vmatpush2.msra.mxu0 0.0
        %527 = vmatprep.subr.mxu0 0.0
        %528 = vmatpush2.msra.mxu0 0.0
        %529 = vmatprep.subr.mxu0 0.0
        %530 = vmatpush2.msra.mxu0 0.0
        %531 = vmatprep.subr.mxu0 0.0
        %532 = vmatpush2.msra.mxu0 0.0
        %533 = vmatprep.subr.mxu0 0.0
        %534 = vmatpush2.msra.mxu0 0.0
        %535 = vmatprep.subr.mxu0 0.0
        %536 = vmatpush2.msra.mxu0 0.0
        %537 = vmatprep.subr.mxu0 0.0
        %538 = vmatpush2.msra.mxu0 0.0
        %539 = vmatprep.subr.mxu0 0.0
        %540 = vmatpush2.msra.mxu0 0.0
        %541 = vmatprep.subr.mxu0 0.0
        %542 = vmatpush2.msra.mxu0 0.0
        %543 = vmatprep.subr.mxu0 0.0
        %544 = vmatpush2.msra.mxu0 0.0
        %545 = vmatprep.subr.mxu0 0.0
        %546 = vmatpush2.msra.mxu0 0.0
        %547 = vmatprep.subr.mxu0 0.0
        %548 = vmatpush2.msra.mxu0 0.0
        %549 = vmatprep.subr.mxu0 0.0
        %550 = vmatpush2.msra.mxu0 0.0
        %551 = vmatprep.subr.mxu0 0.0
        %552 = vmatpush2.msra.mxu0 0.0
        %553 = vmatprep.subr.mxu0 0.0
        %554 = vmatpush2.msra.mxu0 0.0
        %555 = vmatprep.subr.mxu0 0.0
        %556 = vmatpush2.msra.mxu0 0.0
        %557 = vmatprep.mubr.f32.mxu0 0.0
        %558 = vmatmul.mubr.f32.gmra.mxu0 %v467
        %v559 = vpop.f32.mrf.mxu0
        %v560 = vadd.f32 0.0, %v559
        %v561 = vpop.f32.mrf.mxu0
        %562 = vmatprep.mubr.f32.mxu0 0.0
        %563 = vmatmul.mubr.f32.gmra.mxu0 %v470
        %v564 = vpop.f32.mrf.mxu0
        %v565 = vadd.f32 0.0, %v564
        %v566 = vpop.f32.mrf.mxu0
        %567 = vmatprep.mubr.f32.mxu0 0.0
        %568 = vmatmul.mubr.f32.gmra.mxu0 %v473
        %v569 = vpop.f32.mrf.mxu0
        %v570 = vadd.f32 0.0, %v569
        %v571 = vpop.f32.mrf.mxu0
        %572 = vmatprep.mubr.f32.mxu0 0.0
        %573 = vmatmul.mubr.f32.gmra.mxu0 %v476
        %v574 = vpop.f32.mrf.mxu0
        %v575 = vadd.f32 0.0, %v574
        %v576 = vpop.f32.mrf.mxu0
        %577 = vmatprep.mubr.f32.mxu0 0.0
        %578 = vmatmul.mubr.f32.gmra.mxu0 %v479
        %v579 = vpop.f32.mrf.mxu0
        %v580 = vadd.f32 0.0, %v579
        %v581 = vpop.f32.mrf.mxu0
        %582 = vmatprep.mubr.f32.mxu0 0.0
        %583 = vmatmul.mubr.f32.gmra.mxu0 %v482
        %v584 = vpop.f32.mrf.mxu0
        %v585 = vadd.f32 0.0, %v584
        %v586 = vpop.f32.mrf.mxu0
        %587 = vmatprep.mubr.f32.mxu0 0.0
        %588 = vmatmul.mubr.f32.gmra.mxu0 %v485
        %v589 = vpop.f32.mrf.mxu0
        %v590 = vadd.f32 0.0, %v589
        %v591 = vpop.f32.mrf.mxu0
        %592 = vmatprep.mubr.f32.mxu0 0.0
        %593 = vmatmul.mubr.f32.gmra.mxu0 %v488
        %v594 = vpop.f32.mrf.mxu0
        %v595 = vadd.f32 0.0, %v594
        %v596 = vpop.f32.mrf.mxu0
        %597 = vdwg.mxu0
        %v598 = vadd.f32 %v418, %v560
        %v599 = vadd.f32 %v423, %v565
        %v600 = vadd.f32 %v428, %v570
        %v601 = vadd.f32 %v433, %v575
        %v602 = vadd.f32 %v438, %v580
        %v603 = vadd.f32 %v443, %v585
        %v604 = vadd.f32 %v448, %v590
        %v605 = vadd.f32 %v453, %v595
        %s606 = scalar_lea.vmem %s168, 288
        %v607 = vld [vmem:[%s606] sm:$0xff]
        %v608 = vld [vmem:[%s606 + $0x10] sm:$0xff]
        %v609 = vld [vmem:[%s606 + $0x20] sm:$0xff]
        %v610 = vld [vmem:[%s606 + $0x30] sm:$0xff]
        %v611 = vld [vmem:[%s606 + $0x40] sm:$0xff]
        %v612 = vld [vmem:[%s606 + $0x50] sm:$0xff]
        %v613 = vld [vmem:[%s606 + $0x60] sm:$0xff]
        %v614 = vld [vmem:[%s606 + $0x70] sm:$0xff]
        %s615 = scalar_lea.vmem %s1, 12
        %v616 = vld [vmem:[%s615] sm:$0xf]
        %v618 = vsel %vm190, %v607, 0
        %v621 = vsel %vm190, %v608, 0
        %v624 = vsel %vm190, %v609, 0
        %v627 = vsel %vm190, %v610, 0
        %v630 = vsel %vm190, %v611, 0
        %v633 = vsel %vm190, %v612, 0
        %v636 = vsel %vm190, %v613, 0
        %v639 = vsel %vm190, %v614, 0
        %v642 = vsel %vm215, %v616, 0
        %644 = vmatprep.subr.mxu0 0.0
        %645 = vmatpush1.msra.mxu0 0.0
        %646 = vmatprep.subr.mxu0 0.0
        %647 = vmatpush1.msra.mxu0 0.0
        %648 = vmatprep.subr.mxu0 0.0
        %649 = vmatpush1.msra.mxu0 0.0
        %650 = vmatprep.subr.mxu0 0.0
        %651 = vmatpush1.msra.mxu0 0.0
        %652 = vmatprep.subr.mxu0 0.0
        %653 = vmatpush1.msra.mxu0 0.0
        %654 = vmatprep.subr.mxu0 0.0
        %655 = vmatpush1.msra.mxu0 0.0
        %656 = vmatprep.subr.mxu0 0.0
        %657 = vmatpush1.msra.mxu0 0.0
        %658 = vmatprep.subr.mxu0 0.0
        %659 = vmatpush1.msra.mxu0 0.0
        %660 = vmatprep.subr.mxu0 0.0
        %661 = vmatpush1.msra.mxu0 0.0
        %662 = vmatprep.subr.mxu0 0.0
        %663 = vmatpush1.msra.mxu0 0.0
        %664 = vmatprep.subr.mxu0 0.0
        %665 = vmatpush1.msra.mxu0 0.0
        %666 = vmatprep.subr.mxu0 0.0
        %667 = vmatpush1.msra.mxu0 0.0
        %668 = vmatprep.subr.mxu0 0.0
        %669 = vmatpush1.msra.mxu0 0.0
        %670 = vmatprep.subr.mxu0 0.0
        %671 = vmatpush1.msra.mxu0 0.0
        %672 = vmatprep.subr.mxu0 0.0
        %673 = vmatpush1.msra.mxu0 0.0
        %674 = vmatprep.subr.mxu0 0.0
        %675 = vmatpush1.msra.mxu0 %v642
        %676 = vmatprep.subr.mxu0 0.0
        %677 = vmatpush2.msra.mxu0 0.0
        %678 = vmatprep.subr.mxu0 0.0
        %679 = vmatpush2.msra.mxu0 0.0
        %680 = vmatprep.subr.mxu0 0.0
        %681 = vmatpush2.msra.mxu0 0.0
        %682 = vmatprep.subr.mxu0 0.0
        %683 = vmatpush2.msra.mxu0 0.0
        %684 = vmatprep.subr.mxu0 0.0
        %685 = vmatpush2.msra.mxu0 0.0
        %686 = vmatprep.subr.mxu0 0.0
        %687 = vmatpush2.msra.mxu0 0.0
        %688 = vmatprep.subr.mxu0 0.0
        %689 = vmatpush2.msra.mxu0 0.0
        %690 = vmatprep.subr.mxu0 0.0
        %691 = vmatpush2.msra.mxu0 0.0
        %692 = vmatprep.subr.mxu0 0.0
        %693 = vmatpush2.msra.mxu0 0.0
        %694 = vmatprep.subr.mxu0 0.0
        %695 = vmatpush2.msra.mxu0 0.0
        %696 = vmatprep.subr.mxu0 0.0
        %697 = vmatpush2.msra.mxu0 0.0
        %698 = vmatprep.subr.mxu0 0.0
        %699 = vmatpush2.msra.mxu0 0.0
        %700 = vmatprep.subr.mxu0 0.0
        %701 = vmatpush2.msra.mxu0 0.0
        %702 = vmatprep.subr.mxu0 0.0
        %703 = vmatpush2.msra.mxu0 0.0
        %704 = vmatprep.subr.mxu0 0.0
        %705 = vmatpush2.msra.mxu0 0.0
        %706 = vmatprep.subr.mxu0 0.0
        %707 = vmatpush2.msra.mxu0 0.0
        %708 = vmatprep.mubr.f32.mxu0 0.0
        %709 = vmatmul.mubr.f32.gmra.mxu0 %v618
        %v710 = vpop.f32.mrf.mxu0
        %v711 = vadd.f32 0.0, %v710
        %v712 = vpop.f32.mrf.mxu0
        %713 = vmatprep.mubr.f32.mxu0 0.0
        %714 = vmatmul.mubr.f32.gmra.mxu0 %v621
        %v715 = vpop.f32.mrf.mxu0
        %v716 = vadd.f32 0.0, %v715
        %v717 = vpop.f32.mrf.mxu0
        %718 = vmatprep.mubr.f32.mxu0 0.0
        %719 = vmatmul.mubr.f32.gmra.mxu0 %v624
        %v720 = vpop.f32.mrf.mxu0
        %v721 = vadd.f32 0.0, %v720
        %v722 = vpop.f32.mrf.mxu0
        %723 = vmatprep.mubr.f32.mxu0 0.0
        %724 = vmatmul.mubr.f32.gmra.mxu0 %v627
        %v725 = vpop.f32.mrf.mxu0
        %v726 = vadd.f32 0.0, %v725
        %v727 = vpop.f32.mrf.mxu0
        %728 = vmatprep.mubr.f32.mxu0 0.0
        %729 = vmatmul.mubr.f32.gmra.mxu0 %v630
        %v730 = vpop.f32.mrf.mxu0
        %v731 = vadd.f32 0.0, %v730
        %v732 = vpop.f32.mrf.mxu0
        %733 = vmatprep.mubr.f32.mxu0 0.0
        %734 = vmatmul.mubr.f32.gmra.mxu0 %v633
        %v735 = vpop.f32.mrf.mxu0
        %v736 = vadd.f32 0.0, %v735
        %v737 = vpop.f32.mrf.mxu0
        %738 = vmatprep.mubr.f32.mxu0 0.0
        %739 = vmatmul.mubr.f32.gmra.mxu0 %v636
        %v740 = vpop.f32.mrf.mxu0
        %v741 = vadd.f32 0.0, %v740
        %v742 = vpop.f32.mrf.mxu0
        %743 = vmatprep.mubr.f32.mxu0 0.0
        %744 = vmatmul.mubr.f32.gmra.mxu0 %v639
        %v745 = vpop.f32.mrf.mxu0
        %v746 = vadd.f32 0.0, %v745
        %v747 = vpop.f32.mrf.mxu0
        %748 = vdwg.mxu0
        %v749 = vadd.f32 %v598, %v711
        %v750 = vadd.f32 %v599, %v716
        %v751 = vadd.f32 %v600, %v721
        %v752 = vadd.f32 %v601, %v726
        %v753 = vadd.f32 %v602, %v731
        %v754 = vadd.f32 %v603, %v736
        %v755 = vadd.f32 %v604, %v741
        %v756 = vadd.f32 %v605, %v746
        %s757 = scalar_lea.vmem %s168, 432
        %v758 = vld [vmem:[%s757] sm:$0xff]
        %v759 = vld [vmem:[%s757 + $0x10] sm:$0xff]
        %v760 = vld [vmem:[%s757 + $0x20] sm:$0xff]
        %v761 = vld [vmem:[%s757 + $0x30] sm:$0xff]
        %v762 = vld [vmem:[%s757 + $0x40] sm:$0xff]
        %v763 = vld [vmem:[%s757 + $0x50] sm:$0xff]
        %v764 = vld [vmem:[%s757 + $0x60] sm:$0xff]
        %v765 = vld [vmem:[%s757 + $0x70] sm:$0xff]
        %s766 = scalar_lea.vmem %s1, 16
        %v767 = vld [vmem:[%s766] sm:$0xf]
        %v769 = vsel %vm190, %v758, 0
        %v772 = vsel %vm190, %v759, 0
        %v775 = vsel %vm190, %v760, 0
        %v778 = vsel %vm190, %v761, 0
        %v781 = vsel %vm190, %v762, 0
        %v784 = vsel %vm190, %v763, 0
        %v787 = vsel %vm190, %v764, 0
        %v790 = vsel %vm190, %v765, 0
        %v793 = vsel %vm215, %v767, 0
        %795 = vmatprep.subr.mxu0 0.0
        %796 = vmatpush1.msra.mxu0 0.0
        %797 = vmatprep.subr.mxu0 0.0
        %798 = vmatpush1.msra.mxu0 0.0
        %799 = vmatprep.subr.mxu0 0.0
        %800 = vmatpush1.msra.mxu0 0.0
        %801 = vmatprep.subr.mxu0 0.0
        %802 = vmatpush1.msra.mxu0 0.0
        %803 = vmatprep.subr.mxu0 0.0
        %804 = vmatpush1.msra.mxu0 0.0
        %805 = vmatprep.subr.mxu0 0.0
        %806 = vmatpush1.msra.mxu0 0.0
        %807 = vmatprep.subr.mxu0 0.0
        %808 = vmatpush1.msra.mxu0 0.0
        %809 = vmatprep.subr.mxu0 0.0
        %810 = vmatpush1.msra.mxu0 0.0
        %811 = vmatprep.subr.mxu0 0.0
        %812 = vmatpush1.msra.mxu0 0.0
        %813 = vmatprep.subr.mxu0 0.0
        %814 = vmatpush1.msra.mxu0 0.0
        %815 = vmatprep.subr.mxu0 0.0
        %816 = vmatpush1.msra.mxu0 0.0
        %817 = vmatprep.subr.mxu0 0.0
        %818 = vmatpush1.msra.mxu0 0.0
        %819 = vmatprep.subr.mxu0 0.0
        %820 = vmatpush1.msra.mxu0 0.0
        %821 = vmatprep.subr.mxu0 0.0
        %822 = vmatpush1.msra.mxu0 0.0
        %823 = vmatprep.subr.mxu0 0.0
        %824 = vmatpush1.msra.mxu0 0.0
        %825 = vmatprep.subr.mxu0 0.0
        %826 = vmatpush1.msra.mxu0 %v793
        %827 = vmatprep.subr.mxu0 0.0
        %828 = vmatpush2.msra.mxu0 0.0
        %829 = vmatprep.subr.mxu0 0.0
        %830 = vmatpush2.msra.mxu0 0.0
        %831 = vmatprep.subr.mxu0 0.0
        %832 = vmatpush2.msra.mxu0 0.0
        %833 = vmatprep.subr.mxu0 0.0
        %834 = vmatpush2.msra.mxu0 0.0
        %835 = vmatprep.subr.mxu0 0.0
        %836 = vmatpush2.msra.mxu0 0.0
        %837 = vmatprep.subr.mxu0 0.0
        %838 = vmatpush2.msra.mxu0 0.0
        %839 = vmatprep.subr.mxu0 0.0
        %840 = vmatpush2.msra.mxu0 0.0
        %841 = vmatprep.subr.mxu0 0.0
        %842 = vmatpush2.msra.mxu0 0.0
        %843 = vmatprep.subr.mxu0 0.0
        %844 = vmatpush2.msra.mxu0 0.0
        %845 = vmatprep.subr.mxu0 0.0
        %846 = vmatpush2.msra.mxu0 0.0
        %847 = vmatprep.subr.mxu0 0.0
        %848 = vmatpush2.msra.mxu0 0.0
        %849 = vmatprep.subr.mxu0 0.0
        %850 = vmatpush2.msra.mxu0 0.0
        %851 = vmatprep.subr.mxu0 0.0
        %852 = vmatpush2.msra.mxu0 0.0
        %853 = vmatprep.subr.mxu0 0.0
        %854 = vmatpush2.msra.mxu0 0.0
        %855 = vmatprep.subr.mxu0 0.0
        %856 = vmatpush2.msra.mxu0 0.0
        %857 = vmatprep.subr.mxu0 0.0
        %858 = vmatpush2.msra.mxu0 0.0
        %859 = vmatprep.mubr.f32.mxu0 0.0
        %860 = vmatmul.mubr.f32.gmra.mxu0 %v769
        %v861 = vpop.f32.mrf.mxu0
        %v862 = vadd.f32 0.0, %v861
        %v863 = vpop.f32.mrf.mxu0
        %864 = vmatprep.mubr.f32.mxu0 0.0
        %865 = vmatmul.mubr.f32.gmra.mxu0 %v772
        %v866 = vpop.f32.mrf.mxu0
        %v867 = vadd.f32 0.0, %v866
        %v868 = vpop.f32.mrf.mxu0
        %869 = vmatprep.mubr.f32.mxu0 0.0
        %870 = vmatmul.mubr.f32.gmra.mxu0 %v775
        %v871 = vpop.f32.mrf.mxu0
        %v872 = vadd.f32 0.0, %v871
        %v873 = vpop.f32.mrf.mxu0
        %874 = vmatprep.mubr.f32.mxu0 0.0
        %875 = vmatmul.mubr.f32.gmra.mxu0 %v778
        %v876 = vpop.f32.mrf.mxu0
        %v877 = vadd.f32 0.0, %v876
        %v878 = vpop.f32.mrf.mxu0
        %879 = vmatprep.mubr.f32.mxu0 0.0
        %880 = vmatmul.mubr.f32.gmra.mxu0 %v781
        %v881 = vpop.f32.mrf.mxu0
        %v882 = vadd.f32 0.0, %v881
        %v883 = vpop.f32.mrf.mxu0
        %884 = vmatprep.mubr.f32.mxu0 0.0
        %885 = vmatmul.mubr.f32.gmra.mxu0 %v784
        %v886 = vpop.f32.mrf.mxu0
        %v887 = vadd.f32 0.0, %v886
        %v888 = vpop.f32.mrf.mxu0
        %889 = vmatprep.mubr.f32.mxu0 0.0
        %890 = vmatmul.mubr.f32.gmra.mxu0 %v787
        %v891 = vpop.f32.mrf.mxu0
        %v892 = vadd.f32 0.0, %v891
        %v893 = vpop.f32.mrf.mxu0
        %894 = vmatprep.mubr.f32.mxu0 0.0
        %895 = vmatmul.mubr.f32.gmra.mxu0 %v790
        %v896 = vpop.f32.mrf.mxu0
        %v897 = vadd.f32 0.0, %v896
        %v898 = vpop.f32.mrf.mxu0
        %899 = vdwg.mxu0
        %v900 = vadd.f32 %v749, %v862
        %v901 = vadd.f32 %v750, %v867
        %v902 = vadd.f32 %v751, %v872
        %v903 = vadd.f32 %v752, %v877
        %v904 = vadd.f32 %v753, %v882
        %v905 = vadd.f32 %v754, %v887
        %v906 = vadd.f32 %v755, %v892
        %v907 = vadd.f32 %v756, %v897
        %v908 = vld [vmem:[%s606 + $0x1] sm:$0xff]
        %v909 = vld [vmem:[%s606 + $0x11] sm:$0xff]
        %v910 = vld [vmem:[%s606 + $0x21] sm:$0xff]
        %v911 = vld [vmem:[%s606 + $0x31] sm:$0xff]
        %v912 = vld [vmem:[%s606 + $0x41] sm:$0xff]
        %v913 = vld [vmem:[%s606 + $0x51] sm:$0xff]
        %v914 = vld [vmem:[%s606 + $0x61] sm:$0xff]
        %v915 = vld [vmem:[%s606 + $0x71] sm:$0xff]
        %s916 = scalar_lea.vmem %s1, 20
        %v917 = vld [vmem:[%s916] sm:$0xf]
        %v919 = vsel %vm190, %v908, 0
        %v922 = vsel %vm190, %v909, 0
        %v925 = vsel %vm190, %v910, 0
        %v928 = vsel %vm190, %v911, 0
        %v931 = vsel %vm190, %v912, 0
        %v934 = vsel %vm190, %v913, 0
        %v937 = vsel %vm190, %v914, 0
        %v940 = vsel %vm190, %v915, 0
        %v943 = vsel %vm215, %v917, 0
        %945 = vmatprep.subr.mxu0 0.0
        %946 = vmatpush1.msra.mxu0 0.0
        %947 = vmatprep.subr.mxu0 0.0
        %948 = vmatpush1.msra.mxu0 0.0
        %949 = vmatprep.subr.mxu0 0.0
        %950 = vmatpush1.msra.mxu0 0.0
        %951 = vmatprep.subr.mxu0 0.0
        %952 = vmatpush1.msra.mxu0 0.0
        %953 = vmatprep.subr.mxu0 0.0
        %954 = vmatpush1.msra.mxu0 0.0
        %955 = vmatprep.subr.mxu0 0.0
        %956 = vmatpush1.msra.mxu0 0.0
        %957 = vmatprep.subr.mxu0 0.0
        %958 = vmatpush1.msra.mxu0 0.0
        %959 = vmatprep.subr.mxu0 0.0
        %960 = vmatpush1.msra.mxu0 0.0
        %961 = vmatprep.subr.mxu0 0.0
        %962 = vmatpush1.msra.mxu0 0.0
        %963 = vmatprep.subr.mxu0 0.0
        %964 = vmatpush1.msra.mxu0 0.0
        %965 = vmatprep.subr.mxu0 0.0
        %966 = vmatpush1.msra.mxu0 0.0
        %967 = vmatprep.subr.mxu0 0.0
        %968 = vmatpush1.msra.mxu0 0.0
        %969 = vmatprep.subr.mxu0 0.0
        %970 = vmatpush1.msra.mxu0 0.0
        %971 = vmatprep.subr.mxu0 0.0
        %972 = vmatpush1.msra.mxu0 0.0
        %973 = vmatprep.subr.mxu0 0.0
        %974 = vmatpush1.msra.mxu0 0.0
        %975 = vmatprep.subr.mxu0 0.0
        %976 = vmatpush1.msra.mxu0 %v943
        %977 = vmatprep.subr.mxu0 0.0
        %978 = vmatpush2.msra.mxu0 0.0
        %979 = vmatprep.subr.mxu0 0.0
        %980 = vmatpush2.msra.mxu0 0.0
        %981 = vmatprep.subr.mxu0 0.0
        %982 = vmatpush2.msra.mxu0 0.0
        %983 = vmatprep.subr.mxu0 0.0
        %984 = vmatpush2.msra.mxu0 0.0
        %985 = vmatprep.subr.mxu0 0.0
        %986 = vmatpush2.msra.mxu0 0.0
        %987 = vmatprep.subr.mxu0 0.0
        %988 = vmatpush2.msra.mxu0 0.0
        %989 = vmatprep.subr.mxu0 0.0
        %990 = vmatpush2.msra.mxu0 0.0
        %991 = vmatprep.subr.mxu0 0.0
        %992 = vmatpush2.msra.mxu0 0.0
        %993 = vmatprep.subr.mxu0 0.0
        %994 = vmatpush2.msra.mxu0 0.0
        %995 = vmatprep.subr.mxu0 0.0
        %996 = vmatpush2.msra.mxu0 0.0
        %997 = vmatprep.subr.mxu0 0.0
        %998 = vmatpush2.msra.mxu0 0.0
        %999 = vmatprep.subr.mxu0 0.0
        %1000 = vmatpush2.msra.mxu0 0.0
        %1001 = vmatprep.subr.mxu0 0.0
        %1002 = vmatpush2.msra.mxu0 0.0
        %1003 = vmatprep.subr.mxu0 0.0
        %1004 = vmatpush2.msra.mxu0 0.0
        %1005 = vmatprep.subr.mxu0 0.0
        %1006 = vmatpush2.msra.mxu0 0.0
        %1007 = vmatprep.subr.mxu0 0.0
        %1008 = vmatpush2.msra.mxu0 0.0
        %1009 = vmatprep.mubr.f32.mxu0 0.0
        %1010 = vmatmul.mubr.f32.gmra.mxu0 %v919
        %v1011 = vpop.f32.mrf.mxu0
        %v1012 = vadd.f32 0.0, %v1011
        %v1013 = vpop.f32.mrf.mxu0
        %1014 = vmatprep.mubr.f32.mxu0 0.0
        %1015 = vmatmul.mubr.f32.gmra.mxu0 %v922
        %v1016 = vpop.f32.mrf.mxu0
        %v1017 = vadd.f32 0.0, %v1016
        %v1018 = vpop.f32.mrf.mxu0
        %1019 = vmatprep.mubr.f32.mxu0 0.0
        %1020 = vmatmul.mubr.f32.gmra.mxu0 %v925
        %v1021 = vpop.f32.mrf.mxu0
        %v1022 = vadd.f32 0.0, %v1021
        %v1023 = vpop.f32.mrf.mxu0
        %1024 = vmatprep.mubr.f32.mxu0 0.0
        %1025 = vmatmul.mubr.f32.gmra.mxu0 %v928
        %v1026 = vpop.f32.mrf.mxu0
        %v1027 = vadd.f32 0.0, %v1026
        %v1028 = vpop.f32.mrf.mxu0
        %1029 = vmatprep.mubr.f32.mxu0 0.0
        %1030 = vmatmul.mubr.f32.gmra.mxu0 %v931
        %v1031 = vpop.f32.mrf.mxu0
        %v1032 = vadd.f32 0.0, %v1031
        %v1033 = vpop.f32.mrf.mxu0
        %1034 = vmatprep.mubr.f32.mxu0 0.0
        %1035 = vmatmul.mubr.f32.gmra.mxu0 %v934
        %v1036 = vpop.f32.mrf.mxu0
        %v1037 = vadd.f32 0.0, %v1036
        %v1038 = vpop.f32.mrf.mxu0
        %1039 = vmatprep.mubr.f32.mxu0 0.0
        %1040 = vmatmul.mubr.f32.gmra.mxu0 %v937
        %v1041 = vpop.f32.mrf.mxu0
        %v1042 = vadd.f32 0.0, %v1041
        %v1043 = vpop.f32.mrf.mxu0
        %1044 = vmatprep.mubr.f32.mxu0 0.0
        %1045 = vmatmul.mubr.f32.gmra.mxu0 %v940
        %v1046 = vpop.f32.mrf.mxu0
        %v1047 = vadd.f32 0.0, %v1046
        %v1048 = vpop.f32.mrf.mxu0
        %1049 = vdwg.mxu0
        %v1050 = vadd.f32 %v900, %v1012
        %v1051 = vadd.f32 %v901, %v1017
        %v1052 = vadd.f32 %v902, %v1022
        %v1053 = vadd.f32 %v903, %v1027
        %v1054 = vadd.f32 %v904, %v1032
        %v1055 = vadd.f32 %v905, %v1037
        %v1056 = vadd.f32 %v906, %v1042
        %v1057 = vadd.f32 %v907, %v1047
        %s1058 = scalar_lea.vmem %s168, 16
        %v1059 = vld [vmem:[%s1058] sm:$0xff]
        %v1060 = vld [vmem:[%s1058 + $0x10] sm:$0xff]
        %v1061 = vld [vmem:[%s1058 + $0x20] sm:$0xff]
        %v1062 = vld [vmem:[%s1058 + $0x30] sm:$0xff]
        %v1063 = vld [vmem:[%s1058 + $0x40] sm:$0xff]
        %v1064 = vld [vmem:[%s1058 + $0x50] sm:$0xff]
        %v1065 = vld [vmem:[%s1058 + $0x60] sm:$0xff]
        %v1066 = vld [vmem:[%s1058 + $0x70] sm:$0xff]
        %s1067 = scalar_lea.vmem %s1, 24
        %v1068 = vld [vmem:[%s1067] sm:$0xf]
        %v1070 = vsel %vm190, %v1059, 0
        %v1073 = vsel %vm190, %v1060, 0
        %v1076 = vsel %vm190, %v1061, 0
        %v1079 = vsel %vm190, %v1062, 0
        %v1082 = vsel %vm190, %v1063, 0
        %v1085 = vsel %vm190, %v1064, 0
        %v1088 = vsel %vm190, %v1065, 0
        %v1091 = vsel %vm190, %v1066, 0
        %v1094 = vsel %vm215, %v1068, 0
        %1096 = vmatprep.subr.mxu0 0.0
        %1097 = vmatpush1.msra.mxu0 0.0
        %1098 = vmatprep.subr.mxu0 0.0
        %1099 = vmatpush1.msra.mxu0 0.0
        %1100 = vmatprep.subr.mxu0 0.0
        %1101 = vmatpush1.msra.mxu0 0.0
        %1102 = vmatprep.subr.mxu0 0.0
        %1103 = vmatpush1.msra.mxu0 0.0
        %1104 = vmatprep.subr.mxu0 0.0
        %1105 = vmatpush1.msra.mxu0 0.0
        %1106 = vmatprep.subr.mxu0 0.0
        %1107 = vmatpush1.msra.mxu0 0.0
        %1108 = vmatprep.subr.mxu0 0.0
        %1109 = vmatpush1.msra.mxu0 0.0
        %1110 = vmatprep.subr.mxu0 0.0
        %1111 = vmatpush1.msra.mxu0 0.0
        %1112 = vmatprep.subr.mxu0 0.0
        %1113 = vmatpush1.msra.mxu0 0.0
        %1114 = vmatprep.subr.mxu0 0.0
        %1115 = vmatpush1.msra.mxu0 0.0
        %1116 = vmatprep.subr.mxu0 0.0
        %1117 = vmatpush1.msra.mxu0 0.0
        %1118 = vmatprep.subr.mxu0 0.0
        %1119 = vmatpush1.msra.mxu0 0.0
        %1120 = vmatprep.subr.mxu0 0.0
        %1121 = vmatpush1.msra.mxu0 0.0
        %1122 = vmatprep.subr.mxu0 0.0
        %1123 = vmatpush1.msra.mxu0 0.0
        %1124 = vmatprep.subr.mxu0 0.0
        %1125 = vmatpush1.msra.mxu0 0.0
        %1126 = vmatprep.subr.mxu0 0.0
        %1127 = vmatpush1.msra.mxu0 %v1094
        %1128 = vmatprep.subr.mxu0 0.0
        %1129 = vmatpush2.msra.mxu0 0.0
        %1130 = vmatprep.subr.mxu0 0.0
        %1131 = vmatpush2.msra.mxu0 0.0
        %1132 = vmatprep.subr.mxu0 0.0
        %1133 = vmatpush2.msra.mxu0 0.0
        %1134 = vmatprep.subr.mxu0 0.0
        %1135 = vmatpush2.msra.mxu0 0.0
        %1136 = vmatprep.subr.mxu0 0.0
        %1137 = vmatpush2.msra.mxu0 0.0
        %1138 = vmatprep.subr.mxu0 0.0
        %1139 = vmatpush2.msra.mxu0 0.0
        %1140 = vmatprep.subr.mxu0 0.0
        %1141 = vmatpush2.msra.mxu0 0.0
        %1142 = vmatprep.subr.mxu0 0.0
        %1143 = vmatpush2.msra.mxu0 0.0
        %1144 = vmatprep.subr.mxu0 0.0
        %1145 = vmatpush2.msra.mxu0 0.0
        %1146 = vmatprep.subr.mxu0 0.0
        %1147 = vmatpush2.msra.mxu0 0.0
        %1148 = vmatprep.subr.mxu0 0.0
        %1149 = vmatpush2.msra.mxu0 0.0
        %1150 = vmatprep.subr.mxu0 0.0
        %1151 = vmatpush2.msra.mxu0 0.0
        %1152 = vmatprep.subr.mxu0 0.0
        %1153 = vmatpush2.msra.mxu0 0.0
        %1154 = vmatprep.subr.mxu0 0.0
        %1155 = vmatpush2.msra.mxu0 0.0
        %1156 = vmatprep.subr.mxu0 0.0
        %1157 = vmatpush2.msra.mxu0 0.0
        %1158 = vmatprep.subr.mxu0 0.0
        %1159 = vmatpush2.msra.mxu0 0.0
        %1160 = vmatprep.mubr.f32.mxu0 0.0
        %1161 = vmatmul.mubr.f32.gmra.mxu0 %v1070
        %v1162 = vpop.f32.mrf.mxu0
        %v1163 = vadd.f32 0.0, %v1162
        %v1164 = vpop.f32.mrf.mxu0
        %1165 = vmatprep.mubr.f32.mxu0 0.0
        %1166 = vmatmul.mubr.f32.gmra.mxu0 %v1073
        %v1167 = vpop.f32.mrf.mxu0
        %v1168 = vadd.f32 0.0, %v1167
        %v1169 = vpop.f32.mrf.mxu0
        %1170 = vmatprep.mubr.f32.mxu0 0.0
        %1171 = vmatmul.mubr.f32.gmra.mxu0 %v1076
        %v1172 = vpop.f32.mrf.mxu0
        %v1173 = vadd.f32 0.0, %v1172
        %v1174 = vpop.f32.mrf.mxu0
        %1175 = vmatprep.mubr.f32.mxu0 0.0
        %1176 = vmatmul.mubr.f32.gmra.mxu0 %v1079
        %v1177 = vpop.f32.mrf.mxu0
        %v1178 = vadd.f32 0.0, %v1177
        %v1179 = vpop.f32.mrf.mxu0
        %1180 = vmatprep.mubr.f32.mxu0 0.0
        %1181 = vmatmul.mubr.f32.gmra.mxu0 %v1082
        %v1182 = vpop.f32.mrf.mxu0
        %v1183 = vadd.f32 0.0, %v1182
        %v1184 = vpop.f32.mrf.mxu0
        %1185 = vmatprep.mubr.f32.mxu0 0.0
        %1186 = vmatmul.mubr.f32.gmra.mxu0 %v1085
        %v1187 = vpop.f32.mrf.mxu0
        %v1188 = vadd.f32 0.0, %v1187
        %v1189 = vpop.f32.mrf.mxu0
        %1190 = vmatprep.mubr.f32.mxu0 0.0
        %1191 = vmatmul.mubr.f32.gmra.mxu0 %v1088
        %v1192 = vpop.f32.mrf.mxu0
        %v1193 = vadd.f32 0.0, %v1192
        %v1194 = vpop.f32.mrf.mxu0
        %1195 = vmatprep.mubr.f32.mxu0 0.0
        %1196 = vmatmul.mubr.f32.gmra.mxu0 %v1091
        %v1197 = vpop.f32.mrf.mxu0
        %v1198 = vadd.f32 0.0, %v1197
        %v1199 = vpop.f32.mrf.mxu0
        %1200 = vdwg.mxu0
        %v1201 = vadd.f32 %v1050, %v1163
        %v1202 = vadd.f32 %v1051, %v1168
        %v1203 = vadd.f32 %v1052, %v1173
        %v1204 = vadd.f32 %v1053, %v1178
        %v1205 = vadd.f32 %v1054, %v1183
        %v1206 = vadd.f32 %v1055, %v1188
        %v1207 = vadd.f32 %v1056, %v1193
        %v1208 = vadd.f32 %v1057, %v1198
        %s1209 = scalar_lea.vmem %s168, 160
        %v1210 = vld [vmem:[%s1209] sm:$0xff]
        %v1211 = vld [vmem:[%s1209 + $0x10] sm:$0xff]
        %v1212 = vld [vmem:[%s1209 + $0x20] sm:$0xff]
        %v1213 = vld [vmem:[%s1209 + $0x30] sm:$0xff]
        %v1214 = vld [vmem:[%s1209 + $0x40] sm:$0xff]
        %v1215 = vld [vmem:[%s1209 + $0x50] sm:$0xff]
        %v1216 = vld [vmem:[%s1209 + $0x60] sm:$0xff]
        %v1217 = vld [vmem:[%s1209 + $0x70] sm:$0xff]
        %s1218 = scalar_lea.vmem %s1, 28
        %v1219 = vld [vmem:[%s1218] sm:$0xf]
        %v1221 = vsel %vm190, %v1210, 0
        %v1224 = vsel %vm190, %v1211, 0
        %v1227 = vsel %vm190, %v1212, 0
        %v1230 = vsel %vm190, %v1213, 0
        %v1233 = vsel %vm190, %v1214, 0
        %v1236 = vsel %vm190, %v1215, 0
        %v1239 = vsel %vm190, %v1216, 0
        %v1242 = vsel %vm190, %v1217, 0
        %v1245 = vsel %vm215, %v1219, 0
        %1247 = vmatprep.subr.mxu0 0.0
        %1248 = vmatpush1.msra.mxu0 0.0
        %1249 = vmatprep.subr.mxu0 0.0
        %1250 = vmatpush1.msra.mxu0 0.0
        %1251 = vmatprep.subr.mxu0 0.0
        %1252 = vmatpush1.msra.mxu0 0.0
        %1253 = vmatprep.subr.mxu0 0.0
        %1254 = vmatpush1.msra.mxu0 0.0
        %1255 = vmatprep.subr.mxu0 0.0
        %1256 = vmatpush1.msra.mxu0 0.0
        %1257 = vmatprep.subr.mxu0 0.0
        %1258 = vmatpush1.msra.mxu0 0.0
        %1259 = vmatprep.subr.mxu0 0.0
        %1260 = vmatpush1.msra.mxu0 0.0
        %1261 = vmatprep.subr.mxu0 0.0
        %1262 = vmatpush1.msra.mxu0 0.0
        %1263 = vmatprep.subr.mxu0 0.0
        %1264 = vmatpush1.msra.mxu0 0.0
        %1265 = vmatprep.subr.mxu0 0.0
        %1266 = vmatpush1.msra.mxu0 0.0
        %1267 = vmatprep.subr.mxu0 0.0
        %1268 = vmatpush1.msra.mxu0 0.0
        %1269 = vmatprep.subr.mxu0 0.0
        %1270 = vmatpush1.msra.mxu0 0.0
        %1271 = vmatprep.subr.mxu0 0.0
        %1272 = vmatpush1.msra.mxu0 0.0
        %1273 = vmatprep.subr.mxu0 0.0
        %1274 = vmatpush1.msra.mxu0 0.0
        %1275 = vmatprep.subr.mxu0 0.0
        %1276 = vmatpush1.msra.mxu0 0.0
        %1277 = vmatprep.subr.mxu0 0.0
        %1278 = vmatpush1.msra.mxu0 %v1245
        %1279 = vmatprep.subr.mxu0 0.0
        %1280 = vmatpush2.msra.mxu0 0.0
        %1281 = vmatprep.subr.mxu0 0.0
        %1282 = vmatpush2.msra.mxu0 0.0
        %1283 = vmatprep.subr.mxu0 0.0
        %1284 = vmatpush2.msra.mxu0 0.0
        %1285 = vmatprep.subr.mxu0 0.0
        %1286 = vmatpush2.msra.mxu0 0.0
        %1287 = vmatprep.subr.mxu0 0.0
        %1288 = vmatpush2.msra.mxu0 0.0
        %1289 = vmatprep.subr.mxu0 0.0
        %1290 = vmatpush2.msra.mxu0 0.0
        %1291 = vmatprep.subr.mxu0 0.0
        %1292 = vmatpush2.msra.mxu0 0.0
        %1293 = vmatprep.subr.mxu0 0.0
        %1294 = vmatpush2.msra.mxu0 0.0
        %1295 = vmatprep.subr.mxu0 0.0
        %1296 = vmatpush2.msra.mxu0 0.0
        %1297 = vmatprep.subr.mxu0 0.0
        %1298 = vmatpush2.msra.mxu0 0.0
        %1299 = vmatprep.subr.mxu0 0.0
        %1300 = vmatpush2.msra.mxu0 0.0
        %1301 = vmatprep.subr.mxu0 0.0
        %1302 = vmatpush2.msra.mxu0 0.0
        %1303 = vmatprep.subr.mxu0 0.0
        %1304 = vmatpush2.msra.mxu0 0.0
        %1305 = vmatprep.subr.mxu0 0.0
        %1306 = vmatpush2.msra.mxu0 0.0
        %1307 = vmatprep.subr.mxu0 0.0
        %1308 = vmatpush2.msra.mxu0 0.0
        %1309 = vmatprep.subr.mxu0 0.0
        %1310 = vmatpush2.msra.mxu0 0.0
        %1311 = vmatprep.mubr.f32.mxu0 0.0
        %1312 = vmatmul.mubr.f32.gmra.mxu0 %v1221
        %v1313 = vpop.f32.mrf.mxu0
        %v1314 = vadd.f32 0.0, %v1313
        %v1315 = vpop.f32.mrf.mxu0
        %1316 = vmatprep.mubr.f32.mxu0 0.0
        %1317 = vmatmul.mubr.f32.gmra.mxu0 %v1224
        %v1318 = vpop.f32.mrf.mxu0
        %v1319 = vadd.f32 0.0, %v1318
        %v1320 = vpop.f32.mrf.mxu0
        %1321 = vmatprep.mubr.f32.mxu0 0.0
        %1322 = vmatmul.mubr.f32.gmra.mxu0 %v1227
        %v1323 = vpop.f32.mrf.mxu0
        %v1324 = vadd.f32 0.0, %v1323
        %v1325 = vpop.f32.mrf.mxu0
        %1326 = vmatprep.mubr.f32.mxu0 0.0
        %1327 = vmatmul.mubr.f32.gmra.mxu0 %v1230
        %v1328 = vpop.f32.mrf.mxu0
        %v1329 = vadd.f32 0.0, %v1328
        %v1330 = vpop.f32.mrf.mxu0
        %1331 = vmatprep.mubr.f32.mxu0 0.0
        %1332 = vmatmul.mubr.f32.gmra.mxu0 %v1233
        %v1333 = vpop.f32.mrf.mxu0
        %v1334 = vadd.f32 0.0, %v1333
        %v1335 = vpop.f32.mrf.mxu0
        %1336 = vmatprep.mubr.f32.mxu0 0.0
        %1337 = vmatmul.mubr.f32.gmra.mxu0 %v1236
        %v1338 = vpop.f32.mrf.mxu0
        %v1339 = vadd.f32 0.0, %v1338
        %v1340 = vpop.f32.mrf.mxu0
        %1341 = vmatprep.mubr.f32.mxu0 0.0
        %1342 = vmatmul.mubr.f32.gmra.mxu0 %v1239
        %v1343 = vpop.f32.mrf.mxu0
        %v1344 = vadd.f32 0.0, %v1343
        %v1345 = vpop.f32.mrf.mxu0
        %1346 = vmatprep.mubr.f32.mxu0 0.0
        %1347 = vmatmul.mubr.f32.gmra.mxu0 %v1242
        %v1348 = vpop.f32.mrf.mxu0
        %v1349 = vadd.f32 0.0, %v1348
        %v1350 = vpop.f32.mrf.mxu0
        %1351 = vdwg.mxu0
        %v1352 = vadd.f32 %v1201, %v1314
        %v1353 = vadd.f32 %v1202, %v1319
        %v1354 = vadd.f32 %v1203, %v1324
        %v1355 = vadd.f32 %v1204, %v1329
        %v1356 = vadd.f32 %v1205, %v1334
        %v1357 = vadd.f32 %v1206, %v1339
        %v1358 = vadd.f32 %v1207, %v1344
        %v1359 = vadd.f32 %v1208, %v1349
        %v1360 = vld [vmem:[%s1058 + $0x1] sm:$0xff]
        %v1361 = vld [vmem:[%s1058 + $0x11] sm:$0xff]
        %v1362 = vld [vmem:[%s1058 + $0x21] sm:$0xff]
        %v1363 = vld [vmem:[%s1058 + $0x31] sm:$0xff]
        %v1364 = vld [vmem:[%s1058 + $0x41] sm:$0xff]
        %v1365 = vld [vmem:[%s1058 + $0x51] sm:$0xff]
        %v1366 = vld [vmem:[%s1058 + $0x61] sm:$0xff]
        %v1367 = vld [vmem:[%s1058 + $0x71] sm:$0xff]
        %s1368 = scalar_lea.vmem %s1, 32
        %v1369 = vld [vmem:[%s1368] sm:$0xf]
        %v1371 = vsel %vm190, %v1360, 0
        %v1374 = vsel %vm190, %v1361, 0
        %v1377 = vsel %vm190, %v1362, 0
        %v1380 = vsel %vm190, %v1363, 0
        %v1383 = vsel %vm190, %v1364, 0
        %v1386 = vsel %vm190, %v1365, 0
        %v1389 = vsel %vm190, %v1366, 0
        %v1392 = vsel %vm190, %v1367, 0
        %v1395 = vsel %vm215, %v1369, 0
        %1397 = vmatprep.subr.mxu0 0.0
        %1398 = vmatpush1.msra.mxu0 0.0
        %1399 = vmatprep.subr.mxu0 0.0
        %1400 = vmatpush1.msra.mxu0 0.0
        %1401 = vmatprep.subr.mxu0 0.0
        %1402 = vmatpush1.msra.mxu0 0.0
        %1403 = vmatprep.subr.mxu0 0.0
        %1404 = vmatpush1.msra.mxu0 0.0
        %1405 = vmatprep.subr.mxu0 0.0
        %1406 = vmatpush1.msra.mxu0 0.0
        %1407 = vmatprep.subr.mxu0 0.0
        %1408 = vmatpush1.msra.mxu0 0.0
        %1409 = vmatprep.subr.mxu0 0.0
        %1410 = vmatpush1.msra.mxu0 0.0
        %1411 = vmatprep.subr.mxu0 0.0
        %1412 = vmatpush1.msra.mxu0 0.0
        %1413 = vmatprep.subr.mxu0 0.0
        %1414 = vmatpush1.msra.mxu0 0.0
        %1415 = vmatprep.subr.mxu0 0.0
        %1416 = vmatpush1.msra.mxu0 0.0
        %1417 = vmatprep.subr.mxu0 0.0
        %1418 = vmatpush1.msra.mxu0 0.0
        %1419 = vmatprep.subr.mxu0 0.0
        %1420 = vmatpush1.msra.mxu0 0.0
        %1421 = vmatprep.subr.mxu0 0.0
        %1422 = vmatpush1.msra.mxu0 0.0
        %1423 = vmatprep.subr.mxu0 0.0
        %1424 = vmatpush1.msra.mxu0 0.0
        %1425 = vmatprep.subr.mxu0 0.0
        %1426 = vmatpush1.msra.mxu0 0.0
        %1427 = vmatprep.subr.mxu0 0.0
        %1428 = vmatpush1.msra.mxu0 %v1395
        %1429 = vmatprep.subr.mxu0 0.0
        %1430 = vmatpush2.msra.mxu0 0.0
        %1431 = vmatprep.subr.mxu0 0.0
        %1432 = vmatpush2.msra.mxu0 0.0
        %1433 = vmatprep.subr.mxu0 0.0
        %1434 = vmatpush2.msra.mxu0 0.0
        %1435 = vmatprep.subr.mxu0 0.0
        %1436 = vmatpush2.msra.mxu0 0.0
        %1437 = vmatprep.subr.mxu0 0.0
        %1438 = vmatpush2.msra.mxu0 0.0
        %1439 = vmatprep.subr.mxu0 0.0
        %1440 = vmatpush2.msra.mxu0 0.0
        %1441 = vmatprep.subr.mxu0 0.0
        %1442 = vmatpush2.msra.mxu0 0.0
        %1443 = vmatprep.subr.mxu0 0.0
        %1444 = vmatpush2.msra.mxu0 0.0
        %1445 = vmatprep.subr.mxu0 0.0
        %1446 = vmatpush2.msra.mxu0 0.0
        %1447 = vmatprep.subr.mxu0 0.0
        %1448 = vmatpush2.msra.mxu0 0.0
        %1449 = vmatprep.subr.mxu0 0.0
        %1450 = vmatpush2.msra.mxu0 0.0
        %1451 = vmatprep.subr.mxu0 0.0
        %1452 = vmatpush2.msra.mxu0 0.0
        %1453 = vmatprep.subr.mxu0 0.0
        %1454 = vmatpush2.msra.mxu0 0.0
        %1455 = vmatprep.subr.mxu0 0.0
        %1456 = vmatpush2.msra.mxu0 0.0
        %1457 = vmatprep.subr.mxu0 0.0
        %1458 = vmatpush2.msra.mxu0 0.0
        %1459 = vmatprep.subr.mxu0 0.0
        %1460 = vmatpush2.msra.mxu0 0.0
        %1461 = vmatprep.mubr.f32.mxu0 0.0
        %1462 = vmatmul.mubr.f32.gmra.mxu0 %v1371
        %v1463 = vpop.f32.mrf.mxu0
        %v1464 = vadd.f32 0.0, %v1463
        %v1465 = vpop.f32.mrf.mxu0
        %1466 = vmatprep.mubr.f32.mxu0 0.0
        %1467 = vmatmul.mubr.f32.gmra.mxu0 %v1374
        %v1468 = vpop.f32.mrf.mxu0
        %v1469 = vadd.f32 0.0, %v1468
        %v1470 = vpop.f32.mrf.mxu0
        %1471 = vmatprep.mubr.f32.mxu0 0.0
        %1472 = vmatmul.mubr.f32.gmra.mxu0 %v1377
        %v1473 = vpop.f32.mrf.mxu0
        %v1474 = vadd.f32 0.0, %v1473
        %v1475 = vpop.f32.mrf.mxu0
        %1476 = vmatprep.mubr.f32.mxu0 0.0
        %1477 = vmatmul.mubr.f32.gmra.mxu0 %v1380
        %v1478 = vpop.f32.mrf.mxu0
        %v1479 = vadd.f32 0.0, %v1478
        %v1480 = vpop.f32.mrf.mxu0
        %1481 = vmatprep.mubr.f32.mxu0 0.0
        %1482 = vmatmul.mubr.f32.gmra.mxu0 %v1383
        %v1483 = vpop.f32.mrf.mxu0
        %v1484 = vadd.f32 0.0, %v1483
        %v1485 = vpop.f32.mrf.mxu0
        %1486 = vmatprep.mubr.f32.mxu0 0.0
        %1487 = vmatmul.mubr.f32.gmra.mxu0 %v1386
        %v1488 = vpop.f32.mrf.mxu0
        %v1489 = vadd.f32 0.0, %v1488
        %v1490 = vpop.f32.mrf.mxu0
        %1491 = vmatprep.mubr.f32.mxu0 0.0
        %1492 = vmatmul.mubr.f32.gmra.mxu0 %v1389
        %v1493 = vpop.f32.mrf.mxu0
        %v1494 = vadd.f32 0.0, %v1493
        %v1495 = vpop.f32.mrf.mxu0
        %1496 = vmatprep.mubr.f32.mxu0 0.0
        %1497 = vmatmul.mubr.f32.gmra.mxu0 %v1392
        %v1498 = vpop.f32.mrf.mxu0
        %v1499 = vadd.f32 0.0, %v1498
        %v1500 = vpop.f32.mrf.mxu0
        %1501 = vdwg.mxu0
        %v1502 = vadd.f32 %v1352, %v1464
        %v1503 = vadd.f32 %v1353, %v1469
        %v1504 = vadd.f32 %v1354, %v1474
        %v1505 = vadd.f32 %v1355, %v1479
        %v1506 = vadd.f32 %v1356, %v1484
        %v1507 = vadd.f32 %v1357, %v1489
        %v1508 = vadd.f32 %v1358, %v1494
        %v1509 = vadd.f32 %v1359, %v1499
        %v1511 = vlaneseq
        %v1512 = vshrl.u32 %v1511, 7
        %v1513 = vsub.s32 0, %v1512
        %v1514 = vrot.slane %v169, %v1513
        %v1516 = vadd.f32 %v1502, %v1514
        %v1517 = vadd.f32 %v1503, %v1514
        %v1518 = vadd.f32 %v1504, %v1514
        %v1519 = vadd.f32 %v1505, %v1514
        %v1520 = vadd.f32 %v1506, %v1514
        %v1521 = vadd.f32 %v1507, %v1514
        %v1522 = vadd.f32 %v1508, %v1514
        %v1523 = vadd.f32 %v1509, %v1514
        %v1524 = vmax.f32 %v1516, 0.0
        %v1525 = vmax.f32 %v1517, 0.0
        %v1526 = vmax.f32 %v1518, 0.0
        %v1527 = vmax.f32 %v1519, 0.0
        %v1528 = vmax.f32 %v1520, 0.0
        %v1529 = vmax.f32 %v1521, 0.0
        %v1530 = vmax.f32 %v1522, 0.0
        %v1531 = vmax.f32 %v1523, 0.0
        %v1532 = vadd.f32 %v1524, 0.0
        %v1533 = vadd.f32 %v1525, 0.0
        %v1534 = vadd.f32 %v1526, 0.0
        %v1535 = vadd.f32 %v1527, 0.0
        %v1536 = vadd.f32 %v1528, 0.0
        %v1537 = vadd.f32 %v1529, 0.0
        %v1538 = vadd.f32 %v1530, 0.0
        %v1539 = vadd.f32 %v1531, 0.0
        %1540 = vmatprep.subr.mxu0 0.0
        %1541 = vmatpush1.msra.mxu0 0.0
        %1542 = vmatprep.subr.mxu0 0.0
        %1543 = vmatpush1.msra.mxu0 0.0
        %1544 = vmatprep.subr.mxu0 0.0
        %1545 = vmatpush1.msra.mxu0 0.0
        %1546 = vmatprep.subr.mxu0 0.0
        %1547 = vmatpush1.msra.mxu0 0.0
        %1548 = vmatprep.subr.mxu0 0.0
        %1549 = vmatpush1.msra.mxu0 0.0
        %1550 = vmatprep.subr.mxu0 0.0
        %1551 = vmatpush1.msra.mxu0 0.0
        %1552 = vmatprep.subr.mxu0 0.0
        %1553 = vmatpush1.msra.mxu0 0.0
        %1554 = vmatprep.subr.mxu0 0.0
        %1555 = vmatpush1.msra.mxu0 0.0
        %1556 = vmatprep.subr.mxu0 0.0
        %1557 = vmatpush1.msra.mxu0 0.0
        %1558 = vmatprep.subr.mxu0 0.0
        %1559 = vmatpush1.msra.mxu0 0.0
        %1560 = vmatprep.subr.mxu0 0.0
        %1561 = vmatpush1.msra.mxu0 0.0
        %1562 = vmatprep.subr.mxu0 0.0
        %1563 = vmatpush1.msra.mxu0 0.0
        %1564 = vmatprep.subr.mxu0 0.0
        %1565 = vmatpush1.msra.mxu0 0.0
        %1566 = vmatprep.subr.mxu0 0.0
        %1567 = vmatpush1.msra.mxu0 0.0
        %1568 = vmatprep.subr.mxu0 0.0
        %1569 = vmatpush1.msra.mxu0 0.0
        %1570 = vmatprep.subr.mxu0 0.0
        %1571 = vmatpush1.msra.mxu0 %v217
        %1572 = vmatprep.subr.mxu0 0.0
        %1573 = vmatpush2.msra.mxu0 0.0
        %1574 = vmatprep.subr.mxu0 0.0
        %1575 = vmatpush2.msra.mxu0 0.0
        %1576 = vmatprep.subr.mxu0 0.0
        %1577 = vmatpush2.msra.mxu0 0.0
        %1578 = vmatprep.subr.mxu0 0.0
        %1579 = vmatpush2.msra.mxu0 0.0
        %1580 = vmatprep.subr.mxu0 0.0
        %1581 = vmatpush2.msra.mxu0 0.0
        %1582 = vmatprep.subr.mxu0 0.0
        %1583 = vmatpush2.msra.mxu0 0.0
        %1584 = vmatprep.subr.mxu0 0.0
        %1585 = vmatpush2.msra.mxu0 0.0
        %1586 = vmatprep.subr.mxu0 0.0
        %1587 = vmatpush2.msra.mxu0 0.0
        %1588 = vmatprep.subr.mxu0 0.0
        %1589 = vmatpush2.msra.mxu0 0.0
        %1590 = vmatprep.subr.mxu0 0.0
        %1591 = vmatpush2.msra.mxu0 0.0
        %1592 = vmatprep.subr.mxu0 0.0
        %1593 = vmatpush2.msra.mxu0 0.0
        %1594 = vmatprep.subr.mxu0 0.0
        %1595 = vmatpush2.msra.mxu0 0.0
        %1596 = vmatprep.subr.mxu0 0.0
        %1597 = vmatpush2.msra.mxu0 0.0
        %1598 = vmatprep.subr.mxu0 0.0
        %1599 = vmatpush2.msra.mxu0 0.0
        %1600 = vmatprep.subr.mxu0 0.0
        %1601 = vmatpush2.msra.mxu0 0.0
        %1602 = vmatprep.subr.mxu0 0.0
        %1603 = vmatpush2.msra.mxu0 0.0
        %1604 = vmatprep.mubr.f32.mxu0 0.0
        %1605 = vmatmul.mubr.f32.gmra.mxu0 %v467
        %v1606 = vpop.f32.mrf.mxu0
        %v1607 = vadd.f32 0.0, %v1606
        %v1608 = vpop.f32.mrf.mxu0
        %1609 = vmatprep.mubr.f32.mxu0 0.0
        %1610 = vmatmul.mubr.f32.gmra.mxu0 %v470
        %v1611 = vpop.f32.mrf.mxu0
        %v1612 = vadd.f32 0.0, %v1611
        %v1613 = vpop.f32.mrf.mxu0
        %1614 = vmatprep.mubr.f32.mxu0 0.0
        %1615 = vmatmul.mubr.f32.gmra.mxu0 %v473
        %v1616 = vpop.f32.mrf.mxu0
        %v1617 = vadd.f32 0.0, %v1616
        %v1618 = vpop.f32.mrf.mxu0
        %1619 = vmatprep.mubr.f32.mxu0 0.0
        %1620 = vmatmul.mubr.f32.gmra.mxu0 %v476
        %v1621 = vpop.f32.mrf.mxu0
        %v1622 = vadd.f32 0.0, %v1621
        %v1623 = vpop.f32.mrf.mxu0
        %1624 = vmatprep.mubr.f32.mxu0 0.0
        %1625 = vmatmul.mubr.f32.gmra.mxu0 %v479
        %v1626 = vpop.f32.mrf.mxu0
        %v1627 = vadd.f32 0.0, %v1626
        %v1628 = vpop.f32.mrf.mxu0
        %1629 = vmatprep.mubr.f32.mxu0 0.0
        %1630 = vmatmul.mubr.f32.gmra.mxu0 %v482
        %v1631 = vpop.f32.mrf.mxu0
        %v1632 = vadd.f32 0.0, %v1631
        %v1633 = vpop.f32.mrf.mxu0
        %1634 = vmatprep.mubr.f32.mxu0 0.0
        %1635 = vmatmul.mubr.f32.gmra.mxu0 %v485
        %v1636 = vpop.f32.mrf.mxu0
        %v1637 = vadd.f32 0.0, %v1636
        %v1638 = vpop.f32.mrf.mxu0
        %1639 = vmatprep.mubr.f32.mxu0 0.0
        %1640 = vmatmul.mubr.f32.gmra.mxu0 %v488
        %v1641 = vpop.f32.mrf.mxu0
        %v1642 = vadd.f32 0.0, %v1641
        %v1643 = vpop.f32.mrf.mxu0
        %1644 = vdwg.mxu0
        %1645 = vmatprep.subr.mxu0 0.0
        %1646 = vmatpush1.msra.mxu0 0.0
        %1647 = vmatprep.subr.mxu0 0.0
        %1648 = vmatpush1.msra.mxu0 0.0
        %1649 = vmatprep.subr.mxu0 0.0
        %1650 = vmatpush1.msra.mxu0 0.0
        %1651 = vmatprep.subr.mxu0 0.0
        %1652 = vmatpush1.msra.mxu0 0.0
        %1653 = vmatprep.subr.mxu0 0.0
        %1654 = vmatpush1.msra.mxu0 0.0
        %1655 = vmatprep.subr.mxu0 0.0
        %1656 = vmatpush1.msra.mxu0 0.0
        %1657 = vmatprep.subr.mxu0 0.0
        %1658 = vmatpush1.msra.mxu0 0.0
        %1659 = vmatprep.subr.mxu0 0.0
        %1660 = vmatpush1.msra.mxu0 0.0
        %1661 = vmatprep.subr.mxu0 0.0
        %1662 = vmatpush1.msra.mxu0 0.0
        %1663 = vmatprep.subr.mxu0 0.0
        %1664 = vmatpush1.msra.mxu0 0.0
        %1665 = vmatprep.subr.mxu0 0.0
        %1666 = vmatpush1.msra.mxu0 0.0
        %1667 = vmatprep.subr.mxu0 0.0
        %1668 = vmatpush1.msra.mxu0 0.0
        %1669 = vmatprep.subr.mxu0 0.0
        %1670 = vmatpush1.msra.mxu0 0.0
        %1671 = vmatprep.subr.mxu0 0.0
        %1672 = vmatpush1.msra.mxu0 0.0
        %1673 = vmatprep.subr.mxu0 0.0
        %1674 = vmatpush1.msra.mxu0 0.0
        %1675 = vmatprep.subr.mxu0 0.0
        %1676 = vmatpush1.msra.mxu0 %v349
        %1677 = vmatprep.subr.mxu0 0.0
        %1678 = vmatpush2.msra.mxu0 0.0
        %1679 = vmatprep.subr.mxu0 0.0
        %1680 = vmatpush2.msra.mxu0 0.0
        %1681 = vmatprep.subr.mxu0 0.0
        %1682 = vmatpush2.msra.mxu0 0.0
        %1683 = vmatprep.subr.mxu0 0.0
        %1684 = vmatpush2.msra.mxu0 0.0
        %1685 = vmatprep.subr.mxu0 0.0
        %1686 = vmatpush2.msra.mxu0 0.0
        %1687 = vmatprep.subr.mxu0 0.0
        %1688 = vmatpush2.msra.mxu0 0.0
        %1689 = vmatprep.subr.mxu0 0.0
        %1690 = vmatpush2.msra.mxu0 0.0
        %1691 = vmatprep.subr.mxu0 0.0
        %1692 = vmatpush2.msra.mxu0 0.0
        %1693 = vmatprep.subr.mxu0 0.0
        %1694 = vmatpush2.msra.mxu0 0.0
        %1695 = vmatprep.subr.mxu0 0.0
        %1696 = vmatpush2.msra.mxu0 0.0
        %1697 = vmatprep.subr.mxu0 0.0
        %1698 = vmatpush2.msra.mxu0 0.0
        %1699 = vmatprep.subr.mxu0 0.0
        %1700 = vmatpush2.msra.mxu0 0.0
        %1701 = vmatprep.subr.mxu0 0.0
        %1702 = vmatpush2.msra.mxu0 0.0
        %1703 = vmatprep.subr.mxu0 0.0
        %1704 = vmatpush2.msra.mxu0 0.0
        %1705 = vmatprep.subr.mxu0 0.0
        %1706 = vmatpush2.msra.mxu0 0.0
        %1707 = vmatprep.subr.mxu0 0.0
        %1708 = vmatpush2.msra.mxu0 0.0
        %1709 = vmatprep.mubr.f32.mxu0 0.0
        %1710 = vmatmul.mubr.f32.gmra.mxu0 %v192
        %v1711 = vpop.f32.mrf.mxu0
        %v1712 = vadd.f32 %v1607, %v1711
        %v1713 = vpop.f32.mrf.mxu0
        %1714 = vmatprep.mubr.f32.mxu0 0.0
        %1715 = vmatmul.mubr.f32.gmra.mxu0 %v195
        %v1716 = vpop.f32.mrf.mxu0
        %v1717 = vadd.f32 %v1612, %v1716
        %v1718 = vpop.f32.mrf.mxu0
        %1719 = vmatprep.mubr.f32.mxu0 0.0
        %1720 = vmatmul.mubr.f32.gmra.mxu0 %v198
        %v1721 = vpop.f32.mrf.mxu0
        %v1722 = vadd.f32 %v1617, %v1721
        %v1723 = vpop.f32.mrf.mxu0
        %1724 = vmatprep.mubr.f32.mxu0 0.0
        %1725 = vmatmul.mubr.f32.gmra.mxu0 %v201
        %v1726 = vpop.f32.mrf.mxu0
        %v1727 = vadd.f32 %v1622, %v1726
        %v1728 = vpop.f32.mrf.mxu0
        %1729 = vmatprep.mubr.f32.mxu0 0.0
        %1730 = vmatmul.mubr.f32.gmra.mxu0 %v204
        %v1731 = vpop.f32.mrf.mxu0
        %v1732 = vadd.f32 %v1627, %v1731
        %v1733 = vpop.f32.mrf.mxu0
        %1734 = vmatprep.mubr.f32.mxu0 0.0
        %1735 = vmatmul.mubr.f32.gmra.mxu0 %v207
        %v1736 = vpop.f32.mrf.mxu0
        %v1737 = vadd.f32 %v1632, %v1736
        %v1738 = vpop.f32.mrf.mxu0
        %1739 = vmatprep.mubr.f32.mxu0 0.0
        %1740 = vmatmul.mubr.f32.gmra.mxu0 %v210
        %v1741 = vpop.f32.mrf.mxu0
        %v1742 = vadd.f32 %v1637, %v1741
        %v1743 = vpop.f32.mrf.mxu0
        %1744 = vmatprep.mubr.f32.mxu0 0.0
        %1745 = vmatmul.mubr.f32.gmra.mxu0 %v213
        %v1746 = vpop.f32.mrf.mxu0
        %v1747 = vadd.f32 %v1642, %v1746
        %v1748 = vpop.f32.mrf.mxu0
        %1749 = vdwg.mxu0
        %v1750 = vld [vmem:[%s179 + $0x1] sm:$0xff]
        %v1751 = vld [vmem:[%s179 + $0x11] sm:$0xff]
        %v1752 = vld [vmem:[%s179 + $0x21] sm:$0xff]
        %v1753 = vld [vmem:[%s179 + $0x31] sm:$0xff]
        %v1754 = vld [vmem:[%s179 + $0x41] sm:$0xff]
        %v1755 = vld [vmem:[%s179 + $0x51] sm:$0xff]
        %v1756 = vld [vmem:[%s179 + $0x61] sm:$0xff]
        %v1757 = vld [vmem:[%s179 + $0x71] sm:$0xff]
        %v1759 = vsel %vm190, %v1750, 0
        %v1762 = vsel %vm190, %v1751, 0
        %v1765 = vsel %vm190, %v1752, 0
        %v1768 = vsel %vm190, %v1753, 0
        %v1771 = vsel %vm190, %v1754, 0
        %v1774 = vsel %vm190, %v1755, 0
        %v1777 = vsel %vm190, %v1756, 0
        %v1780 = vsel %vm190, %v1757, 0
        %1782 = vmatprep.subr.mxu0 0.0
        %1783 = vmatpush1.msra.mxu0 0.0
        %1784 = vmatprep.subr.mxu0 0.0
        %1785 = vmatpush1.msra.mxu0 0.0
        %1786 = vmatprep.subr.mxu0 0.0
        %1787 = vmatpush1.msra.mxu0 0.0
        %1788 = vmatprep.subr.mxu0 0.0
        %1789 = vmatpush1.msra.mxu0 0.0
        %1790 = vmatprep.subr.mxu0 0.0
        %1791 = vmatpush1.msra.mxu0 0.0
        %1792 = vmatprep.subr.mxu0 0.0
        %1793 = vmatpush1.msra.mxu0 0.0
        %1794 = vmatprep.subr.mxu0 0.0
        %1795 = vmatpush1.msra.mxu0 0.0
        %1796 = vmatprep.subr.mxu0 0.0
        %1797 = vmatpush1.msra.mxu0 0.0
        %1798 = vmatprep.subr.mxu0 0.0
        %1799 = vmatpush1.msra.mxu0 0.0
        %1800 = vmatprep.subr.mxu0 0.0
        %1801 = vmatpush1.msra.mxu0 0.0
        %1802 = vmatprep.subr.mxu0 0.0
        %1803 = vmatpush1.msra.mxu0 0.0
        %1804 = vmatprep.subr.mxu0 0.0
        %1805 = vmatpush1.msra.mxu0 0.0
        %1806 = vmatprep.subr.mxu0 0.0
        %1807 = vmatpush1.msra.mxu0 0.0
        %1808 = vmatprep.subr.mxu0 0.0
        %1809 = vmatpush1.msra.mxu0 0.0
        %1810 = vmatprep.subr.mxu0 0.0
        %1811 = vmatpush1.msra.mxu0 0.0
        %1812 = vmatprep.subr.mxu0 0.0
        %1813 = vmatpush1.msra.mxu0 %v491
        %1814 = vmatprep.subr.mxu0 0.0
        %1815 = vmatpush2.msra.mxu0 0.0
        %1816 = vmatprep.subr.mxu0 0.0
        %1817 = vmatpush2.msra.mxu0 0.0
        %1818 = vmatprep.subr.mxu0 0.0
        %1819 = vmatpush2.msra.mxu0 0.0
        %1820 = vmatprep.subr.mxu0 0.0
        %1821 = vmatpush2.msra.mxu0 0.0
        %1822 = vmatprep.subr.mxu0 0.0
        %1823 = vmatpush2.msra.mxu0 0.0
        %1824 = vmatprep.subr.mxu0 0.0
        %1825 = vmatpush2.msra.mxu0 0.0
        %1826 = vmatprep.subr.mxu0 0.0
        %1827 = vmatpush2.msra.mxu0 0.0
        %1828 = vmatprep.subr.mxu0 0.0
        %1829 = vmatpush2.msra.mxu0 0.0
        %1830 = vmatprep.subr.mxu0 0.0
        %1831 = vmatpush2.msra.mxu0 0.0
        %1832 = vmatprep.subr.mxu0 0.0
        %1833 = vmatpush2.msra.mxu0 0.0
        %1834 = vmatprep.subr.mxu0 0.0
        %1835 = vmatpush2.msra.mxu0 0.0
        %1836 = vmatprep.subr.mxu0 0.0
        %1837 = vmatpush2.msra.mxu0 0.0
        %1838 = vmatprep.subr.mxu0 0.0
        %1839 = vmatpush2.msra.mxu0 0.0
        %1840 = vmatprep.subr.mxu0 0.0
        %1841 = vmatpush2.msra.mxu0 0.0
        %1842 = vmatprep.subr.mxu0 0.0
        %1843 = vmatpush2.msra.mxu0 0.0
        %1844 = vmatprep.subr.mxu0 0.0
        %1845 = vmatpush2.msra.mxu0 0.0
        %1846 = vmatprep.mubr.f32.mxu0 0.0
        %1847 = vmatmul.mubr.f32.gmra.mxu0 %v1759
        %v1848 = vpop.f32.mrf.mxu0
        %v1849 = vadd.f32 0.0, %v1848
        %v1850 = vpop.f32.mrf.mxu0
        %1851 = vmatprep.mubr.f32.mxu0 0.0
        %1852 = vmatmul.mubr.f32.gmra.mxu0 %v1762
        %v1853 = vpop.f32.mrf.mxu0
        %v1854 = vadd.f32 0.0, %v1853
        %v1855 = vpop.f32.mrf.mxu0
        %1856 = vmatprep.mubr.f32.mxu0 0.0
        %1857 = vmatmul.mubr.f32.gmra.mxu0 %v1765
        %v1858 = vpop.f32.mrf.mxu0
        %v1859 = vadd.f32 0.0, %v1858
        %v1860 = vpop.f32.mrf.mxu0
        %1861 = vmatprep.mubr.f32.mxu0 0.0
        %1862 = vmatmul.mubr.f32.gmra.mxu0 %v1768
        %v1863 = vpop.f32.mrf.mxu0
        %v1864 = vadd.f32 0.0, %v1863
        %v1865 = vpop.f32.mrf.mxu0
        %1866 = vmatprep.mubr.f32.mxu0 0.0
        %1867 = vmatmul.mubr.f32.gmra.mxu0 %v1771
        %v1868 = vpop.f32.mrf.mxu0
        %v1869 = vadd.f32 0.0, %v1868
        %v1870 = vpop.f32.mrf.mxu0
        %1871 = vmatprep.mubr.f32.mxu0 0.0
        %1872 = vmatmul.mubr.f32.gmra.mxu0 %v1774
        %v1873 = vpop.f32.mrf.mxu0
        %v1874 = vadd.f32 0.0, %v1873
        %v1875 = vpop.f32.mrf.mxu0
        %1876 = vmatprep.mubr.f32.mxu0 0.0
        %1877 = vmatmul.mubr.f32.gmra.mxu0 %v1777
        %v1878 = vpop.f32.mrf.mxu0
        %v1879 = vadd.f32 0.0, %v1878
        %v1880 = vpop.f32.mrf.mxu0
        %1881 = vmatprep.mubr.f32.mxu0 0.0
        %1882 = vmatmul.mubr.f32.gmra.mxu0 %v1780
        %v1883 = vpop.f32.mrf.mxu0
        %v1884 = vadd.f32 0.0, %v1883
        %v1885 = vpop.f32.mrf.mxu0
        %1886 = vdwg.mxu0
        %v1887 = vadd.f32 %v1712, %v1849
        %v1888 = vadd.f32 %v1717, %v1854
        %v1889 = vadd.f32 %v1722, %v1859
        %v1890 = vadd.f32 %v1727, %v1864
        %v1891 = vadd.f32 %v1732, %v1869
        %v1892 = vadd.f32 %v1737, %v1874
        %v1893 = vadd.f32 %v1742, %v1879
        %v1894 = vadd.f32 %v1747, %v1884
        %1895 = vmatprep.subr.mxu0 0.0
        %1896 = vmatpush1.msra.mxu0 0.0
        %1897 = vmatprep.subr.mxu0 0.0
        %1898 = vmatpush1.msra.mxu0 0.0
        %1899 = vmatprep.subr.mxu0 0.0
        %1900 = vmatpush1.msra.mxu0 0.0
        %1901 = vmatprep.subr.mxu0 0.0
        %1902 = vmatpush1.msra.mxu0 0.0
        %1903 = vmatprep.subr.mxu0 0.0
        %1904 = vmatpush1.msra.mxu0 0.0
        %1905 = vmatprep.subr.mxu0 0.0
        %1906 = vmatpush1.msra.mxu0 0.0
        %1907 = vmatprep.subr.mxu0 0.0
        %1908 = vmatpush1.msra.mxu0 0.0
        %1909 = vmatprep.subr.mxu0 0.0
        %1910 = vmatpush1.msra.mxu0 0.0
        %1911 = vmatprep.subr.mxu0 0.0
        %1912 = vmatpush1.msra.mxu0 0.0
        %1913 = vmatprep.subr.mxu0 0.0
        %1914 = vmatpush1.msra.mxu0 0.0
        %1915 = vmatprep.subr.mxu0 0.0
        %1916 = vmatpush1.msra.mxu0 0.0
        %1917 = vmatprep.subr.mxu0 0.0
        %1918 = vmatpush1.msra.mxu0 0.0
        %1919 = vmatprep.subr.mxu0 0.0
        %1920 = vmatpush1.msra.mxu0 0.0
        %1921 = vmatprep.subr.mxu0 0.0
        %1922 = vmatpush1.msra.mxu0 0.0
        %1923 = vmatprep.subr.mxu0 0.0
        %1924 = vmatpush1.msra.mxu0 0.0
        %1925 = vmatprep.subr.mxu0 0.0
        %1926 = vmatpush1.msra.mxu0 %v642
        %1927 = vmatprep.subr.mxu0 0.0
        %1928 = vmatpush2.msra.mxu0 0.0
        %1929 = vmatprep.subr.mxu0 0.0
        %1930 = vmatpush2.msra.mxu0 0.0
        %1931 = vmatprep.subr.mxu0 0.0
        %1932 = vmatpush2.msra.mxu0 0.0
        %1933 = vmatprep.subr.mxu0 0.0
        %1934 = vmatpush2.msra.mxu0 0.0
        %1935 = vmatprep.subr.mxu0 0.0
        %1936 = vmatpush2.msra.mxu0 0.0
        %1937 = vmatprep.subr.mxu0 0.0
        %1938 = vmatpush2.msra.mxu0 0.0
        %1939 = vmatprep.subr.mxu0 0.0
        %1940 = vmatpush2.msra.mxu0 0.0
        %1941 = vmatprep.subr.mxu0 0.0
        %1942 = vmatpush2.msra.mxu0 0.0
        %1943 = vmatprep.subr.mxu0 0.0
        %1944 = vmatpush2.msra.mxu0 0.0
        %1945 = vmatprep.subr.mxu0 0.0
        %1946 = vmatpush2.msra.mxu0 0.0
        %1947 = vmatprep.subr.mxu0 0.0
        %1948 = vmatpush2.msra.mxu0 0.0
        %1949 = vmatprep.subr.mxu0 0.0
        %1950 = vmatpush2.msra.mxu0 0.0
        %1951 = vmatprep.subr.mxu0 0.0
        %1952 = vmatpush2.msra.mxu0 0.0
        %1953 = vmatprep.subr.mxu0 0.0
        %1954 = vmatpush2.msra.mxu0 0.0
        %1955 = vmatprep.subr.mxu0 0.0
        %1956 = vmatpush2.msra.mxu0 0.0
        %1957 = vmatprep.subr.mxu0 0.0
        %1958 = vmatpush2.msra.mxu0 0.0
        %1959 = vmatprep.mubr.f32.mxu0 0.0
        %1960 = vmatmul.mubr.f32.gmra.mxu0 %v769
        %v1961 = vpop.f32.mrf.mxu0
        %v1962 = vadd.f32 0.0, %v1961
        %v1963 = vpop.f32.mrf.mxu0
        %1964 = vmatprep.mubr.f32.mxu0 0.0
        %1965 = vmatmul.mubr.f32.gmra.mxu0 %v772
        %v1966 = vpop.f32.mrf.mxu0
        %v1967 = vadd.f32 0.0, %v1966
        %v1968 = vpop.f32.mrf.mxu0
        %1969 = vmatprep.mubr.f32.mxu0 0.0
        %1970 = vmatmul.mubr.f32.gmra.mxu0 %v775
        %v1971 = vpop.f32.mrf.mxu0
        %v1972 = vadd.f32 0.0, %v1971
        %v1973 = vpop.f32.mrf.mxu0
        %1974 = vmatprep.mubr.f32.mxu0 0.0
        %1975 = vmatmul.mubr.f32.gmra.mxu0 %v778
        %v1976 = vpop.f32.mrf.mxu0
        %v1977 = vadd.f32 0.0, %v1976
        %v1978 = vpop.f32.mrf.mxu0
        %1979 = vmatprep.mubr.f32.mxu0 0.0
        %1980 = vmatmul.mubr.f32.gmra.mxu0 %v781
        %v1981 = vpop.f32.mrf.mxu0
        %v1982 = vadd.f32 0.0, %v1981
        %v1983 = vpop.f32.mrf.mxu0
        %1984 = vmatprep.mubr.f32.mxu0 0.0
        %1985 = vmatmul.mubr.f32.gmra.mxu0 %v784
        %v1986 = vpop.f32.mrf.mxu0
        %v1987 = vadd.f32 0.0, %v1986
        %v1988 = vpop.f32.mrf.mxu0
        %1989 = vmatprep.mubr.f32.mxu0 0.0
        %1990 = vmatmul.mubr.f32.gmra.mxu0 %v787
        %v1991 = vpop.f32.mrf.mxu0
        %v1992 = vadd.f32 0.0, %v1991
        %v1993 = vpop.f32.mrf.mxu0
        %1994 = vmatprep.mubr.f32.mxu0 0.0
        %1995 = vmatmul.mubr.f32.gmra.mxu0 %v790
        %v1996 = vpop.f32.mrf.mxu0
        %v1997 = vadd.f32 0.0, %v1996
        %v1998 = vpop.f32.mrf.mxu0
        %1999 = vdwg.mxu0
        %v2000 = vadd.f32 %v1887, %v1962
        %v2001 = vadd.f32 %v1888, %v1967
        %v2002 = vadd.f32 %v1889, %v1972
        %v2003 = vadd.f32 %v1890, %v1977
        %v2004 = vadd.f32 %v1891, %v1982
        %v2005 = vadd.f32 %v1892, %v1987
        %v2006 = vadd.f32 %v1893, %v1992
        %v2007 = vadd.f32 %v1894, %v1997
        %2008 = vmatprep.subr.mxu0 0.0
        %2009 = vmatpush1.msra.mxu0 0.0
        %2010 = vmatprep.subr.mxu0 0.0
        %2011 = vmatpush1.msra.mxu0 0.0
        %2012 = vmatprep.subr.mxu0 0.0
        %2013 = vmatpush1.msra.mxu0 0.0
        %2014 = vmatprep.subr.mxu0 0.0
        %2015 = vmatpush1.msra.mxu0 0.0
        %2016 = vmatprep.subr.mxu0 0.0
        %2017 = vmatpush1.msra.mxu0 0.0
        %2018 = vmatprep.subr.mxu0 0.0
        %2019 = vmatpush1.msra.mxu0 0.0
        %2020 = vmatprep.subr.mxu0 0.0
        %2021 = vmatpush1.msra.mxu0 0.0
        %2022 = vmatprep.subr.mxu0 0.0
        %2023 = vmatpush1.msra.mxu0 0.0
        %2024 = vmatprep.subr.mxu0 0.0
        %2025 = vmatpush1.msra.mxu0 0.0
        %2026 = vmatprep.subr.mxu0 0.0
        %2027 = vmatpush1.msra.mxu0 0.0
        %2028 = vmatprep.subr.mxu0 0.0
        %2029 = vmatpush1.msra.mxu0 0.0
        %2030 = vmatprep.subr.mxu0 0.0
        %2031 = vmatpush1.msra.mxu0 0.0
        %2032 = vmatprep.subr.mxu0 0.0
        %2033 = vmatpush1.msra.mxu0 0.0
        %2034 = vmatprep.subr.mxu0 0.0
        %2035 = vmatpush1.msra.mxu0 0.0
        %2036 = vmatprep.subr.mxu0 0.0
        %2037 = vmatpush1.msra.mxu0 0.0
        %2038 = vmatprep.subr.mxu0 0.0
        %2039 = vmatpush1.msra.mxu0 %v793
        %2040 = vmatprep.subr.mxu0 0.0
        %2041 = vmatpush2.msra.mxu0 0.0
        %2042 = vmatprep.subr.mxu0 0.0
        %2043 = vmatpush2.msra.mxu0 0.0
        %2044 = vmatprep.subr.mxu0 0.0
        %2045 = vmatpush2.msra.mxu0 0.0
        %2046 = vmatprep.subr.mxu0 0.0
        %2047 = vmatpush2.msra.mxu0 0.0
        %2048 = vmatprep.subr.mxu0 0.0
        %2049 = vmatpush2.msra.mxu0 0.0
        %2050 = vmatprep.subr.mxu0 0.0
        %2051 = vmatpush2.msra.mxu0 0.0
        %2052 = vmatprep.subr.mxu0 0.0
        %2053 = vmatpush2.msra.mxu0 0.0
        %2054 = vmatprep.subr.mxu0 0.0
        %2055 = vmatpush2.msra.mxu0 0.0
        %2056 = vmatprep.subr.mxu0 0.0
        %2057 = vmatpush2.msra.mxu0 0.0
        %2058 = vmatprep.subr.mxu0 0.0
        %2059 = vmatpush2.msra.mxu0 0.0
        %2060 = vmatprep.subr.mxu0 0.0
        %2061 = vmatpush2.msra.mxu0 0.0
        %2062 = vmatprep.subr.mxu0 0.0
        %2063 = vmatpush2.msra.mxu0 0.0
        %2064 = vmatprep.subr.mxu0 0.0
        %2065 = vmatpush2.msra.mxu0 0.0
        %2066 = vmatprep.subr.mxu0 0.0
        %2067 = vmatpush2.msra.mxu0 0.0
        %2068 = vmatprep.subr.mxu0 0.0
        %2069 = vmatpush2.msra.mxu0 0.0
        %2070 = vmatprep.subr.mxu0 0.0
        %2071 = vmatpush2.msra.mxu0 0.0
        %2072 = vmatprep.mubr.f32.mxu0 0.0
        %2073 = vmatmul.mubr.f32.gmra.mxu0 %v919
        %v2074 = vpop.f32.mrf.mxu0
        %v2075 = vadd.f32 0.0, %v2074
        %v2076 = vpop.f32.mrf.mxu0
        %2077 = vmatprep.mubr.f32.mxu0 0.0
        %2078 = vmatmul.mubr.f32.gmra.mxu0 %v922
        %v2079 = vpop.f32.mrf.mxu0
        %v2080 = vadd.f32 0.0, %v2079
        %v2081 = vpop.f32.mrf.mxu0
        %2082 = vmatprep.mubr.f32.mxu0 0.0
        %2083 = vmatmul.mubr.f32.gmra.mxu0 %v925
        %v2084 = vpop.f32.mrf.mxu0
        %v2085 = vadd.f32 0.0, %v2084
        %v2086 = vpop.f32.mrf.mxu0
        %2087 = vmatprep.mubr.f32.mxu0 0.0
        %2088 = vmatmul.mubr.f32.gmra.mxu0 %v928
        %v2089 = vpop.f32.mrf.mxu0
        %v2090 = vadd.f32 0.0, %v2089
        %v2091 = vpop.f32.mrf.mxu0
        %2092 = vmatprep.mubr.f32.mxu0 0.0
        %2093 = vmatmul.mubr.f32.gmra.mxu0 %v931
        %v2094 = vpop.f32.mrf.mxu0
        %v2095 = vadd.f32 0.0, %v2094
        %v2096 = vpop.f32.mrf.mxu0
        %2097 = vmatprep.mubr.f32.mxu0 0.0
        %2098 = vmatmul.mubr.f32.gmra.mxu0 %v934
        %v2099 = vpop.f32.mrf.mxu0
        %v2100 = vadd.f32 0.0, %v2099
        %v2101 = vpop.f32.mrf.mxu0
        %2102 = vmatprep.mubr.f32.mxu0 0.0
        %2103 = vmatmul.mubr.f32.gmra.mxu0 %v937
        %v2104 = vpop.f32.mrf.mxu0
        %v2105 = vadd.f32 0.0, %v2104
        %v2106 = vpop.f32.mrf.mxu0
        %2107 = vmatprep.mubr.f32.mxu0 0.0
        %2108 = vmatmul.mubr.f32.gmra.mxu0 %v940
        %v2109 = vpop.f32.mrf.mxu0
        %v2110 = vadd.f32 0.0, %v2109
        %v2111 = vpop.f32.mrf.mxu0
        %2112 = vdwg.mxu0
        %v2113 = vadd.f32 %v2000, %v2075
        %v2114 = vadd.f32 %v2001, %v2080
        %v2115 = vadd.f32 %v2002, %v2085
        %v2116 = vadd.f32 %v2003, %v2090
        %v2117 = vadd.f32 %v2004, %v2095
        %v2118 = vadd.f32 %v2005, %v2100
        %v2119 = vadd.f32 %v2006, %v2105
        %v2120 = vadd.f32 %v2007, %v2110
        %v2121 = vld [vmem:[%s757 + $0x1] sm:$0xff]
        %v2122 = vld [vmem:[%s757 + $0x11] sm:$0xff]
        %v2123 = vld [vmem:[%s757 + $0x21] sm:$0xff]
        %v2124 = vld [vmem:[%s757 + $0x31] sm:$0xff]
        %v2125 = vld [vmem:[%s757 + $0x41] sm:$0xff]
        %v2126 = vld [vmem:[%s757 + $0x51] sm:$0xff]
        %v2127 = vld [vmem:[%s757 + $0x61] sm:$0xff]
        %v2128 = vld [vmem:[%s757 + $0x71] sm:$0xff]
        %v2130 = vsel %vm190, %v2121, 0
        %v2133 = vsel %vm190, %v2122, 0
        %v2136 = vsel %vm190, %v2123, 0
        %v2139 = vsel %vm190, %v2124, 0
        %v2142 = vsel %vm190, %v2125, 0
        %v2145 = vsel %vm190, %v2126, 0
        %v2148 = vsel %vm190, %v2127, 0
        %v2151 = vsel %vm190, %v2128, 0
        %2153 = vmatprep.subr.mxu0 0.0
        %2154 = vmatpush1.msra.mxu0 0.0
        %2155 = vmatprep.subr.mxu0 0.0
        %2156 = vmatpush1.msra.mxu0 0.0
        %2157 = vmatprep.subr.mxu0 0.0
        %2158 = vmatpush1.msra.mxu0 0.0
        %2159 = vmatprep.subr.mxu0 0.0
        %2160 = vmatpush1.msra.mxu0 0.0
        %2161 = vmatprep.subr.mxu0 0.0
        %2162 = vmatpush1.msra.mxu0 0.0
        %2163 = vmatprep.subr.mxu0 0.0
        %2164 = vmatpush1.msra.mxu0 0.0
        %2165 = vmatprep.subr.mxu0 0.0
        %2166 = vmatpush1.msra.mxu0 0.0
        %2167 = vmatprep.subr.mxu0 0.0
        %2168 = vmatpush1.msra.mxu0 0.0
        %2169 = vmatprep.subr.mxu0 0.0
        %2170 = vmatpush1.msra.mxu0 0.0
        %2171 = vmatprep.subr.mxu0 0.0
        %2172 = vmatpush1.msra.mxu0 0.0
        %2173 = vmatprep.subr.mxu0 0.0
        %2174 = vmatpush1.msra.mxu0 0.0
        %2175 = vmatprep.subr.mxu0 0.0
        %2176 = vmatpush1.msra.mxu0 0.0
        %2177 = vmatprep.subr.mxu0 0.0
        %2178 = vmatpush1.msra.mxu0 0.0
        %2179 = vmatprep.subr.mxu0 0.0
        %2180 = vmatpush1.msra.mxu0 0.0
        %2181 = vmatprep.subr.mxu0 0.0
        %2182 = vmatpush1.msra.mxu0 0.0
        %2183 = vmatprep.subr.mxu0 0.0
        %2184 = vmatpush1.msra.mxu0 %v943
        %2185 = vmatprep.subr.mxu0 0.0
        %2186 = vmatpush2.msra.mxu0 0.0
        %2187 = vmatprep.subr.mxu0 0.0
        %2188 = vmatpush2.msra.mxu0 0.0
        %2189 = vmatprep.subr.mxu0 0.0
        %2190 = vmatpush2.msra.mxu0 0.0
        %2191 = vmatprep.subr.mxu0 0.0
        %2192 = vmatpush2.msra.mxu0 0.0
        %2193 = vmatprep.subr.mxu0 0.0
        %2194 = vmatpush2.msra.mxu0 0.0
        %2195 = vmatprep.subr.mxu0 0.0
        %2196 = vmatpush2.msra.mxu0 0.0
        %2197 = vmatprep.subr.mxu0 0.0
        %2198 = vmatpush2.msra.mxu0 0.0
        %2199 = vmatprep.subr.mxu0 0.0
        %2200 = vmatpush2.msra.mxu0 0.0
        %2201 = vmatprep.subr.mxu0 0.0
        %2202 = vmatpush2.msra.mxu0 0.0
        %2203 = vmatprep.subr.mxu0 0.0
        %2204 = vmatpush2.msra.mxu0 0.0
        %2205 = vmatprep.subr.mxu0 0.0
        %2206 = vmatpush2.msra.mxu0 0.0
        %2207 = vmatprep.subr.mxu0 0.0
        %2208 = vmatpush2.msra.mxu0 0.0
        %2209 = vmatprep.subr.mxu0 0.0
        %2210 = vmatpush2.msra.mxu0 0.0
        %2211 = vmatprep.subr.mxu0 0.0
        %2212 = vmatpush2.msra.mxu0 0.0
        %2213 = vmatprep.subr.mxu0 0.0
        %2214 = vmatpush2.msra.mxu0 0.0
        %2215 = vmatprep.subr.mxu0 0.0
        %2216 = vmatpush2.msra.mxu0 0.0
        %2217 = vmatprep.mubr.f32.mxu0 0.0
        %2218 = vmatmul.mubr.f32.gmra.mxu0 %v2130
        %v2219 = vpop.f32.mrf.mxu0
        %v2220 = vadd.f32 0.0, %v2219
        %v2221 = vpop.f32.mrf.mxu0
        %2222 = vmatprep.mubr.f32.mxu0 0.0
        %2223 = vmatmul.mubr.f32.gmra.mxu0 %v2133
        %v2224 = vpop.f32.mrf.mxu0
        %v2225 = vadd.f32 0.0, %v2224
        %v2226 = vpop.f32.mrf.mxu0
        %2227 = vmatprep.mubr.f32.mxu0 0.0
        %2228 = vmatmul.mubr.f32.gmra.mxu0 %v2136
        %v2229 = vpop.f32.mrf.mxu0
        %v2230 = vadd.f32 0.0, %v2229
        %v2231 = vpop.f32.mrf.mxu0
        %2232 = vmatprep.mubr.f32.mxu0 0.0
        %2233 = vmatmul.mubr.f32.gmra.mxu0 %v2139
        %v2234 = vpop.f32.mrf.mxu0
        %v2235 = vadd.f32 0.0, %v2234
        %v2236 = vpop.f32.mrf.mxu0
        %2237 = vmatprep.mubr.f32.mxu0 0.0
        %2238 = vmatmul.mubr.f32.gmra.mxu0 %v2142
        %v2239 = vpop.f32.mrf.mxu0
        %v2240 = vadd.f32 0.0, %v2239
        %v2241 = vpop.f32.mrf.mxu0
        %2242 = vmatprep.mubr.f32.mxu0 0.0
        %2243 = vmatmul.mubr.f32.gmra.mxu0 %v2145
        %v2244 = vpop.f32.mrf.mxu0
        %v2245 = vadd.f32 0.0, %v2244
        %v2246 = vpop.f32.mrf.mxu0
        %2247 = vmatprep.mubr.f32.mxu0 0.0
        %2248 = vmatmul.mubr.f32.gmra.mxu0 %v2148
        %v2249 = vpop.f32.mrf.mxu0
        %v2250 = vadd.f32 0.0, %v2249
        %v2251 = vpop.f32.mrf.mxu0
        %2252 = vmatprep.mubr.f32.mxu0 0.0
        %2253 = vmatmul.mubr.f32.gmra.mxu0 %v2151
        %v2254 = vpop.f32.mrf.mxu0
        %v2255 = vadd.f32 0.0, %v2254
        %v2256 = vpop.f32.mrf.mxu0
        %2257 = vdwg.mxu0
        %v2258 = vadd.f32 %v2113, %v2220
        %v2259 = vadd.f32 %v2114, %v2225
        %v2260 = vadd.f32 %v2115, %v2230
        %v2261 = vadd.f32 %v2116, %v2235
        %v2262 = vadd.f32 %v2117, %v2240
        %v2263 = vadd.f32 %v2118, %v2245
        %v2264 = vadd.f32 %v2119, %v2250
        %v2265 = vadd.f32 %v2120, %v2255
        %2266 = vmatprep.subr.mxu0 0.0
        %2267 = vmatpush1.msra.mxu0 0.0
        %2268 = vmatprep.subr.mxu0 0.0
        %2269 = vmatpush1.msra.mxu0 0.0
        %2270 = vmatprep.subr.mxu0 0.0
        %2271 = vmatpush1.msra.mxu0 0.0
        %2272 = vmatprep.subr.mxu0 0.0
        %2273 = vmatpush1.msra.mxu0 0.0
        %2274 = vmatprep.subr.mxu0 0.0
        %2275 = vmatpush1.msra.mxu0 0.0
        %2276 = vmatprep.subr.mxu0 0.0
        %2277 = vmatpush1.msra.mxu0 0.0
        %2278 = vmatprep.subr.mxu0 0.0
        %2279 = vmatpush1.msra.mxu0 0.0
        %2280 = vmatprep.subr.mxu0 0.0
        %2281 = vmatpush1.msra.mxu0 0.0
        %2282 = vmatprep.subr.mxu0 0.0
        %2283 = vmatpush1.msra.mxu0 0.0
        %2284 = vmatprep.subr.mxu0 0.0
        %2285 = vmatpush1.msra.mxu0 0.0
        %2286 = vmatprep.subr.mxu0 0.0
        %2287 = vmatpush1.msra.mxu0 0.0
        %2288 = vmatprep.subr.mxu0 0.0
        %2289 = vmatpush1.msra.mxu0 0.0
        %2290 = vmatprep.subr.mxu0 0.0
        %2291 = vmatpush1.msra.mxu0 0.0
        %2292 = vmatprep.subr.mxu0 0.0
        %2293 = vmatpush1.msra.mxu0 0.0
        %2294 = vmatprep.subr.mxu0 0.0
        %2295 = vmatpush1.msra.mxu0 0.0
        %2296 = vmatprep.subr.mxu0 0.0
        %2297 = vmatpush1.msra.mxu0 %v1094
        %2298 = vmatprep.subr.mxu0 0.0
        %2299 = vmatpush2.msra.mxu0 0.0
        %2300 = vmatprep.subr.mxu0 0.0
        %2301 = vmatpush2.msra.mxu0 0.0
        %2302 = vmatprep.subr.mxu0 0.0
        %2303 = vmatpush2.msra.mxu0 0.0
        %2304 = vmatprep.subr.mxu0 0.0
        %2305 = vmatpush2.msra.mxu0 0.0
        %2306 = vmatprep.subr.mxu0 0.0
        %2307 = vmatpush2.msra.mxu0 0.0
        %2308 = vmatprep.subr.mxu0 0.0
        %2309 = vmatpush2.msra.mxu0 0.0
        %2310 = vmatprep.subr.mxu0 0.0
        %2311 = vmatpush2.msra.mxu0 0.0
        %2312 = vmatprep.subr.mxu0 0.0
        %2313 = vmatpush2.msra.mxu0 0.0
        %2314 = vmatprep.subr.mxu0 0.0
        %2315 = vmatpush2.msra.mxu0 0.0
        %2316 = vmatprep.subr.mxu0 0.0
        %2317 = vmatpush2.msra.mxu0 0.0
        %2318 = vmatprep.subr.mxu0 0.0
        %2319 = vmatpush2.msra.mxu0 0.0
        %2320 = vmatprep.subr.mxu0 0.0
        %2321 = vmatpush2.msra.mxu0 0.0
        %2322 = vmatprep.subr.mxu0 0.0
        %2323 = vmatpush2.msra.mxu0 0.0
        %2324 = vmatprep.subr.mxu0 0.0
        %2325 = vmatpush2.msra.mxu0 0.0
        %2326 = vmatprep.subr.mxu0 0.0
        %2327 = vmatpush2.msra.mxu0 0.0
        %2328 = vmatprep.subr.mxu0 0.0
        %2329 = vmatpush2.msra.mxu0 0.0
        %2330 = vmatprep.mubr.f32.mxu0 0.0
        %2331 = vmatmul.mubr.f32.gmra.mxu0 %v1221
        %v2332 = vpop.f32.mrf.mxu0
        %v2333 = vadd.f32 0.0, %v2332
        %v2334 = vpop.f32.mrf.mxu0
        %2335 = vmatprep.mubr.f32.mxu0 0.0
        %2336 = vmatmul.mubr.f32.gmra.mxu0 %v1224
        %v2337 = vpop.f32.mrf.mxu0
        %v2338 = vadd.f32 0.0, %v2337
        %v2339 = vpop.f32.mrf.mxu0
        %2340 = vmatprep.mubr.f32.mxu0 0.0
        %2341 = vmatmul.mubr.f32.gmra.mxu0 %v1227
        %v2342 = vpop.f32.mrf.mxu0
        %v2343 = vadd.f32 0.0, %v2342
        %v2344 = vpop.f32.mrf.mxu0
        %2345 = vmatprep.mubr.f32.mxu0 0.0
        %2346 = vmatmul.mubr.f32.gmra.mxu0 %v1230
        %v2347 = vpop.f32.mrf.mxu0
        %v2348 = vadd.f32 0.0, %v2347
        %v2349 = vpop.f32.mrf.mxu0
        %2350 = vmatprep.mubr.f32.mxu0 0.0
        %2351 = vmatmul.mubr.f32.gmra.mxu0 %v1233
        %v2352 = vpop.f32.mrf.mxu0
        %v2353 = vadd.f32 0.0, %v2352
        %v2354 = vpop.f32.mrf.mxu0
        %2355 = vmatprep.mubr.f32.mxu0 0.0
        %2356 = vmatmul.mubr.f32.gmra.mxu0 %v1236
        %v2357 = vpop.f32.mrf.mxu0
        %v2358 = vadd.f32 0.0, %v2357
        %v2359 = vpop.f32.mrf.mxu0
        %2360 = vmatprep.mubr.f32.mxu0 0.0
        %2361 = vmatmul.mubr.f32.gmra.mxu0 %v1239
        %v2362 = vpop.f32.mrf.mxu0
        %v2363 = vadd.f32 0.0, %v2362
        %v2364 = vpop.f32.mrf.mxu0
        %2365 = vmatprep.mubr.f32.mxu0 0.0
        %2366 = vmatmul.mubr.f32.gmra.mxu0 %v1242
        %v2367 = vpop.f32.mrf.mxu0
        %v2368 = vadd.f32 0.0, %v2367
        %v2369 = vpop.f32.mrf.mxu0
        %2370 = vdwg.mxu0
        %v2371 = vadd.f32 %v2258, %v2333
        %v2372 = vadd.f32 %v2259, %v2338
        %v2373 = vadd.f32 %v2260, %v2343
        %v2374 = vadd.f32 %v2261, %v2348
        %v2375 = vadd.f32 %v2262, %v2353
        %v2376 = vadd.f32 %v2263, %v2358
        %v2377 = vadd.f32 %v2264, %v2363
        %v2378 = vadd.f32 %v2265, %v2368
        %2379 = vmatprep.subr.mxu0 0.0
        %2380 = vmatpush1.msra.mxu0 0.0
        %2381 = vmatprep.subr.mxu0 0.0
        %2382 = vmatpush1.msra.mxu0 0.0
        %2383 = vmatprep.subr.mxu0 0.0
        %2384 = vmatpush1.msra.mxu0 0.0
        %2385 = vmatprep.subr.mxu0 0.0
        %2386 = vmatpush1.msra.mxu0 0.0
        %2387 = vmatprep.subr.mxu0 0.0
        %2388 = vmatpush1.msra.mxu0 0.0
        %2389 = vmatprep.subr.mxu0 0.0
        %2390 = vmatpush1.msra.mxu0 0.0
        %2391 = vmatprep.subr.mxu0 0.0
        %2392 = vmatpush1.msra.mxu0 0.0
        %2393 = vmatprep.subr.mxu0 0.0
        %2394 = vmatpush1.msra.mxu0 0.0
        %2395 = vmatprep.subr.mxu0 0.0
        %2396 = vmatpush1.msra.mxu0 0.0
        %2397 = vmatprep.subr.mxu0 0.0
        %2398 = vmatpush1.msra.mxu0 0.0
        %2399 = vmatprep.subr.mxu0 0.0
        %2400 = vmatpush1.msra.mxu0 0.0
        %2401 = vmatprep.subr.mxu0 0.0
        %2402 = vmatpush1.msra.mxu0 0.0
        %2403 = vmatprep.subr.mxu0 0.0
        %2404 = vmatpush1.msra.mxu0 0.0
        %2405 = vmatprep.subr.mxu0 0.0
        %2406 = vmatpush1.msra.mxu0 0.0
        %2407 = vmatprep.subr.mxu0 0.0
        %2408 = vmatpush1.msra.mxu0 0.0
        %2409 = vmatprep.subr.mxu0 0.0
        %2410 = vmatpush1.msra.mxu0 %v1245
        %2411 = vmatprep.subr.mxu0 0.0
        %2412 = vmatpush2.msra.mxu0 0.0
        %2413 = vmatprep.subr.mxu0 0.0
        %2414 = vmatpush2.msra.mxu0 0.0
        %2415 = vmatprep.subr.mxu0 0.0
        %2416 = vmatpush2.msra.mxu0 0.0
        %2417 = vmatprep.subr.mxu0 0.0
        %2418 = vmatpush2.msra.mxu0 0.0
        %2419 = vmatprep.subr.mxu0 0.0
        %2420 = vmatpush2.msra.mxu0 0.0
        %2421 = vmatprep.subr.mxu0 0.0
        %2422 = vmatpush2.msra.mxu0 0.0
        %2423 = vmatprep.subr.mxu0 0.0
        %2424 = vmatpush2.msra.mxu0 0.0
        %2425 = vmatprep.subr.mxu0 0.0
        %2426 = vmatpush2.msra.mxu0 0.0
        %2427 = vmatprep.subr.mxu0 0.0
        %2428 = vmatpush2.msra.mxu0 0.0
        %2429 = vmatprep.subr.mxu0 0.0
        %2430 = vmatpush2.msra.mxu0 0.0
        %2431 = vmatprep.subr.mxu0 0.0
        %2432 = vmatpush2.msra.mxu0 0.0
        %2433 = vmatprep.subr.mxu0 0.0
        %2434 = vmatpush2.msra.mxu0 0.0
        %2435 = vmatprep.subr.mxu0 0.0
        %2436 = vmatpush2.msra.mxu0 0.0
        %2437 = vmatprep.subr.mxu0 0.0
        %2438 = vmatpush2.msra.mxu0 0.0
        %2439 = vmatprep.subr.mxu0 0.0
        %2440 = vmatpush2.msra.mxu0 0.0
        %2441 = vmatprep.subr.mxu0 0.0
        %2442 = vmatpush2.msra.mxu0 0.0
        %2443 = vmatprep.mubr.f32.mxu0 0.0
        %2444 = vmatmul.mubr.f32.gmra.mxu0 %v1371
        %v2445 = vpop.f32.mrf.mxu0
        %v2446 = vadd.f32 0.0, %v2445
        %v2447 = vpop.f32.mrf.mxu0
        %2448 = vmatprep.mubr.f32.mxu0 0.0
        %2449 = vmatmul.mubr.f32.gmra.mxu0 %v1374
        %v2450 = vpop.f32.mrf.mxu0
        %v2451 = vadd.f32 0.0, %v2450
        %v2452 = vpop.f32.mrf.mxu0
        %2453 = vmatprep.mubr.f32.mxu0 0.0
        %2454 = vmatmul.mubr.f32.gmra.mxu0 %v1377
        %v2455 = vpop.f32.mrf.mxu0
        %v2456 = vadd.f32 0.0, %v2455
        %v2457 = vpop.f32.mrf.mxu0
        %2458 = vmatprep.mubr.f32.mxu0 0.0
        %2459 = vmatmul.mubr.f32.gmra.mxu0 %v1380
        %v2460 = vpop.f32.mrf.mxu0
        %v2461 = vadd.f32 0.0, %v2460
        %v2462 = vpop.f32.mrf.mxu0
        %2463 = vmatprep.mubr.f32.mxu0 0.0
        %2464 = vmatmul.mubr.f32.gmra.mxu0 %v1383
        %v2465 = vpop.f32.mrf.mxu0
        %v2466 = vadd.f32 0.0, %v2465
        %v2467 = vpop.f32.mrf.mxu0
        %2468 = vmatprep.mubr.f32.mxu0 0.0
        %2469 = vmatmul.mubr.f32.gmra.mxu0 %v1386
        %v2470 = vpop.f32.mrf.mxu0
        %v2471 = vadd.f32 0.0, %v2470
        %v2472 = vpop.f32.mrf.mxu0
        %2473 = vmatprep.mubr.f32.mxu0 0.0
        %2474 = vmatmul.mubr.f32.gmra.mxu0 %v1389
        %v2475 = vpop.f32.mrf.mxu0
        %v2476 = vadd.f32 0.0, %v2475
        %v2477 = vpop.f32.mrf.mxu0
        %2478 = vmatprep.mubr.f32.mxu0 0.0
        %2479 = vmatmul.mubr.f32.gmra.mxu0 %v1392
        %v2480 = vpop.f32.mrf.mxu0
        %v2481 = vadd.f32 0.0, %v2480
        %v2482 = vpop.f32.mrf.mxu0
        %2483 = vdwg.mxu0
        %v2484 = vadd.f32 %v2371, %v2446
        %v2485 = vadd.f32 %v2372, %v2451
        %v2486 = vadd.f32 %v2373, %v2456
        %v2487 = vadd.f32 %v2374, %v2461
        %v2488 = vadd.f32 %v2375, %v2466
        %v2489 = vadd.f32 %v2376, %v2471
        %v2490 = vadd.f32 %v2377, %v2476
        %v2491 = vadd.f32 %v2378, %v2481
        %v2492 = vld [vmem:[%s1209 + $0x1] sm:$0xff]
        %v2493 = vld [vmem:[%s1209 + $0x11] sm:$0xff]
        %v2494 = vld [vmem:[%s1209 + $0x21] sm:$0xff]
        %v2495 = vld [vmem:[%s1209 + $0x31] sm:$0xff]
        %v2496 = vld [vmem:[%s1209 + $0x41] sm:$0xff]
        %v2497 = vld [vmem:[%s1209 + $0x51] sm:$0xff]
        %v2498 = vld [vmem:[%s1209 + $0x61] sm:$0xff]
        %v2499 = vld [vmem:[%s1209 + $0x71] sm:$0xff]
        %v2501 = vsel %vm190, %v2492, 0
        %v2504 = vsel %vm190, %v2493, 0
        %v2507 = vsel %vm190, %v2494, 0
        %v2510 = vsel %vm190, %v2495, 0
        %v2513 = vsel %vm190, %v2496, 0
        %v2516 = vsel %vm190, %v2497, 0
        %v2519 = vsel %vm190, %v2498, 0
        %v2522 = vsel %vm190, %v2499, 0
        %2524 = vmatprep.subr.mxu0 0.0
        %2525 = vmatpush1.msra.mxu0 0.0
        %2526 = vmatprep.subr.mxu0 0.0
        %2527 = vmatpush1.msra.mxu0 0.0
        %2528 = vmatprep.subr.mxu0 0.0
        %2529 = vmatpush1.msra.mxu0 0.0
        %2530 = vmatprep.subr.mxu0 0.0
        %2531 = vmatpush1.msra.mxu0 0.0
        %2532 = vmatprep.subr.mxu0 0.0
        %2533 = vmatpush1.msra.mxu0 0.0
        %2534 = vmatprep.subr.mxu0 0.0
        %2535 = vmatpush1.msra.mxu0 0.0
        %2536 = vmatprep.subr.mxu0 0.0
        %2537 = vmatpush1.msra.mxu0 0.0
        %2538 = vmatprep.subr.mxu0 0.0
        %2539 = vmatpush1.msra.mxu0 0.0
        %2540 = vmatprep.subr.mxu0 0.0
        %2541 = vmatpush1.msra.mxu0 0.0
        %2542 = vmatprep.subr.mxu0 0.0
        %2543 = vmatpush1.msra.mxu0 0.0
        %2544 = vmatprep.subr.mxu0 0.0
        %2545 = vmatpush1.msra.mxu0 0.0
        %2546 = vmatprep.subr.mxu0 0.0
        %2547 = vmatpush1.msra.mxu0 0.0
        %2548 = vmatprep.subr.mxu0 0.0
        %2549 = vmatpush1.msra.mxu0 0.0
        %2550 = vmatprep.subr.mxu0 0.0
        %2551 = vmatpush1.msra.mxu0 0.0
        %2552 = vmatprep.subr.mxu0 0.0
        %2553 = vmatpush1.msra.mxu0 0.0
        %2554 = vmatprep.subr.mxu0 0.0
        %2555 = vmatpush1.msra.mxu0 %v1395
        %2556 = vmatprep.subr.mxu0 0.0
        %2557 = vmatpush2.msra.mxu0 0.0
        %2558 = vmatprep.subr.mxu0 0.0
        %2559 = vmatpush2.msra.mxu0 0.0
        %2560 = vmatprep.subr.mxu0 0.0
        %2561 = vmatpush2.msra.mxu0 0.0
        %2562 = vmatprep.subr.mxu0 0.0
        %2563 = vmatpush2.msra.mxu0 0.0
        %2564 = vmatprep.subr.mxu0 0.0
        %2565 = vmatpush2.msra.mxu0 0.0
        %2566 = vmatprep.subr.mxu0 0.0
        %2567 = vmatpush2.msra.mxu0 0.0
        %2568 = vmatprep.subr.mxu0 0.0
        %2569 = vmatpush2.msra.mxu0 0.0
        %2570 = vmatprep.subr.mxu0 0.0
        %2571 = vmatpush2.msra.mxu0 0.0
        %2572 = vmatprep.subr.mxu0 0.0
        %2573 = vmatpush2.msra.mxu0 0.0
        %2574 = vmatprep.subr.mxu0 0.0
        %2575 = vmatpush2.msra.mxu0 0.0
        %2576 = vmatprep.subr.mxu0 0.0
        %2577 = vmatpush2.msra.mxu0 0.0
        %2578 = vmatprep.subr.mxu0 0.0
        %2579 = vmatpush2.msra.mxu0 0.0
        %2580 = vmatprep.subr.mxu0 0.0
        %2581 = vmatpush2.msra.mxu0 0.0
        %2582 = vmatprep.subr.mxu0 0.0
        %2583 = vmatpush2.msra.mxu0 0.0
        %2584 = vmatprep.subr.mxu0 0.0
        %2585 = vmatpush2.msra.mxu0 0.0
        %2586 = vmatprep.subr.mxu0 0.0
        %2587 = vmatpush2.msra.mxu0 0.0
        %2588 = vmatprep.mubr.f32.mxu0 0.0
        %2589 = vmatmul.mubr.f32.gmra.mxu0 %v2501
        %v2590 = vpop.f32.mrf.mxu0
        %v2591 = vadd.f32 0.0, %v2590
        %v2592 = vpop.f32.mrf.mxu0
        %2593 = vmatprep.mubr.f32.mxu0 0.0
        %2594 = vmatmul.mubr.f32.gmra.mxu0 %v2504
        %v2595 = vpop.f32.mrf.mxu0
        %v2596 = vadd.f32 0.0, %v2595
        %v2597 = vpop.f32.mrf.mxu0
        %2598 = vmatprep.mubr.f32.mxu0 0.0
        %2599 = vmatmul.mubr.f32.gmra.mxu0 %v2507
        %v2600 = vpop.f32.mrf.mxu0
        %v2601 = vadd.f32 0.0, %v2600
        %v2602 = vpop.f32.mrf.mxu0
        %2603 = vmatprep.mubr.f32.mxu0 0.0
        %2604 = vmatmul.mubr.f32.gmra.mxu0 %v2510
        %v2605 = vpop.f32.mrf.mxu0
        %v2606 = vadd.f32 0.0, %v2605
        %v2607 = vpop.f32.mrf.mxu0
        %2608 = vmatprep.mubr.f32.mxu0 0.0
        %2609 = vmatmul.mubr.f32.gmra.mxu0 %v2513
        %v2610 = vpop.f32.mrf.mxu0
        %v2611 = vadd.f32 0.0, %v2610
        %v2612 = vpop.f32.mrf.mxu0
        %2613 = vmatprep.mubr.f32.mxu0 0.0
        %2614 = vmatmul.mubr.f32.gmra.mxu0 %v2516
        %v2615 = vpop.f32.mrf.mxu0
        %v2616 = vadd.f32 0.0, %v2615
        %v2617 = vpop.f32.mrf.mxu0
        %2618 = vmatprep.mubr.f32.mxu0 0.0
        %2619 = vmatmul.mubr.f32.gmra.mxu0 %v2519
        %v2620 = vpop.f32.mrf.mxu0
        %v2621 = vadd.f32 0.0, %v2620
        %v2622 = vpop.f32.mrf.mxu0
        %2623 = vmatprep.mubr.f32.mxu0 0.0
        %2624 = vmatmul.mubr.f32.gmra.mxu0 %v2522
        %v2625 = vpop.f32.mrf.mxu0
        %v2626 = vadd.f32 0.0, %v2625
        %v2627 = vpop.f32.mrf.mxu0
        %2628 = vdwg.mxu0
        %v2629 = vadd.f32 %v2484, %v2591
        %v2630 = vadd.f32 %v2485, %v2596
        %v2631 = vadd.f32 %v2486, %v2601
        %v2632 = vadd.f32 %v2487, %v2606
        %v2633 = vadd.f32 %v2488, %v2611
        %v2634 = vadd.f32 %v2489, %v2616
        %v2635 = vadd.f32 %v2490, %v2621
        %v2636 = vadd.f32 %v2491, %v2626
        %v2637 = vadd.f32 %v2629, %v1514
        %v2638 = vadd.f32 %v2630, %v1514
        %v2639 = vadd.f32 %v2631, %v1514
        %v2640 = vadd.f32 %v2632, %v1514
        %v2641 = vadd.f32 %v2633, %v1514
        %v2642 = vadd.f32 %v2634, %v1514
        %v2643 = vadd.f32 %v2635, %v1514
        %v2644 = vadd.f32 %v2636, %v1514
        %v2645 = vmax.f32 %v2637, 0.0
        %v2646 = vmax.f32 %v2638, 0.0
        %v2647 = vmax.f32 %v2639, 0.0
        %v2648 = vmax.f32 %v2640, 0.0
        %v2649 = vmax.f32 %v2641, 0.0
        %v2650 = vmax.f32 %v2642, 0.0
        %v2651 = vmax.f32 %v2643, 0.0
        %v2652 = vmax.f32 %v2644, 0.0
        %v2653 = vadd.f32 %v1532, %v2645
        %v2654 = vadd.f32 %v1533, %v2646
        %v2655 = vadd.f32 %v1534, %v2647
        %v2656 = vadd.f32 %v1535, %v2648
        %v2657 = vadd.f32 %v1536, %v2649
        %v2658 = vadd.f32 %v1537, %v2650
        %v2659 = vadd.f32 %v1538, %v2651
        %v2660 = vadd.f32 %v1539, %v2652
        %2661 = vmatprep.subr.mxu0 0.0
        %2662 = vmatpush1.msra.mxu0 0.0
        %2663 = vmatprep.subr.mxu0 0.0
        %2664 = vmatpush1.msra.mxu0 0.0
        %2665 = vmatprep.subr.mxu0 0.0
        %2666 = vmatpush1.msra.mxu0 0.0
        %2667 = vmatprep.subr.mxu0 0.0
        %2668 = vmatpush1.msra.mxu0 0.0
        %2669 = vmatprep.subr.mxu0 0.0
        %2670 = vmatpush1.msra.mxu0 0.0
        %2671 = vmatprep.subr.mxu0 0.0
        %2672 = vmatpush1.msra.mxu0 0.0
        %2673 = vmatprep.subr.mxu0 0.0
        %2674 = vmatpush1.msra.mxu0 0.0
        %2675 = vmatprep.subr.mxu0 0.0
        %2676 = vmatpush1.msra.mxu0 0.0
        %2677 = vmatprep.subr.mxu0 0.0
        %2678 = vmatpush1.msra.mxu0 0.0
        %2679 = vmatprep.subr.mxu0 0.0
        %2680 = vmatpush1.msra.mxu0 0.0
        %2681 = vmatprep.subr.mxu0 0.0
        %2682 = vmatpush1.msra.mxu0 0.0
        %2683 = vmatprep.subr.mxu0 0.0
        %2684 = vmatpush1.msra.mxu0 0.0
        %2685 = vmatprep.subr.mxu0 0.0
        %2686 = vmatpush1.msra.mxu0 0.0
        %2687 = vmatprep.subr.mxu0 0.0
        %2688 = vmatpush1.msra.mxu0 0.0
        %2689 = vmatprep.subr.mxu0 0.0
        %2690 = vmatpush1.msra.mxu0 0.0
        %2691 = vmatprep.subr.mxu0 0.0
        %2692 = vmatpush1.msra.mxu0 %v217
        %2693 = vmatprep.subr.mxu0 0.0
        %2694 = vmatpush2.msra.mxu0 0.0
        %2695 = vmatprep.subr.mxu0 0.0
        %2696 = vmatpush2.msra.mxu0 0.0
        %2697 = vmatprep.subr.mxu0 0.0
        %2698 = vmatpush2.msra.mxu0 0.0
        %2699 = vmatprep.subr.mxu0 0.0
        %2700 = vmatpush2.msra.mxu0 0.0
        %2701 = vmatprep.subr.mxu0 0.0
        %2702 = vmatpush2.msra.mxu0 0.0
        %2703 = vmatprep.subr.mxu0 0.0
        %2704 = vmatpush2.msra.mxu0 0.0
        %2705 = vmatprep.subr.mxu0 0.0
        %2706 = vmatpush2.msra.mxu0 0.0
        %2707 = vmatprep.subr.mxu0 0.0
        %2708 = vmatpush2.msra.mxu0 0.0
        %2709 = vmatprep.subr.mxu0 0.0
        %2710 = vmatpush2.msra.mxu0 0.0
        %2711 = vmatprep.subr.mxu0 0.0
        %2712 = vmatpush2.msra.mxu0 0.0
        %2713 = vmatprep.subr.mxu0 0.0
        %2714 = vmatpush2.msra.mxu0 0.0
        %2715 = vmatprep.subr.mxu0 0.0
        %2716 = vmatpush2.msra.mxu0 0.0
        %2717 = vmatprep.subr.mxu0 0.0
        %2718 = vmatpush2.msra.mxu0 0.0
        %2719 = vmatprep.subr.mxu0 0.0
        %2720 = vmatpush2.msra.mxu0 0.0
        %2721 = vmatprep.subr.mxu0 0.0
        %2722 = vmatpush2.msra.mxu0 0.0
        %2723 = vmatprep.subr.mxu0 0.0
        %2724 = vmatpush2.msra.mxu0 0.0
        %2725 = vmatprep.mubr.f32.mxu0 0.0
        %2726 = vmatmul.mubr.f32.gmra.mxu0 %v769
        %v2727 = vpop.f32.mrf.mxu0
        %v2728 = vadd.f32 0.0, %v2727
        %v2729 = vpop.f32.mrf.mxu0
        %2730 = vmatprep.mubr.f32.mxu0 0.0
        %2731 = vmatmul.mubr.f32.gmra.mxu0 %v772
        %v2732 = vpop.f32.mrf.mxu0
        %v2733 = vadd.f32 0.0, %v2732
        %v2734 = vpop.f32.mrf.mxu0
        %2735 = vmatprep.mubr.f32.mxu0 0.0
        %2736 = vmatmul.mubr.f32.gmra.mxu0 %v775
        %v2737 = vpop.f32.mrf.mxu0
        %v2738 = vadd.f32 0.0, %v2737
        %v2739 = vpop.f32.mrf.mxu0
        %2740 = vmatprep.mubr.f32.mxu0 0.0
        %2741 = vmatmul.mubr.f32.gmra.mxu0 %v778
        %v2742 = vpop.f32.mrf.mxu0
        %v2743 = vadd.f32 0.0, %v2742
        %v2744 = vpop.f32.mrf.mxu0
        %2745 = vmatprep.mubr.f32.mxu0 0.0
        %2746 = vmatmul.mubr.f32.gmra.mxu0 %v781
        %v2747 = vpop.f32.mrf.mxu0
        %v2748 = vadd.f32 0.0, %v2747
        %v2749 = vpop.f32.mrf.mxu0
        %2750 = vmatprep.mubr.f32.mxu0 0.0
        %2751 = vmatmul.mubr.f32.gmra.mxu0 %v784
        %v2752 = vpop.f32.mrf.mxu0
        %v2753 = vadd.f32 0.0, %v2752
        %v2754 = vpop.f32.mrf.mxu0
        %2755 = vmatprep.mubr.f32.mxu0 0.0
        %2756 = vmatmul.mubr.f32.gmra.mxu0 %v787
        %v2757 = vpop.f32.mrf.mxu0
        %v2758 = vadd.f32 0.0, %v2757
        %v2759 = vpop.f32.mrf.mxu0
        %2760 = vmatprep.mubr.f32.mxu0 0.0
        %2761 = vmatmul.mubr.f32.gmra.mxu0 %v790
        %v2762 = vpop.f32.mrf.mxu0
        %v2763 = vadd.f32 0.0, %v2762
        %v2764 = vpop.f32.mrf.mxu0
        %2765 = vdwg.mxu0
        %2766 = vmatprep.subr.mxu0 0.0
        %2767 = vmatpush1.msra.mxu0 0.0
        %2768 = vmatprep.subr.mxu0 0.0
        %2769 = vmatpush1.msra.mxu0 0.0
        %2770 = vmatprep.subr.mxu0 0.0
        %2771 = vmatpush1.msra.mxu0 0.0
        %2772 = vmatprep.subr.mxu0 0.0
        %2773 = vmatpush1.msra.mxu0 0.0
        %2774 = vmatprep.subr.mxu0 0.0
        %2775 = vmatpush1.msra.mxu0 0.0
        %2776 = vmatprep.subr.mxu0 0.0
        %2777 = vmatpush1.msra.mxu0 0.0
        %2778 = vmatprep.subr.mxu0 0.0
        %2779 = vmatpush1.msra.mxu0 0.0
        %2780 = vmatprep.subr.mxu0 0.0
        %2781 = vmatpush1.msra.mxu0 0.0
        %2782 = vmatprep.subr.mxu0 0.0
        %2783 = vmatpush1.msra.mxu0 0.0
        %2784 = vmatprep.subr.mxu0 0.0
        %2785 = vmatpush1.msra.mxu0 0.0
        %2786 = vmatprep.subr.mxu0 0.0
        %2787 = vmatpush1.msra.mxu0 0.0
        %2788 = vmatprep.subr.mxu0 0.0
        %2789 = vmatpush1.msra.mxu0 0.0
        %2790 = vmatprep.subr.mxu0 0.0
        %2791 = vmatpush1.msra.mxu0 0.0
        %2792 = vmatprep.subr.mxu0 0.0
        %2793 = vmatpush1.msra.mxu0 0.0
        %2794 = vmatprep.subr.mxu0 0.0
        %2795 = vmatpush1.msra.mxu0 0.0
        %2796 = vmatprep.subr.mxu0 0.0
        %2797 = vmatpush1.msra.mxu0 %v349
        %2798 = vmatprep.subr.mxu0 0.0
        %2799 = vmatpush2.msra.mxu0 0.0
        %2800 = vmatprep.subr.mxu0 0.0
        %2801 = vmatpush2.msra.mxu0 0.0
        %2802 = vmatprep.subr.mxu0 0.0
        %2803 = vmatpush2.msra.mxu0 0.0
        %2804 = vmatprep.subr.mxu0 0.0
        %2805 = vmatpush2.msra.mxu0 0.0
        %2806 = vmatprep.subr.mxu0 0.0
        %2807 = vmatpush2.msra.mxu0 0.0
        %2808 = vmatprep.subr.mxu0 0.0
        %2809 = vmatpush2.msra.mxu0 0.0
        %2810 = vmatprep.subr.mxu0 0.0
        %2811 = vmatpush2.msra.mxu0 0.0
        %2812 = vmatprep.subr.mxu0 0.0
        %2813 = vmatpush2.msra.mxu0 0.0
        %2814 = vmatprep.subr.mxu0 0.0
        %2815 = vmatpush2.msra.mxu0 0.0
        %2816 = vmatprep.subr.mxu0 0.0
        %2817 = vmatpush2.msra.mxu0 0.0
        %2818 = vmatprep.subr.mxu0 0.0
        %2819 = vmatpush2.msra.mxu0 0.0
        %2820 = vmatprep.subr.mxu0 0.0
        %2821 = vmatpush2.msra.mxu0 0.0
        %2822 = vmatprep.subr.mxu0 0.0
        %2823 = vmatpush2.msra.mxu0 0.0
        %2824 = vmatprep.subr.mxu0 0.0
        %2825 = vmatpush2.msra.mxu0 0.0
        %2826 = vmatprep.subr.mxu0 0.0
        %2827 = vmatpush2.msra.mxu0 0.0
        %2828 = vmatprep.subr.mxu0 0.0
        %2829 = vmatpush2.msra.mxu0 0.0
        %2830 = vmatprep.mubr.f32.mxu0 0.0
        %2831 = vmatmul.mubr.f32.gmra.mxu0 %v618
        %v2832 = vpop.f32.mrf.mxu0
        %v2833 = vadd.f32 %v2728, %v2832
        %v2834 = vpop.f32.mrf.mxu0
        %2835 = vmatprep.mubr.f32.mxu0 0.0
        %2836 = vmatmul.mubr.f32.gmra.mxu0 %v621
        %v2837 = vpop.f32.mrf.mxu0
        %v2838 = vadd.f32 %v2733, %v2837
        %v2839 = vpop.f32.mrf.mxu0
        %2840 = vmatprep.mubr.f32.mxu0 0.0
        %2841 = vmatmul.mubr.f32.gmra.mxu0 %v624
        %v2842 = vpop.f32.mrf.mxu0
        %v2843 = vadd.f32 %v2738, %v2842
        %v2844 = vpop.f32.mrf.mxu0
        %2845 = vmatprep.mubr.f32.mxu0 0.0
        %2846 = vmatmul.mubr.f32.gmra.mxu0 %v627
        %v2847 = vpop.f32.mrf.mxu0
        %v2848 = vadd.f32 %v2743, %v2847
        %v2849 = vpop.f32.mrf.mxu0
        %2850 = vmatprep.mubr.f32.mxu0 0.0
        %2851 = vmatmul.mubr.f32.gmra.mxu0 %v630
        %v2852 = vpop.f32.mrf.mxu0
        %v2853 = vadd.f32 %v2748, %v2852
        %v2854 = vpop.f32.mrf.mxu0
        %2855 = vmatprep.mubr.f32.mxu0 0.0
        %2856 = vmatmul.mubr.f32.gmra.mxu0 %v633
        %v2857 = vpop.f32.mrf.mxu0
        %v2858 = vadd.f32 %v2753, %v2857
        %v2859 = vpop.f32.mrf.mxu0
        %2860 = vmatprep.mubr.f32.mxu0 0.0
        %2861 = vmatmul.mubr.f32.gmra.mxu0 %v636
        %v2862 = vpop.f32.mrf.mxu0
        %v2863 = vadd.f32 %v2758, %v2862
        %v2864 = vpop.f32.mrf.mxu0
        %2865 = vmatprep.mubr.f32.mxu0 0.0
        %2866 = vmatmul.mubr.f32.gmra.mxu0 %v639
        %v2867 = vpop.f32.mrf.mxu0
        %v2868 = vadd.f32 %v2763, %v2867
        %v2869 = vpop.f32.mrf.mxu0
        %2870 = vdwg.mxu0
        %2871 = vmatprep.subr.mxu0 0.0
        %2872 = vmatpush1.msra.mxu0 0.0
        %2873 = vmatprep.subr.mxu0 0.0
        %2874 = vmatpush1.msra.mxu0 0.0
        %2875 = vmatprep.subr.mxu0 0.0
        %2876 = vmatpush1.msra.mxu0 0.0
        %2877 = vmatprep.subr.mxu0 0.0
        %2878 = vmatpush1.msra.mxu0 0.0
        %2879 = vmatprep.subr.mxu0 0.0
        %2880 = vmatpush1.msra.mxu0 0.0
        %2881 = vmatprep.subr.mxu0 0.0
        %2882 = vmatpush1.msra.mxu0 0.0
        %2883 = vmatprep.subr.mxu0 0.0
        %2884 = vmatpush1.msra.mxu0 0.0
        %2885 = vmatprep.subr.mxu0 0.0
        %2886 = vmatpush1.msra.mxu0 0.0
        %2887 = vmatprep.subr.mxu0 0.0
        %2888 = vmatpush1.msra.mxu0 0.0
        %2889 = vmatprep.subr.mxu0 0.0
        %2890 = vmatpush1.msra.mxu0 0.0
        %2891 = vmatprep.subr.mxu0 0.0
        %2892 = vmatpush1.msra.mxu0 0.0
        %2893 = vmatprep.subr.mxu0 0.0
        %2894 = vmatpush1.msra.mxu0 0.0
        %2895 = vmatprep.subr.mxu0 0.0
        %2896 = vmatpush1.msra.mxu0 0.0
        %2897 = vmatprep.subr.mxu0 0.0
        %2898 = vmatpush1.msra.mxu0 0.0
        %2899 = vmatprep.subr.mxu0 0.0
        %2900 = vmatpush1.msra.mxu0 0.0
        %2901 = vmatprep.subr.mxu0 0.0
        %2902 = vmatpush1.msra.mxu0 %v491
        %2903 = vmatprep.subr.mxu0 0.0
        %2904 = vmatpush2.msra.mxu0 0.0
        %2905 = vmatprep.subr.mxu0 0.0
        %2906 = vmatpush2.msra.mxu0 0.0
        %2907 = vmatprep.subr.mxu0 0.0
        %2908 = vmatpush2.msra.mxu0 0.0
        %2909 = vmatprep.subr.mxu0 0.0
        %2910 = vmatpush2.msra.mxu0 0.0
        %2911 = vmatprep.subr.mxu0 0.0
        %2912 = vmatpush2.msra.mxu0 0.0
        %2913 = vmatprep.subr.mxu0 0.0
        %2914 = vmatpush2.msra.mxu0 0.0
        %2915 = vmatprep.subr.mxu0 0.0
        %2916 = vmatpush2.msra.mxu0 0.0
        %2917 = vmatprep.subr.mxu0 0.0
        %2918 = vmatpush2.msra.mxu0 0.0
        %2919 = vmatprep.subr.mxu0 0.0
        %2920 = vmatpush2.msra.mxu0 0.0
        %2921 = vmatprep.subr.mxu0 0.0
        %2922 = vmatpush2.msra.mxu0 0.0
        %2923 = vmatprep.subr.mxu0 0.0
        %2924 = vmatpush2.msra.mxu0 0.0
        %2925 = vmatprep.subr.mxu0 0.0
        %2926 = vmatpush2.msra.mxu0 0.0
        %2927 = vmatprep.subr.mxu0 0.0
        %2928 = vmatpush2.msra.mxu0 0.0
        %2929 = vmatprep.subr.mxu0 0.0
        %2930 = vmatpush2.msra.mxu0 0.0
        %2931 = vmatprep.subr.mxu0 0.0
        %2932 = vmatpush2.msra.mxu0 0.0
        %2933 = vmatprep.subr.mxu0 0.0
        %2934 = vmatpush2.msra.mxu0 0.0
        %2935 = vmatprep.mubr.f32.mxu0 0.0
        %2936 = vmatmul.mubr.f32.gmra.mxu0 %v919
        %v2937 = vpop.f32.mrf.mxu0
        %v2938 = vadd.f32 0.0, %v2937
        %v2939 = vpop.f32.mrf.mxu0
        %2940 = vmatprep.mubr.f32.mxu0 0.0
        %2941 = vmatmul.mubr.f32.gmra.mxu0 %v922
        %v2942 = vpop.f32.mrf.mxu0
        %v2943 = vadd.f32 0.0, %v2942
        %v2944 = vpop.f32.mrf.mxu0
        %2945 = vmatprep.mubr.f32.mxu0 0.0
        %2946 = vmatmul.mubr.f32.gmra.mxu0 %v925
        %v2947 = vpop.f32.mrf.mxu0
        %v2948 = vadd.f32 0.0, %v2947
        %v2949 = vpop.f32.mrf.mxu0
        %2950 = vmatprep.mubr.f32.mxu0 0.0
        %2951 = vmatmul.mubr.f32.gmra.mxu0 %v928
        %v2952 = vpop.f32.mrf.mxu0
        %v2953 = vadd.f32 0.0, %v2952
        %v2954 = vpop.f32.mrf.mxu0
        %2955 = vmatprep.mubr.f32.mxu0 0.0
        %2956 = vmatmul.mubr.f32.gmra.mxu0 %v931
        %v2957 = vpop.f32.mrf.mxu0
        %v2958 = vadd.f32 0.0, %v2957
        %v2959 = vpop.f32.mrf.mxu0
        %2960 = vmatprep.mubr.f32.mxu0 0.0
        %2961 = vmatmul.mubr.f32.gmra.mxu0 %v934
        %v2962 = vpop.f32.mrf.mxu0
        %v2963 = vadd.f32 0.0, %v2962
        %v2964 = vpop.f32.mrf.mxu0
        %2965 = vmatprep.mubr.f32.mxu0 0.0
        %2966 = vmatmul.mubr.f32.gmra.mxu0 %v937
        %v2967 = vpop.f32.mrf.mxu0
        %v2968 = vadd.f32 0.0, %v2967
        %v2969 = vpop.f32.mrf.mxu0
        %2970 = vmatprep.mubr.f32.mxu0 0.0
        %2971 = vmatmul.mubr.f32.gmra.mxu0 %v940
        %v2972 = vpop.f32.mrf.mxu0
        %v2973 = vadd.f32 0.0, %v2972
        %v2974 = vpop.f32.mrf.mxu0
        %2975 = vdwg.mxu0
        %v2976 = vadd.f32 %v2833, %v2938
        %v2977 = vadd.f32 %v2838, %v2943
        %v2978 = vadd.f32 %v2843, %v2948
        %v2979 = vadd.f32 %v2848, %v2953
        %v2980 = vadd.f32 %v2853, %v2958
        %v2981 = vadd.f32 %v2858, %v2963
        %v2982 = vadd.f32 %v2863, %v2968
        %v2983 = vadd.f32 %v2868, %v2973
        %2984 = vmatprep.subr.mxu0 0.0
        %2985 = vmatpush1.msra.mxu0 0.0
        %2986 = vmatprep.subr.mxu0 0.0
        %2987 = vmatpush1.msra.mxu0 0.0
        %2988 = vmatprep.subr.mxu0 0.0
        %2989 = vmatpush1.msra.mxu0 0.0
        %2990 = vmatprep.subr.mxu0 0.0
        %2991 = vmatpush1.msra.mxu0 0.0
        %2992 = vmatprep.subr.mxu0 0.0
        %2993 = vmatpush1.msra.mxu0 0.0
        %2994 = vmatprep.subr.mxu0 0.0
        %2995 = vmatpush1.msra.mxu0 0.0
        %2996 = vmatprep.subr.mxu0 0.0
        %2997 = vmatpush1.msra.mxu0 0.0
        %2998 = vmatprep.subr.mxu0 0.0
        %2999 = vmatpush1.msra.mxu0 0.0
        %3000 = vmatprep.subr.mxu0 0.0
        %3001 = vmatpush1.msra.mxu0 0.0
        %3002 = vmatprep.subr.mxu0 0.0
        %3003 = vmatpush1.msra.mxu0 0.0
        %3004 = vmatprep.subr.mxu0 0.0
        %3005 = vmatpush1.msra.mxu0 0.0
        %3006 = vmatprep.subr.mxu0 0.0
        %3007 = vmatpush1.msra.mxu0 0.0
        %3008 = vmatprep.subr.mxu0 0.0
        %3009 = vmatpush1.msra.mxu0 0.0
        %3010 = vmatprep.subr.mxu0 0.0
        %3011 = vmatpush1.msra.mxu0 0.0
        %3012 = vmatprep.subr.mxu0 0.0
        %3013 = vmatpush1.msra.mxu0 0.0
        %3014 = vmatprep.subr.mxu0 0.0
        %3015 = vmatpush1.msra.mxu0 %v642
        %3016 = vmatprep.subr.mxu0 0.0
        %3017 = vmatpush2.msra.mxu0 0.0
        %3018 = vmatprep.subr.mxu0 0.0
        %3019 = vmatpush2.msra.mxu0 0.0
        %3020 = vmatprep.subr.mxu0 0.0
        %3021 = vmatpush2.msra.mxu0 0.0
        %3022 = vmatprep.subr.mxu0 0.0
        %3023 = vmatpush2.msra.mxu0 0.0
        %3024 = vmatprep.subr.mxu0 0.0
        %3025 = vmatpush2.msra.mxu0 0.0
        %3026 = vmatprep.subr.mxu0 0.0
        %3027 = vmatpush2.msra.mxu0 0.0
        %3028 = vmatprep.subr.mxu0 0.0
        %3029 = vmatpush2.msra.mxu0 0.0
        %3030 = vmatprep.subr.mxu0 0.0
        %3031 = vmatpush2.msra.mxu0 0.0
        %3032 = vmatprep.subr.mxu0 0.0
        %3033 = vmatpush2.msra.mxu0 0.0
        %3034 = vmatprep.subr.mxu0 0.0
        %3035 = vmatpush2.msra.mxu0 0.0
        %3036 = vmatprep.subr.mxu0 0.0
        %3037 = vmatpush2.msra.mxu0 0.0
        %3038 = vmatprep.subr.mxu0 0.0
        %3039 = vmatpush2.msra.mxu0 0.0
        %3040 = vmatprep.subr.mxu0 0.0
        %3041 = vmatpush2.msra.mxu0 0.0
        %3042 = vmatprep.subr.mxu0 0.0
        %3043 = vmatpush2.msra.mxu0 0.0
        %3044 = vmatprep.subr.mxu0 0.0
        %3045 = vmatpush2.msra.mxu0 0.0
        %3046 = vmatprep.subr.mxu0 0.0
        %3047 = vmatpush2.msra.mxu0 0.0
        %3048 = vmatprep.mubr.f32.mxu0 0.0
        %3049 = vmatmul.mubr.f32.gmra.mxu0 %v1070
        %v3050 = vpop.f32.mrf.mxu0
        %v3051 = vadd.f32 0.0, %v3050
        %v3052 = vpop.f32.mrf.mxu0
        %3053 = vmatprep.mubr.f32.mxu0 0.0
        %3054 = vmatmul.mubr.f32.gmra.mxu0 %v1073
        %v3055 = vpop.f32.mrf.mxu0
        %v3056 = vadd.f32 0.0, %v3055
        %v3057 = vpop.f32.mrf.mxu0
        %3058 = vmatprep.mubr.f32.mxu0 0.0
        %3059 = vmatmul.mubr.f32.gmra.mxu0 %v1076
        %v3060 = vpop.f32.mrf.mxu0
        %v3061 = vadd.f32 0.0, %v3060
        %v3062 = vpop.f32.mrf.mxu0
        %3063 = vmatprep.mubr.f32.mxu0 0.0
        %3064 = vmatmul.mubr.f32.gmra.mxu0 %v1079
        %v3065 = vpop.f32.mrf.mxu0
        %v3066 = vadd.f32 0.0, %v3065
        %v3067 = vpop.f32.mrf.mxu0
        %3068 = vmatprep.mubr.f32.mxu0 0.0
        %3069 = vmatmul.mubr.f32.gmra.mxu0 %v1082
        %v3070 = vpop.f32.mrf.mxu0
        %v3071 = vadd.f32 0.0, %v3070
        %v3072 = vpop.f32.mrf.mxu0
        %3073 = vmatprep.mubr.f32.mxu0 0.0
        %3074 = vmatmul.mubr.f32.gmra.mxu0 %v1085
        %v3075 = vpop.f32.mrf.mxu0
        %v3076 = vadd.f32 0.0, %v3075
        %v3077 = vpop.f32.mrf.mxu0
        %3078 = vmatprep.mubr.f32.mxu0 0.0
        %3079 = vmatmul.mubr.f32.gmra.mxu0 %v1088
        %v3080 = vpop.f32.mrf.mxu0
        %v3081 = vadd.f32 0.0, %v3080
        %v3082 = vpop.f32.mrf.mxu0
        %3083 = vmatprep.mubr.f32.mxu0 0.0
        %3084 = vmatmul.mubr.f32.gmra.mxu0 %v1091
        %v3085 = vpop.f32.mrf.mxu0
        %v3086 = vadd.f32 0.0, %v3085
        %v3087 = vpop.f32.mrf.mxu0
        %3088 = vdwg.mxu0
        %v3089 = vadd.f32 %v2976, %v3051
        %v3090 = vadd.f32 %v2977, %v3056
        %v3091 = vadd.f32 %v2978, %v3061
        %v3092 = vadd.f32 %v2979, %v3066
        %v3093 = vadd.f32 %v2980, %v3071
        %v3094 = vadd.f32 %v2981, %v3076
        %v3095 = vadd.f32 %v2982, %v3081
        %v3096 = vadd.f32 %v2983, %v3086
        %3097 = vmatprep.subr.mxu0 0.0
        %3098 = vmatpush1.msra.mxu0 0.0
        %3099 = vmatprep.subr.mxu0 0.0
        %3100 = vmatpush1.msra.mxu0 0.0
        %3101 = vmatprep.subr.mxu0 0.0
        %3102 = vmatpush1.msra.mxu0 0.0
        %3103 = vmatprep.subr.mxu0 0.0
        %3104 = vmatpush1.msra.mxu0 0.0
        %3105 = vmatprep.subr.mxu0 0.0
        %3106 = vmatpush1.msra.mxu0 0.0
        %3107 = vmatprep.subr.mxu0 0.0
        %3108 = vmatpush1.msra.mxu0 0.0
        %3109 = vmatprep.subr.mxu0 0.0
        %3110 = vmatpush1.msra.mxu0 0.0
        %3111 = vmatprep.subr.mxu0 0.0
        %3112 = vmatpush1.msra.mxu0 0.0
        %3113 = vmatprep.subr.mxu0 0.0
        %3114 = vmatpush1.msra.mxu0 0.0
        %3115 = vmatprep.subr.mxu0 0.0
        %3116 = vmatpush1.msra.mxu0 0.0
        %3117 = vmatprep.subr.mxu0 0.0
        %3118 = vmatpush1.msra.mxu0 0.0
        %3119 = vmatprep.subr.mxu0 0.0
        %3120 = vmatpush1.msra.mxu0 0.0
        %3121 = vmatprep.subr.mxu0 0.0
        %3122 = vmatpush1.msra.mxu0 0.0
        %3123 = vmatprep.subr.mxu0 0.0
        %3124 = vmatpush1.msra.mxu0 0.0
        %3125 = vmatprep.subr.mxu0 0.0
        %3126 = vmatpush1.msra.mxu0 0.0
        %3127 = vmatprep.subr.mxu0 0.0
        %3128 = vmatpush1.msra.mxu0 %v793
        %3129 = vmatprep.subr.mxu0 0.0
        %3130 = vmatpush2.msra.mxu0 0.0
        %3131 = vmatprep.subr.mxu0 0.0
        %3132 = vmatpush2.msra.mxu0 0.0
        %3133 = vmatprep.subr.mxu0 0.0
        %3134 = vmatpush2.msra.mxu0 0.0
        %3135 = vmatprep.subr.mxu0 0.0
        %3136 = vmatpush2.msra.mxu0 0.0
        %3137 = vmatprep.subr.mxu0 0.0
        %3138 = vmatpush2.msra.mxu0 0.0
        %3139 = vmatprep.subr.mxu0 0.0
        %3140 = vmatpush2.msra.mxu0 0.0
        %3141 = vmatprep.subr.mxu0 0.0
        %3142 = vmatpush2.msra.mxu0 0.0
        %3143 = vmatprep.subr.mxu0 0.0
        %3144 = vmatpush2.msra.mxu0 0.0
        %3145 = vmatprep.subr.mxu0 0.0
        %3146 = vmatpush2.msra.mxu0 0.0
        %3147 = vmatprep.subr.mxu0 0.0
        %3148 = vmatpush2.msra.mxu0 0.0
        %3149 = vmatprep.subr.mxu0 0.0
        %3150 = vmatpush2.msra.mxu0 0.0
        %3151 = vmatprep.subr.mxu0 0.0
        %3152 = vmatpush2.msra.mxu0 0.0
        %3153 = vmatprep.subr.mxu0 0.0
        %3154 = vmatpush2.msra.mxu0 0.0
        %3155 = vmatprep.subr.mxu0 0.0
        %3156 = vmatpush2.msra.mxu0 0.0
        %3157 = vmatprep.subr.mxu0 0.0
        %3158 = vmatpush2.msra.mxu0 0.0
        %3159 = vmatprep.subr.mxu0 0.0
        %3160 = vmatpush2.msra.mxu0 0.0
        %3161 = vmatprep.mubr.f32.mxu0 0.0
        %3162 = vmatmul.mubr.f32.gmra.mxu0 %v1221
        %v3163 = vpop.f32.mrf.mxu0
        %v3164 = vadd.f32 0.0, %v3163
        %v3165 = vpop.f32.mrf.mxu0
        %3166 = vmatprep.mubr.f32.mxu0 0.0
        %3167 = vmatmul.mubr.f32.gmra.mxu0 %v1224
        %v3168 = vpop.f32.mrf.mxu0
        %v3169 = vadd.f32 0.0, %v3168
        %v3170 = vpop.f32.mrf.mxu0
        %3171 = vmatprep.mubr.f32.mxu0 0.0
        %3172 = vmatmul.mubr.f32.gmra.mxu0 %v1227
        %v3173 = vpop.f32.mrf.mxu0
        %v3174 = vadd.f32 0.0, %v3173
        %v3175 = vpop.f32.mrf.mxu0
        %3176 = vmatprep.mubr.f32.mxu0 0.0
        %3177 = vmatmul.mubr.f32.gmra.mxu0 %v1230
        %v3178 = vpop.f32.mrf.mxu0
        %v3179 = vadd.f32 0.0, %v3178
        %v3180 = vpop.f32.mrf.mxu0
        %3181 = vmatprep.mubr.f32.mxu0 0.0
        %3182 = vmatmul.mubr.f32.gmra.mxu0 %v1233
        %v3183 = vpop.f32.mrf.mxu0
        %v3184 = vadd.f32 0.0, %v3183
        %v3185 = vpop.f32.mrf.mxu0
        %3186 = vmatprep.mubr.f32.mxu0 0.0
        %3187 = vmatmul.mubr.f32.gmra.mxu0 %v1236
        %v3188 = vpop.f32.mrf.mxu0
        %v3189 = vadd.f32 0.0, %v3188
        %v3190 = vpop.f32.mrf.mxu0
        %3191 = vmatprep.mubr.f32.mxu0 0.0
        %3192 = vmatmul.mubr.f32.gmra.mxu0 %v1239
        %v3193 = vpop.f32.mrf.mxu0
        %v3194 = vadd.f32 0.0, %v3193
        %v3195 = vpop.f32.mrf.mxu0
        %3196 = vmatprep.mubr.f32.mxu0 0.0
        %3197 = vmatmul.mubr.f32.gmra.mxu0 %v1242
        %v3198 = vpop.f32.mrf.mxu0
        %v3199 = vadd.f32 0.0, %v3198
        %v3200 = vpop.f32.mrf.mxu0
        %3201 = vdwg.mxu0
        %v3202 = vadd.f32 %v3089, %v3164
        %v3203 = vadd.f32 %v3090, %v3169
        %v3204 = vadd.f32 %v3091, %v3174
        %v3205 = vadd.f32 %v3092, %v3179
        %v3206 = vadd.f32 %v3093, %v3184
        %v3207 = vadd.f32 %v3094, %v3189
        %v3208 = vadd.f32 %v3095, %v3194
        %v3209 = vadd.f32 %v3096, %v3199
        %3210 = vmatprep.subr.mxu0 0.0
        %3211 = vmatpush1.msra.mxu0 0.0
        %3212 = vmatprep.subr.mxu0 0.0
        %3213 = vmatpush1.msra.mxu0 0.0
        %3214 = vmatprep.subr.mxu0 0.0
        %3215 = vmatpush1.msra.mxu0 0.0
        %3216 = vmatprep.subr.mxu0 0.0
        %3217 = vmatpush1.msra.mxu0 0.0
        %3218 = vmatprep.subr.mxu0 0.0
        %3219 = vmatpush1.msra.mxu0 0.0
        %3220 = vmatprep.subr.mxu0 0.0
        %3221 = vmatpush1.msra.mxu0 0.0
        %3222 = vmatprep.subr.mxu0 0.0
        %3223 = vmatpush1.msra.mxu0 0.0
        %3224 = vmatprep.subr.mxu0 0.0
        %3225 = vmatpush1.msra.mxu0 0.0
        %3226 = vmatprep.subr.mxu0 0.0
        %3227 = vmatpush1.msra.mxu0 0.0
        %3228 = vmatprep.subr.mxu0 0.0
        %3229 = vmatpush1.msra.mxu0 0.0
        %3230 = vmatprep.subr.mxu0 0.0
        %3231 = vmatpush1.msra.mxu0 0.0
        %3232 = vmatprep.subr.mxu0 0.0
        %3233 = vmatpush1.msra.mxu0 0.0
        %3234 = vmatprep.subr.mxu0 0.0
        %3235 = vmatpush1.msra.mxu0 0.0
        %3236 = vmatprep.subr.mxu0 0.0
        %3237 = vmatpush1.msra.mxu0 0.0
        %3238 = vmatprep.subr.mxu0 0.0
        %3239 = vmatpush1.msra.mxu0 0.0
        %3240 = vmatprep.subr.mxu0 0.0
        %3241 = vmatpush1.msra.mxu0 %v943
        %3242 = vmatprep.subr.mxu0 0.0
        %3243 = vmatpush2.msra.mxu0 0.0
        %3244 = vmatprep.subr.mxu0 0.0
        %3245 = vmatpush2.msra.mxu0 0.0
        %3246 = vmatprep.subr.mxu0 0.0
        %3247 = vmatpush2.msra.mxu0 0.0
        %3248 = vmatprep.subr.mxu0 0.0
        %3249 = vmatpush2.msra.mxu0 0.0
        %3250 = vmatprep.subr.mxu0 0.0
        %3251 = vmatpush2.msra.mxu0 0.0
        %3252 = vmatprep.subr.mxu0 0.0
        %3253 = vmatpush2.msra.mxu0 0.0
        %3254 = vmatprep.subr.mxu0 0.0
        %3255 = vmatpush2.msra.mxu0 0.0
        %3256 = vmatprep.subr.mxu0 0.0
        %3257 = vmatpush2.msra.mxu0 0.0
        %3258 = vmatprep.subr.mxu0 0.0
        %3259 = vmatpush2.msra.mxu0 0.0
        %3260 = vmatprep.subr.mxu0 0.0
        %3261 = vmatpush2.msra.mxu0 0.0
        %3262 = vmatprep.subr.mxu0 0.0
        %3263 = vmatpush2.msra.mxu0 0.0
        %3264 = vmatprep.subr.mxu0 0.0
        %3265 = vmatpush2.msra.mxu0 0.0
        %3266 = vmatprep.subr.mxu0 0.0
        %3267 = vmatpush2.msra.mxu0 0.0
        %3268 = vmatprep.subr.mxu0 0.0
        %3269 = vmatpush2.msra.mxu0 0.0
        %3270 = vmatprep.subr.mxu0 0.0
        %3271 = vmatpush2.msra.mxu0 0.0
        %3272 = vmatprep.subr.mxu0 0.0
        %3273 = vmatpush2.msra.mxu0 0.0
        %3274 = vmatprep.mubr.f32.mxu0 0.0
        %3275 = vmatmul.mubr.f32.gmra.mxu0 %v1371
        %v3276 = vpop.f32.mrf.mxu0
        %v3277 = vadd.f32 0.0, %v3276
        %v3278 = vpop.f32.mrf.mxu0
        %3279 = vmatprep.mubr.f32.mxu0 0.0
        %3280 = vmatmul.mubr.f32.gmra.mxu0 %v1374
        %v3281 = vpop.f32.mrf.mxu0
        %v3282 = vadd.f32 0.0, %v3281
        %v3283 = vpop.f32.mrf.mxu0
        %3284 = vmatprep.mubr.f32.mxu0 0.0
        %3285 = vmatmul.mubr.f32.gmra.mxu0 %v1377
        %v3286 = vpop.f32.mrf.mxu0
        %v3287 = vadd.f32 0.0, %v3286
        %v3288 = vpop.f32.mrf.mxu0
        %3289 = vmatprep.mubr.f32.mxu0 0.0
        %3290 = vmatmul.mubr.f32.gmra.mxu0 %v1380
        %v3291 = vpop.f32.mrf.mxu0
        %v3292 = vadd.f32 0.0, %v3291
        %v3293 = vpop.f32.mrf.mxu0
        %3294 = vmatprep.mubr.f32.mxu0 0.0
        %3295 = vmatmul.mubr.f32.gmra.mxu0 %v1383
        %v3296 = vpop.f32.mrf.mxu0
        %v3297 = vadd.f32 0.0, %v3296
        %v3298 = vpop.f32.mrf.mxu0
        %3299 = vmatprep.mubr.f32.mxu0 0.0
        %3300 = vmatmul.mubr.f32.gmra.mxu0 %v1386
        %v3301 = vpop.f32.mrf.mxu0
        %v3302 = vadd.f32 0.0, %v3301
        %v3303 = vpop.f32.mrf.mxu0
        %3304 = vmatprep.mubr.f32.mxu0 0.0
        %3305 = vmatmul.mubr.f32.gmra.mxu0 %v1389
        %v3306 = vpop.f32.mrf.mxu0
        %v3307 = vadd.f32 0.0, %v3306
        %v3308 = vpop.f32.mrf.mxu0
        %3309 = vmatprep.mubr.f32.mxu0 0.0
        %3310 = vmatmul.mubr.f32.gmra.mxu0 %v1392
        %v3311 = vpop.f32.mrf.mxu0
        %v3312 = vadd.f32 0.0, %v3311
        %v3313 = vpop.f32.mrf.mxu0
        %3314 = vdwg.mxu0
        %v3315 = vadd.f32 %v3202, %v3277
        %v3316 = vadd.f32 %v3203, %v3282
        %v3317 = vadd.f32 %v3204, %v3287
        %v3318 = vadd.f32 %v3205, %v3292
        %v3319 = vadd.f32 %v3206, %v3297
        %v3320 = vadd.f32 %v3207, %v3302
        %v3321 = vadd.f32 %v3208, %v3307
        %v3322 = vadd.f32 %v3209, %v3312
        %s3323 = scalar_lea.vmem %s168, 304
        %v3324 = vld [vmem:[%s3323] sm:$0xff]
        %v3325 = vld [vmem:[%s3323 + $0x10] sm:$0xff]
        %v3326 = vld [vmem:[%s3323 + $0x20] sm:$0xff]
        %v3327 = vld [vmem:[%s3323 + $0x30] sm:$0xff]
        %v3328 = vld [vmem:[%s3323 + $0x40] sm:$0xff]
        %v3329 = vld [vmem:[%s3323 + $0x50] sm:$0xff]
        %v3330 = vld [vmem:[%s3323 + $0x60] sm:$0xff]
        %v3331 = vld [vmem:[%s3323 + $0x70] sm:$0xff]
        %v3333 = vsel %vm190, %v3324, 0
        %v3336 = vsel %vm190, %v3325, 0
        %v3339 = vsel %vm190, %v3326, 0
        %v3342 = vsel %vm190, %v3327, 0
        %v3345 = vsel %vm190, %v3328, 0
        %v3348 = vsel %vm190, %v3329, 0
        %v3351 = vsel %vm190, %v3330, 0
        %v3354 = vsel %vm190, %v3331, 0
        %3356 = vmatprep.subr.mxu0 0.0
        %3357 = vmatpush1.msra.mxu0 0.0
        %3358 = vmatprep.subr.mxu0 0.0
        %3359 = vmatpush1.msra.mxu0 0.0
        %3360 = vmatprep.subr.mxu0 0.0
        %3361 = vmatpush1.msra.mxu0 0.0
        %3362 = vmatprep.subr.mxu0 0.0
        %3363 = vmatpush1.msra.mxu0 0.0
        %3364 = vmatprep.subr.mxu0 0.0
        %3365 = vmatpush1.msra.mxu0 0.0
        %3366 = vmatprep.subr.mxu0 0.0
        %3367 = vmatpush1.msra.mxu0 0.0
        %3368 = vmatprep.subr.mxu0 0.0
        %3369 = vmatpush1.msra.mxu0 0.0
        %3370 = vmatprep.subr.mxu0 0.0
        %3371 = vmatpush1.msra.mxu0 0.0
        %3372 = vmatprep.subr.mxu0 0.0
        %3373 = vmatpush1.msra.mxu0 0.0
        %3374 = vmatprep.subr.mxu0 0.0
        %3375 = vmatpush1.msra.mxu0 0.0
        %3376 = vmatprep.subr.mxu0 0.0
        %3377 = vmatpush1.msra.mxu0 0.0
        %3378 = vmatprep.subr.mxu0 0.0
        %3379 = vmatpush1.msra.mxu0 0.0
        %3380 = vmatprep.subr.mxu0 0.0
        %3381 = vmatpush1.msra.mxu0 0.0
        %3382 = vmatprep.subr.mxu0 0.0
        %3383 = vmatpush1.msra.mxu0 0.0
        %3384 = vmatprep.subr.mxu0 0.0
        %3385 = vmatpush1.msra.mxu0 0.0
        %3386 = vmatprep.subr.mxu0 0.0
        %3387 = vmatpush1.msra.mxu0 %v1094
        %3388 = vmatprep.subr.mxu0 0.0
        %3389 = vmatpush2.msra.mxu0 0.0
        %3390 = vmatprep.subr.mxu0 0.0
        %3391 = vmatpush2.msra.mxu0 0.0
        %3392 = vmatprep.subr.mxu0 0.0
        %3393 = vmatpush2.msra.mxu0 0.0
        %3394 = vmatprep.subr.mxu0 0.0
        %3395 = vmatpush2.msra.mxu0 0.0
        %3396 = vmatprep.subr.mxu0 0.0
        %3397 = vmatpush2.msra.mxu0 0.0
        %3398 = vmatprep.subr.mxu0 0.0
        %3399 = vmatpush2.msra.mxu0 0.0
        %3400 = vmatprep.subr.mxu0 0.0
        %3401 = vmatpush2.msra.mxu0 0.0
        %3402 = vmatprep.subr.mxu0 0.0
        %3403 = vmatpush2.msra.mxu0 0.0
        %3404 = vmatprep.subr.mxu0 0.0
        %3405 = vmatpush2.msra.mxu0 0.0
        %3406 = vmatprep.subr.mxu0 0.0
        %3407 = vmatpush2.msra.mxu0 0.0
        %3408 = vmatprep.subr.mxu0 0.0
        %3409 = vmatpush2.msra.mxu0 0.0
        %3410 = vmatprep.subr.mxu0 0.0
        %3411 = vmatpush2.msra.mxu0 0.0
        %3412 = vmatprep.subr.mxu0 0.0
        %3413 = vmatpush2.msra.mxu0 0.0
        %3414 = vmatprep.subr.mxu0 0.0
        %3415 = vmatpush2.msra.mxu0 0.0
        %3416 = vmatprep.subr.mxu0 0.0
        %3417 = vmatpush2.msra.mxu0 0.0
        %3418 = vmatprep.subr.mxu0 0.0
        %3419 = vmatpush2.msra.mxu0 0.0
        %3420 = vmatprep.mubr.f32.mxu0 0.0
        %3421 = vmatmul.mubr.f32.gmra.mxu0 %v3333
        %v3422 = vpop.f32.mrf.mxu0
        %v3423 = vadd.f32 0.0, %v3422
        %v3424 = vpop.f32.mrf.mxu0
        %3425 = vmatprep.mubr.f32.mxu0 0.0
        %3426 = vmatmul.mubr.f32.gmra.mxu0 %v3336
        %v3427 = vpop.f32.mrf.mxu0
        %v3428 = vadd.f32 0.0, %v3427
        %v3429 = vpop.f32.mrf.mxu0
        %3430 = vmatprep.mubr.f32.mxu0 0.0
        %3431 = vmatmul.mubr.f32.gmra.mxu0 %v3339
        %v3432 = vpop.f32.mrf.mxu0
        %v3433 = vadd.f32 0.0, %v3432
        %v3434 = vpop.f32.mrf.mxu0
        %3435 = vmatprep.mubr.f32.mxu0 0.0
        %3436 = vmatmul.mubr.f32.gmra.mxu0 %v3342
        %v3437 = vpop.f32.mrf.mxu0
        %v3438 = vadd.f32 0.0, %v3437
        %v3439 = vpop.f32.mrf.mxu0
        %3440 = vmatprep.mubr.f32.mxu0 0.0
        %3441 = vmatmul.mubr.f32.gmra.mxu0 %v3345
        %v3442 = vpop.f32.mrf.mxu0
        %v3443 = vadd.f32 0.0, %v3442
        %v3444 = vpop.f32.mrf.mxu0
        %3445 = vmatprep.mubr.f32.mxu0 0.0
        %3446 = vmatmul.mubr.f32.gmra.mxu0 %v3348
        %v3447 = vpop.f32.mrf.mxu0
        %v3448 = vadd.f32 0.0, %v3447
        %v3449 = vpop.f32.mrf.mxu0
        %3450 = vmatprep.mubr.f32.mxu0 0.0
        %3451 = vmatmul.mubr.f32.gmra.mxu0 %v3351
        %v3452 = vpop.f32.mrf.mxu0
        %v3453 = vadd.f32 0.0, %v3452
        %v3454 = vpop.f32.mrf.mxu0
        %3455 = vmatprep.mubr.f32.mxu0 0.0
        %3456 = vmatmul.mubr.f32.gmra.mxu0 %v3354
        %v3457 = vpop.f32.mrf.mxu0
        %v3458 = vadd.f32 0.0, %v3457
        %v3459 = vpop.f32.mrf.mxu0
        %3460 = vdwg.mxu0
        %v3461 = vadd.f32 %v3315, %v3423
        %v3462 = vadd.f32 %v3316, %v3428
        %v3463 = vadd.f32 %v3317, %v3433
        %v3464 = vadd.f32 %v3318, %v3438
        %v3465 = vadd.f32 %v3319, %v3443
        %v3466 = vadd.f32 %v3320, %v3448
        %v3467 = vadd.f32 %v3321, %v3453
        %v3468 = vadd.f32 %v3322, %v3458
        %s3469 = scalar_lea.vmem %s168, 448
        %v3470 = vld [vmem:[%s3469] sm:$0xff]
        %v3471 = vld [vmem:[%s3469 + $0x10] sm:$0xff]
        %v3472 = vld [vmem:[%s3469 + $0x20] sm:$0xff]
        %v3473 = vld [vmem:[%s3469 + $0x30] sm:$0xff]
        %v3474 = vld [vmem:[%s3469 + $0x40] sm:$0xff]
        %v3475 = vld [vmem:[%s3469 + $0x50] sm:$0xff]
        %v3476 = vld [vmem:[%s3469 + $0x60] sm:$0xff]
        %v3477 = vld [vmem:[%s3469 + $0x70] sm:$0xff]
        %v3479 = vsel %vm190, %v3470, 0
        %v3482 = vsel %vm190, %v3471, 0
        %v3485 = vsel %vm190, %v3472, 0
        %v3488 = vsel %vm190, %v3473, 0
        %v3491 = vsel %vm190, %v3474, 0
        %v3494 = vsel %vm190, %v3475, 0
        %v3497 = vsel %vm190, %v3476, 0
        %v3500 = vsel %vm190, %v3477, 0
        %3502 = vmatprep.subr.mxu0 0.0
        %3503 = vmatpush1.msra.mxu0 0.0
        %3504 = vmatprep.subr.mxu0 0.0
        %3505 = vmatpush1.msra.mxu0 0.0
        %3506 = vmatprep.subr.mxu0 0.0
        %3507 = vmatpush1.msra.mxu0 0.0
        %3508 = vmatprep.subr.mxu0 0.0
        %3509 = vmatpush1.msra.mxu0 0.0
        %3510 = vmatprep.subr.mxu0 0.0
        %3511 = vmatpush1.msra.mxu0 0.0
        %3512 = vmatprep.subr.mxu0 0.0
        %3513 = vmatpush1.msra.mxu0 0.0
        %3514 = vmatprep.subr.mxu0 0.0
        %3515 = vmatpush1.msra.mxu0 0.0
        %3516 = vmatprep.subr.mxu0 0.0
        %3517 = vmatpush1.msra.mxu0 0.0
        %3518 = vmatprep.subr.mxu0 0.0
        %3519 = vmatpush1.msra.mxu0 0.0
        %3520 = vmatprep.subr.mxu0 0.0
        %3521 = vmatpush1.msra.mxu0 0.0
        %3522 = vmatprep.subr.mxu0 0.0
        %3523 = vmatpush1.msra.mxu0 0.0
        %3524 = vmatprep.subr.mxu0 0.0
        %3525 = vmatpush1.msra.mxu0 0.0
        %3526 = vmatprep.subr.mxu0 0.0
        %3527 = vmatpush1.msra.mxu0 0.0
        %3528 = vmatprep.subr.mxu0 0.0
        %3529 = vmatpush1.msra.mxu0 0.0
        %3530 = vmatprep.subr.mxu0 0.0
        %3531 = vmatpush1.msra.mxu0 0.0
        %3532 = vmatprep.subr.mxu0 0.0
        %3533 = vmatpush1.msra.mxu0 %v1245
        %3534 = vmatprep.subr.mxu0 0.0
        %3535 = vmatpush2.msra.mxu0 0.0
        %3536 = vmatprep.subr.mxu0 0.0
        %3537 = vmatpush2.msra.mxu0 0.0
        %3538 = vmatprep.subr.mxu0 0.0
        %3539 = vmatpush2.msra.mxu0 0.0
        %3540 = vmatprep.subr.mxu0 0.0
        %3541 = vmatpush2.msra.mxu0 0.0
        %3542 = vmatprep.subr.mxu0 0.0
        %3543 = vmatpush2.msra.mxu0 0.0
        %3544 = vmatprep.subr.mxu0 0.0
        %3545 = vmatpush2.msra.mxu0 0.0
        %3546 = vmatprep.subr.mxu0 0.0
        %3547 = vmatpush2.msra.mxu0 0.0
        %3548 = vmatprep.subr.mxu0 0.0
        %3549 = vmatpush2.msra.mxu0 0.0
        %3550 = vmatprep.subr.mxu0 0.0
        %3551 = vmatpush2.msra.mxu0 0.0
        %3552 = vmatprep.subr.mxu0 0.0
        %3553 = vmatpush2.msra.mxu0 0.0
        %3554 = vmatprep.subr.mxu0 0.0
        %3555 = vmatpush2.msra.mxu0 0.0
        %3556 = vmatprep.subr.mxu0 0.0
        %3557 = vmatpush2.msra.mxu0 0.0
        %3558 = vmatprep.subr.mxu0 0.0
        %3559 = vmatpush2.msra.mxu0 0.0
        %3560 = vmatprep.subr.mxu0 0.0
        %3561 = vmatpush2.msra.mxu0 0.0
        %3562 = vmatprep.subr.mxu0 0.0
        %3563 = vmatpush2.msra.mxu0 0.0
        %3564 = vmatprep.subr.mxu0 0.0
        %3565 = vmatpush2.msra.mxu0 0.0
        %3566 = vmatprep.mubr.f32.mxu0 0.0
        %3567 = vmatmul.mubr.f32.gmra.mxu0 %v3479
        %v3568 = vpop.f32.mrf.mxu0
        %v3569 = vadd.f32 0.0, %v3568
        %v3570 = vpop.f32.mrf.mxu0
        %3571 = vmatprep.mubr.f32.mxu0 0.0
        %3572 = vmatmul.mubr.f32.gmra.mxu0 %v3482
        %v3573 = vpop.f32.mrf.mxu0
        %v3574 = vadd.f32 0.0, %v3573
        %v3575 = vpop.f32.mrf.mxu0
        %3576 = vmatprep.mubr.f32.mxu0 0.0
        %3577 = vmatmul.mubr.f32.gmra.mxu0 %v3485
        %v3578 = vpop.f32.mrf.mxu0
        %v3579 = vadd.f32 0.0, %v3578
        %v3580 = vpop.f32.mrf.mxu0
        %3581 = vmatprep.mubr.f32.mxu0 0.0
        %3582 = vmatmul.mubr.f32.gmra.mxu0 %v3488
        %v3583 = vpop.f32.mrf.mxu0
        %v3584 = vadd.f32 0.0, %v3583
        %v3585 = vpop.f32.mrf.mxu0
        %3586 = vmatprep.mubr.f32.mxu0 0.0
        %3587 = vmatmul.mubr.f32.gmra.mxu0 %v3491
        %v3588 = vpop.f32.mrf.mxu0
        %v3589 = vadd.f32 0.0, %v3588
        %v3590 = vpop.f32.mrf.mxu0
        %3591 = vmatprep.mubr.f32.mxu0 0.0
        %3592 = vmatmul.mubr.f32.gmra.mxu0 %v3494
        %v3593 = vpop.f32.mrf.mxu0
        %v3594 = vadd.f32 0.0, %v3593
        %v3595 = vpop.f32.mrf.mxu0
        %3596 = vmatprep.mubr.f32.mxu0 0.0
        %3597 = vmatmul.mubr.f32.gmra.mxu0 %v3497
        %v3598 = vpop.f32.mrf.mxu0
        %v3599 = vadd.f32 0.0, %v3598
        %v3600 = vpop.f32.mrf.mxu0
        %3601 = vmatprep.mubr.f32.mxu0 0.0
        %3602 = vmatmul.mubr.f32.gmra.mxu0 %v3500
        %v3603 = vpop.f32.mrf.mxu0
        %v3604 = vadd.f32 0.0, %v3603
        %v3605 = vpop.f32.mrf.mxu0
        %3606 = vdwg.mxu0
        %v3607 = vadd.f32 %v3461, %v3569
        %v3608 = vadd.f32 %v3462, %v3574
        %v3609 = vadd.f32 %v3463, %v3579
        %v3610 = vadd.f32 %v3464, %v3584
        %v3611 = vadd.f32 %v3465, %v3589
        %v3612 = vadd.f32 %v3466, %v3594
        %v3613 = vadd.f32 %v3467, %v3599
        %v3614 = vadd.f32 %v3468, %v3604
        %v3615 = vld [vmem:[%s3323 + $0x1] sm:$0xff]
        %v3616 = vld [vmem:[%s3323 + $0x11] sm:$0xff]
        %v3617 = vld [vmem:[%s3323 + $0x21] sm:$0xff]
        %v3618 = vld [vmem:[%s3323 + $0x31] sm:$0xff]
        %v3619 = vld [vmem:[%s3323 + $0x41] sm:$0xff]
        %v3620 = vld [vmem:[%s3323 + $0x51] sm:$0xff]
        %v3621 = vld [vmem:[%s3323 + $0x61] sm:$0xff]
        %v3622 = vld [vmem:[%s3323 + $0x71] sm:$0xff]
        %v3624 = vsel %vm190, %v3615, 0
        %v3627 = vsel %vm190, %v3616, 0
        %v3630 = vsel %vm190, %v3617, 0
        %v3633 = vsel %vm190, %v3618, 0
        %v3636 = vsel %vm190, %v3619, 0
        %v3639 = vsel %vm190, %v3620, 0
        %v3642 = vsel %vm190, %v3621, 0
        %v3645 = vsel %vm190, %v3622, 0
        %3647 = vmatprep.subr.mxu0 0.0
        %3648 = vmatpush1.msra.mxu0 0.0
        %3649 = vmatprep.subr.mxu0 0.0
        %3650 = vmatpush1.msra.mxu0 0.0
        %3651 = vmatprep.subr.mxu0 0.0
        %3652 = vmatpush1.msra.mxu0 0.0
        %3653 = vmatprep.subr.mxu0 0.0
        %3654 = vmatpush1.msra.mxu0 0.0
        %3655 = vmatprep.subr.mxu0 0.0
        %3656 = vmatpush1.msra.mxu0 0.0
        %3657 = vmatprep.subr.mxu0 0.0
        %3658 = vmatpush1.msra.mxu0 0.0
        %3659 = vmatprep.subr.mxu0 0.0
        %3660 = vmatpush1.msra.mxu0 0.0
        %3661 = vmatprep.subr.mxu0 0.0
        %3662 = vmatpush1.msra.mxu0 0.0
        %3663 = vmatprep.subr.mxu0 0.0
        %3664 = vmatpush1.msra.mxu0 0.0
        %3665 = vmatprep.subr.mxu0 0.0
        %3666 = vmatpush1.msra.mxu0 0.0
        %3667 = vmatprep.subr.mxu0 0.0
        %3668 = vmatpush1.msra.mxu0 0.0
        %3669 = vmatprep.subr.mxu0 0.0
        %3670 = vmatpush1.msra.mxu0 0.0
        %3671 = vmatprep.subr.mxu0 0.0
        %3672 = vmatpush1.msra.mxu0 0.0
        %3673 = vmatprep.subr.mxu0 0.0
        %3674 = vmatpush1.msra.mxu0 0.0
        %3675 = vmatprep.subr.mxu0 0.0
        %3676 = vmatpush1.msra.mxu0 0.0
        %3677 = vmatprep.subr.mxu0 0.0
        %3678 = vmatpush1.msra.mxu0 %v1395
        %3679 = vmatprep.subr.mxu0 0.0
        %3680 = vmatpush2.msra.mxu0 0.0
        %3681 = vmatprep.subr.mxu0 0.0
        %3682 = vmatpush2.msra.mxu0 0.0
        %3683 = vmatprep.subr.mxu0 0.0
        %3684 = vmatpush2.msra.mxu0 0.0
        %3685 = vmatprep.subr.mxu0 0.0
        %3686 = vmatpush2.msra.mxu0 0.0
        %3687 = vmatprep.subr.mxu0 0.0
        %3688 = vmatpush2.msra.mxu0 0.0
        %3689 = vmatprep.subr.mxu0 0.0
        %3690 = vmatpush2.msra.mxu0 0.0
        %3691 = vmatprep.subr.mxu0 0.0
        %3692 = vmatpush2.msra.mxu0 0.0
        %3693 = vmatprep.subr.mxu0 0.0
        %3694 = vmatpush2.msra.mxu0 0.0
        %3695 = vmatprep.subr.mxu0 0.0
        %3696 = vmatpush2.msra.mxu0 0.0
        %3697 = vmatprep.subr.mxu0 0.0
        %3698 = vmatpush2.msra.mxu0 0.0
        %3699 = vmatprep.subr.mxu0 0.0
        %3700 = vmatpush2.msra.mxu0 0.0
        %3701 = vmatprep.subr.mxu0 0.0
        %3702 = vmatpush2.msra.mxu0 0.0
        %3703 = vmatprep.subr.mxu0 0.0
        %3704 = vmatpush2.msra.mxu0 0.0
        %3705 = vmatprep.subr.mxu0 0.0
        %3706 = vmatpush2.msra.mxu0 0.0
        %3707 = vmatprep.subr.mxu0 0.0
        %3708 = vmatpush2.msra.mxu0 0.0
        %3709 = vmatprep.subr.mxu0 0.0
        %3710 = vmatpush2.msra.mxu0 0.0
        %3711 = vmatprep.mubr.f32.mxu0 0.0
        %3712 = vmatmul.mubr.f32.gmra.mxu0 %v3624
        %v3713 = vpop.f32.mrf.mxu0
        %v3714 = vadd.f32 0.0, %v3713
        %v3715 = vpop.f32.mrf.mxu0
        %3716 = vmatprep.mubr.f32.mxu0 0.0
        %3717 = vmatmul.mubr.f32.gmra.mxu0 %v3627
        %v3718 = vpop.f32.mrf.mxu0
        %v3719 = vadd.f32 0.0, %v3718
        %v3720 = vpop.f32.mrf.mxu0
        %3721 = vmatprep.mubr.f32.mxu0 0.0
        %3722 = vmatmul.mubr.f32.gmra.mxu0 %v3630
        %v3723 = vpop.f32.mrf.mxu0
        %v3724 = vadd.f32 0.0, %v3723
        %v3725 = vpop.f32.mrf.mxu0
        %3726 = vmatprep.mubr.f32.mxu0 0.0
        %3727 = vmatmul.mubr.f32.gmra.mxu0 %v3633
        %v3728 = vpop.f32.mrf.mxu0
        %v3729 = vadd.f32 0.0, %v3728
        %v3730 = vpop.f32.mrf.mxu0
        %3731 = vmatprep.mubr.f32.mxu0 0.0
        %3732 = vmatmul.mubr.f32.gmra.mxu0 %v3636
        %v3733 = vpop.f32.mrf.mxu0
        %v3734 = vadd.f32 0.0, %v3733
        %v3735 = vpop.f32.mrf.mxu0
        %3736 = vmatprep.mubr.f32.mxu0 0.0
        %3737 = vmatmul.mubr.f32.gmra.mxu0 %v3639
        %v3738 = vpop.f32.mrf.mxu0
        %v3739 = vadd.f32 0.0, %v3738
        %v3740 = vpop.f32.mrf.mxu0
        %3741 = vmatprep.mubr.f32.mxu0 0.0
        %3742 = vmatmul.mubr.f32.gmra.mxu0 %v3642
        %v3743 = vpop.f32.mrf.mxu0
        %v3744 = vadd.f32 0.0, %v3743
        %v3745 = vpop.f32.mrf.mxu0
        %3746 = vmatprep.mubr.f32.mxu0 0.0
        %3747 = vmatmul.mubr.f32.gmra.mxu0 %v3645
        %v3748 = vpop.f32.mrf.mxu0
        %v3749 = vadd.f32 0.0, %v3748
        %v3750 = vpop.f32.mrf.mxu0
        %3751 = vdwg.mxu0
        %v3752 = vadd.f32 %v3607, %v3714
        %v3753 = vadd.f32 %v3608, %v3719
        %v3754 = vadd.f32 %v3609, %v3724
        %v3755 = vadd.f32 %v3610, %v3729
        %v3756 = vadd.f32 %v3611, %v3734
        %v3757 = vadd.f32 %v3612, %v3739
        %v3758 = vadd.f32 %v3613, %v3744
        %v3759 = vadd.f32 %v3614, %v3749
        %v3760 = vadd.f32 %v3752, %v1514
        %v3761 = vadd.f32 %v3753, %v1514
        %v3762 = vadd.f32 %v3754, %v1514
        %v3763 = vadd.f32 %v3755, %v1514
        %v3764 = vadd.f32 %v3756, %v1514
        %v3765 = vadd.f32 %v3757, %v1514
        %v3766 = vadd.f32 %v3758, %v1514
        %v3767 = vadd.f32 %v3759, %v1514
        %v3768 = vmax.f32 %v3760, 0.0
        %v3769 = vmax.f32 %v3761, 0.0
        %v3770 = vmax.f32 %v3762, 0.0
        %v3771 = vmax.f32 %v3763, 0.0
        %v3772 = vmax.f32 %v3764, 0.0
        %v3773 = vmax.f32 %v3765, 0.0
        %v3774 = vmax.f32 %v3766, 0.0
        %v3775 = vmax.f32 %v3767, 0.0
        %v3776 = vadd.f32 %v2653, %v3768
        %v3777 = vadd.f32 %v2654, %v3769
        %v3778 = vadd.f32 %v2655, %v3770
        %v3779 = vadd.f32 %v2656, %v3771
        %v3780 = vadd.f32 %v2657, %v3772
        %v3781 = vadd.f32 %v2658, %v3773
        %v3782 = vadd.f32 %v2659, %v3774
        %v3783 = vadd.f32 %v2660, %v3775
        %3784 = vmatprep.subr.mxu0 0.0
        %3785 = vmatpush1.msra.mxu0 0.0
        %3786 = vmatprep.subr.mxu0 0.0
        %3787 = vmatpush1.msra.mxu0 0.0
        %3788 = vmatprep.subr.mxu0 0.0
        %3789 = vmatpush1.msra.mxu0 0.0
        %3790 = vmatprep.subr.mxu0 0.0
        %3791 = vmatpush1.msra.mxu0 0.0
        %3792 = vmatprep.subr.mxu0 0.0
        %3793 = vmatpush1.msra.mxu0 0.0
        %3794 = vmatprep.subr.mxu0 0.0
        %3795 = vmatpush1.msra.mxu0 0.0
        %3796 = vmatprep.subr.mxu0 0.0
        %3797 = vmatpush1.msra.mxu0 0.0
        %3798 = vmatprep.subr.mxu0 0.0
        %3799 = vmatpush1.msra.mxu0 0.0
        %3800 = vmatprep.subr.mxu0 0.0
        %3801 = vmatpush1.msra.mxu0 0.0
        %3802 = vmatprep.subr.mxu0 0.0
        %3803 = vmatpush1.msra.mxu0 0.0
        %3804 = vmatprep.subr.mxu0 0.0
        %3805 = vmatpush1.msra.mxu0 0.0
        %3806 = vmatprep.subr.mxu0 0.0
        %3807 = vmatpush1.msra.mxu0 0.0
        %3808 = vmatprep.subr.mxu0 0.0
        %3809 = vmatpush1.msra.mxu0 0.0
        %3810 = vmatprep.subr.mxu0 0.0
        %3811 = vmatpush1.msra.mxu0 0.0
        %3812 = vmatprep.subr.mxu0 0.0
        %3813 = vmatpush1.msra.mxu0 0.0
        %3814 = vmatprep.subr.mxu0 0.0
        %3815 = vmatpush1.msra.mxu0 %v217
        %3816 = vmatprep.subr.mxu0 0.0
        %3817 = vmatpush2.msra.mxu0 0.0
        %3818 = vmatprep.subr.mxu0 0.0
        %3819 = vmatpush2.msra.mxu0 0.0
        %3820 = vmatprep.subr.mxu0 0.0
        %3821 = vmatpush2.msra.mxu0 0.0
        %3822 = vmatprep.subr.mxu0 0.0
        %3823 = vmatpush2.msra.mxu0 0.0
        %3824 = vmatprep.subr.mxu0 0.0
        %3825 = vmatpush2.msra.mxu0 0.0
        %3826 = vmatprep.subr.mxu0 0.0
        %3827 = vmatpush2.msra.mxu0 0.0
        %3828 = vmatprep.subr.mxu0 0.0
        %3829 = vmatpush2.msra.mxu0 0.0
        %3830 = vmatprep.subr.mxu0 0.0
        %3831 = vmatpush2.msra.mxu0 0.0
        %3832 = vmatprep.subr.mxu0 0.0
        %3833 = vmatpush2.msra.mxu0 0.0
        %3834 = vmatprep.subr.mxu0 0.0
        %3835 = vmatpush2.msra.mxu0 0.0
        %3836 = vmatprep.subr.mxu0 0.0
        %3837 = vmatpush2.msra.mxu0 0.0
        %3838 = vmatprep.subr.mxu0 0.0
        %3839 = vmatpush2.msra.mxu0 0.0
        %3840 = vmatprep.subr.mxu0 0.0
        %3841 = vmatpush2.msra.mxu0 0.0
        %3842 = vmatprep.subr.mxu0 0.0
        %3843 = vmatpush2.msra.mxu0 0.0
        %3844 = vmatprep.subr.mxu0 0.0
        %3845 = vmatpush2.msra.mxu0 0.0
        %3846 = vmatprep.subr.mxu0 0.0
        %3847 = vmatpush2.msra.mxu0 0.0
        %3848 = vmatprep.mubr.f32.mxu0 0.0
        %3849 = vmatmul.mubr.f32.gmra.mxu0 %v919
        %v3850 = vpop.f32.mrf.mxu0
        %v3851 = vadd.f32 0.0, %v3850
        %v3852 = vpop.f32.mrf.mxu0
        %3853 = vmatprep.mubr.f32.mxu0 0.0
        %3854 = vmatmul.mubr.f32.gmra.mxu0 %v922
        %v3855 = vpop.f32.mrf.mxu0
        %v3856 = vadd.f32 0.0, %v3855
        %v3857 = vpop.f32.mrf.mxu0
        %3858 = vmatprep.mubr.f32.mxu0 0.0
        %3859 = vmatmul.mubr.f32.gmra.mxu0 %v925
        %v3860 = vpop.f32.mrf.mxu0
        %v3861 = vadd.f32 0.0, %v3860
        %v3862 = vpop.f32.mrf.mxu0
        %3863 = vmatprep.mubr.f32.mxu0 0.0
        %3864 = vmatmul.mubr.f32.gmra.mxu0 %v928
        %v3865 = vpop.f32.mrf.mxu0
        %v3866 = vadd.f32 0.0, %v3865
        %v3867 = vpop.f32.mrf.mxu0
        %3868 = vmatprep.mubr.f32.mxu0 0.0
        %3869 = vmatmul.mubr.f32.gmra.mxu0 %v931
        %v3870 = vpop.f32.mrf.mxu0
        %v3871 = vadd.f32 0.0, %v3870
        %v3872 = vpop.f32.mrf.mxu0
        %3873 = vmatprep.mubr.f32.mxu0 0.0
        %3874 = vmatmul.mubr.f32.gmra.mxu0 %v934
        %v3875 = vpop.f32.mrf.mxu0
        %v3876 = vadd.f32 0.0, %v3875
        %v3877 = vpop.f32.mrf.mxu0
        %3878 = vmatprep.mubr.f32.mxu0 0.0
        %3879 = vmatmul.mubr.f32.gmra.mxu0 %v937
        %v3880 = vpop.f32.mrf.mxu0
        %v3881 = vadd.f32 0.0, %v3880
        %v3882 = vpop.f32.mrf.mxu0
        %3883 = vmatprep.mubr.f32.mxu0 0.0
        %3884 = vmatmul.mubr.f32.gmra.mxu0 %v940
        %v3885 = vpop.f32.mrf.mxu0
        %v3886 = vadd.f32 0.0, %v3885
        %v3887 = vpop.f32.mrf.mxu0
        %3888 = vdwg.mxu0
        %3889 = vmatprep.subr.mxu0 0.0
        %3890 = vmatpush1.msra.mxu0 0.0
        %3891 = vmatprep.subr.mxu0 0.0
        %3892 = vmatpush1.msra.mxu0 0.0
        %3893 = vmatprep.subr.mxu0 0.0
        %3894 = vmatpush1.msra.mxu0 0.0
        %3895 = vmatprep.subr.mxu0 0.0
        %3896 = vmatpush1.msra.mxu0 0.0
        %3897 = vmatprep.subr.mxu0 0.0
        %3898 = vmatpush1.msra.mxu0 0.0
        %3899 = vmatprep.subr.mxu0 0.0
        %3900 = vmatpush1.msra.mxu0 0.0
        %3901 = vmatprep.subr.mxu0 0.0
        %3902 = vmatpush1.msra.mxu0 0.0
        %3903 = vmatprep.subr.mxu0 0.0
        %3904 = vmatpush1.msra.mxu0 0.0
        %3905 = vmatprep.subr.mxu0 0.0
        %3906 = vmatpush1.msra.mxu0 0.0
        %3907 = vmatprep.subr.mxu0 0.0
        %3908 = vmatpush1.msra.mxu0 0.0
        %3909 = vmatprep.subr.mxu0 0.0
        %3910 = vmatpush1.msra.mxu0 0.0
        %3911 = vmatprep.subr.mxu0 0.0
        %3912 = vmatpush1.msra.mxu0 0.0
        %3913 = vmatprep.subr.mxu0 0.0
        %3914 = vmatpush1.msra.mxu0 0.0
        %3915 = vmatprep.subr.mxu0 0.0
        %3916 = vmatpush1.msra.mxu0 0.0
        %3917 = vmatprep.subr.mxu0 0.0
        %3918 = vmatpush1.msra.mxu0 0.0
        %3919 = vmatprep.subr.mxu0 0.0
        %3920 = vmatpush1.msra.mxu0 %v349
        %3921 = vmatprep.subr.mxu0 0.0
        %3922 = vmatpush2.msra.mxu0 0.0
        %3923 = vmatprep.subr.mxu0 0.0
        %3924 = vmatpush2.msra.mxu0 0.0
        %3925 = vmatprep.subr.mxu0 0.0
        %3926 = vmatpush2.msra.mxu0 0.0
        %3927 = vmatprep.subr.mxu0 0.0
        %3928 = vmatpush2.msra.mxu0 0.0
        %3929 = vmatprep.subr.mxu0 0.0
        %3930 = vmatpush2.msra.mxu0 0.0
        %3931 = vmatprep.subr.mxu0 0.0
        %3932 = vmatpush2.msra.mxu0 0.0
        %3933 = vmatprep.subr.mxu0 0.0
        %3934 = vmatpush2.msra.mxu0 0.0
        %3935 = vmatprep.subr.mxu0 0.0
        %3936 = vmatpush2.msra.mxu0 0.0
        %3937 = vmatprep.subr.mxu0 0.0
        %3938 = vmatpush2.msra.mxu0 0.0
        %3939 = vmatprep.subr.mxu0 0.0
        %3940 = vmatpush2.msra.mxu0 0.0
        %3941 = vmatprep.subr.mxu0 0.0
        %3942 = vmatpush2.msra.mxu0 0.0
        %3943 = vmatprep.subr.mxu0 0.0
        %3944 = vmatpush2.msra.mxu0 0.0
        %3945 = vmatprep.subr.mxu0 0.0
        %3946 = vmatpush2.msra.mxu0 0.0
        %3947 = vmatprep.subr.mxu0 0.0
        %3948 = vmatpush2.msra.mxu0 0.0
        %3949 = vmatprep.subr.mxu0 0.0
        %3950 = vmatpush2.msra.mxu0 0.0
        %3951 = vmatprep.subr.mxu0 0.0
        %3952 = vmatpush2.msra.mxu0 0.0
        %3953 = vmatprep.mubr.f32.mxu0 0.0
        %3954 = vmatmul.mubr.f32.gmra.mxu0 %v769
        %v3955 = vpop.f32.mrf.mxu0
        %v3956 = vadd.f32 %v3851, %v3955
        %v3957 = vpop.f32.mrf.mxu0
        %3958 = vmatprep.mubr.f32.mxu0 0.0
        %3959 = vmatmul.mubr.f32.gmra.mxu0 %v772
        %v3960 = vpop.f32.mrf.mxu0
        %v3961 = vadd.f32 %v3856, %v3960
        %v3962 = vpop.f32.mrf.mxu0
        %3963 = vmatprep.mubr.f32.mxu0 0.0
        %3964 = vmatmul.mubr.f32.gmra.mxu0 %v775
        %v3965 = vpop.f32.mrf.mxu0
        %v3966 = vadd.f32 %v3861, %v3965
        %v3967 = vpop.f32.mrf.mxu0
        %3968 = vmatprep.mubr.f32.mxu0 0.0
        %3969 = vmatmul.mubr.f32.gmra.mxu0 %v778
        %v3970 = vpop.f32.mrf.mxu0
        %v3971 = vadd.f32 %v3866, %v3970
        %v3972 = vpop.f32.mrf.mxu0
        %3973 = vmatprep.mubr.f32.mxu0 0.0
        %3974 = vmatmul.mubr.f32.gmra.mxu0 %v781
        %v3975 = vpop.f32.mrf.mxu0
        %v3976 = vadd.f32 %v3871, %v3975
        %v3977 = vpop.f32.mrf.mxu0
        %3978 = vmatprep.mubr.f32.mxu0 0.0
        %3979 = vmatmul.mubr.f32.gmra.mxu0 %v784
        %v3980 = vpop.f32.mrf.mxu0
        %v3981 = vadd.f32 %v3876, %v3980
        %v3982 = vpop.f32.mrf.mxu0
        %3983 = vmatprep.mubr.f32.mxu0 0.0
        %3984 = vmatmul.mubr.f32.gmra.mxu0 %v787
        %v3985 = vpop.f32.mrf.mxu0
        %v3986 = vadd.f32 %v3881, %v3985
        %v3987 = vpop.f32.mrf.mxu0
        %3988 = vmatprep.mubr.f32.mxu0 0.0
        %3989 = vmatmul.mubr.f32.gmra.mxu0 %v790
        %v3990 = vpop.f32.mrf.mxu0
        %v3991 = vadd.f32 %v3886, %v3990
        %v3992 = vpop.f32.mrf.mxu0
        %3993 = vdwg.mxu0
        %3994 = vmatprep.subr.mxu0 0.0
        %3995 = vmatpush1.msra.mxu0 0.0
        %3996 = vmatprep.subr.mxu0 0.0
        %3997 = vmatpush1.msra.mxu0 0.0
        %3998 = vmatprep.subr.mxu0 0.0
        %3999 = vmatpush1.msra.mxu0 0.0
        %4000 = vmatprep.subr.mxu0 0.0
        %4001 = vmatpush1.msra.mxu0 0.0
        %4002 = vmatprep.subr.mxu0 0.0
        %4003 = vmatpush1.msra.mxu0 0.0
        %4004 = vmatprep.subr.mxu0 0.0
        %4005 = vmatpush1.msra.mxu0 0.0
        %4006 = vmatprep.subr.mxu0 0.0
        %4007 = vmatpush1.msra.mxu0 0.0
        %4008 = vmatprep.subr.mxu0 0.0
        %4009 = vmatpush1.msra.mxu0 0.0
        %4010 = vmatprep.subr.mxu0 0.0
        %4011 = vmatpush1.msra.mxu0 0.0
        %4012 = vmatprep.subr.mxu0 0.0
        %4013 = vmatpush1.msra.mxu0 0.0
        %4014 = vmatprep.subr.mxu0 0.0
        %4015 = vmatpush1.msra.mxu0 0.0
        %4016 = vmatprep.subr.mxu0 0.0
        %4017 = vmatpush1.msra.mxu0 0.0
        %4018 = vmatprep.subr.mxu0 0.0
        %4019 = vmatpush1.msra.mxu0 0.0
        %4020 = vmatprep.subr.mxu0 0.0
        %4021 = vmatpush1.msra.mxu0 0.0
        %4022 = vmatprep.subr.mxu0 0.0
        %4023 = vmatpush1.msra.mxu0 0.0
        %4024 = vmatprep.subr.mxu0 0.0
        %4025 = vmatpush1.msra.mxu0 %v491
        %4026 = vmatprep.subr.mxu0 0.0
        %4027 = vmatpush2.msra.mxu0 0.0
        %4028 = vmatprep.subr.mxu0 0.0
        %4029 = vmatpush2.msra.mxu0 0.0
        %4030 = vmatprep.subr.mxu0 0.0
        %4031 = vmatpush2.msra.mxu0 0.0
        %4032 = vmatprep.subr.mxu0 0.0
        %4033 = vmatpush2.msra.mxu0 0.0
        %4034 = vmatprep.subr.mxu0 0.0
        %4035 = vmatpush2.msra.mxu0 0.0
        %4036 = vmatprep.subr.mxu0 0.0
        %4037 = vmatpush2.msra.mxu0 0.0
        %4038 = vmatprep.subr.mxu0 0.0
        %4039 = vmatpush2.msra.mxu0 0.0
        %4040 = vmatprep.subr.mxu0 0.0
        %4041 = vmatpush2.msra.mxu0 0.0
        %4042 = vmatprep.subr.mxu0 0.0
        %4043 = vmatpush2.msra.mxu0 0.0
        %4044 = vmatprep.subr.mxu0 0.0
        %4045 = vmatpush2.msra.mxu0 0.0
        %4046 = vmatprep.subr.mxu0 0.0
        %4047 = vmatpush2.msra.mxu0 0.0
        %4048 = vmatprep.subr.mxu0 0.0
        %4049 = vmatpush2.msra.mxu0 0.0
        %4050 = vmatprep.subr.mxu0 0.0
        %4051 = vmatpush2.msra.mxu0 0.0
        %4052 = vmatprep.subr.mxu0 0.0
        %4053 = vmatpush2.msra.mxu0 0.0
        %4054 = vmatprep.subr.mxu0 0.0
        %4055 = vmatpush2.msra.mxu0 0.0
        %4056 = vmatprep.subr.mxu0 0.0
        %4057 = vmatpush2.msra.mxu0 0.0
        %4058 = vmatprep.mubr.f32.mxu0 0.0
        %4059 = vmatmul.mubr.f32.gmra.mxu0 %v2130
        %v4060 = vpop.f32.mrf.mxu0
        %v4061 = vadd.f32 0.0, %v4060
        %v4062 = vpop.f32.mrf.mxu0
        %4063 = vmatprep.mubr.f32.mxu0 0.0
        %4064 = vmatmul.mubr.f32.gmra.mxu0 %v2133
        %v4065 = vpop.f32.mrf.mxu0
        %v4066 = vadd.f32 0.0, %v4065
        %v4067 = vpop.f32.mrf.mxu0
        %4068 = vmatprep.mubr.f32.mxu0 0.0
        %4069 = vmatmul.mubr.f32.gmra.mxu0 %v2136
        %v4070 = vpop.f32.mrf.mxu0
        %v4071 = vadd.f32 0.0, %v4070
        %v4072 = vpop.f32.mrf.mxu0
        %4073 = vmatprep.mubr.f32.mxu0 0.0
        %4074 = vmatmul.mubr.f32.gmra.mxu0 %v2139
        %v4075 = vpop.f32.mrf.mxu0
        %v4076 = vadd.f32 0.0, %v4075
        %v4077 = vpop.f32.mrf.mxu0
        %4078 = vmatprep.mubr.f32.mxu0 0.0
        %4079 = vmatmul.mubr.f32.gmra.mxu0 %v2142
        %v4080 = vpop.f32.mrf.mxu0
        %v4081 = vadd.f32 0.0, %v4080
        %v4082 = vpop.f32.mrf.mxu0
        %4083 = vmatprep.mubr.f32.mxu0 0.0
        %4084 = vmatmul.mubr.f32.gmra.mxu0 %v2145
        %v4085 = vpop.f32.mrf.mxu0
        %v4086 = vadd.f32 0.0, %v4085
        %v4087 = vpop.f32.mrf.mxu0
        %4088 = vmatprep.mubr.f32.mxu0 0.0
        %4089 = vmatmul.mubr.f32.gmra.mxu0 %v2148
        %v4090 = vpop.f32.mrf.mxu0
        %v4091 = vadd.f32 0.0, %v4090
        %v4092 = vpop.f32.mrf.mxu0
        %4093 = vmatprep.mubr.f32.mxu0 0.0
        %4094 = vmatmul.mubr.f32.gmra.mxu0 %v2151
        %v4095 = vpop.f32.mrf.mxu0
        %v4096 = vadd.f32 0.0, %v4095
        %v4097 = vpop.f32.mrf.mxu0
        %4098 = vdwg.mxu0
        %v4099 = vadd.f32 %v3956, %v4061
        %v4100 = vadd.f32 %v3961, %v4066
        %v4101 = vadd.f32 %v3966, %v4071
        %v4102 = vadd.f32 %v3971, %v4076
        %v4103 = vadd.f32 %v3976, %v4081
        %v4104 = vadd.f32 %v3981, %v4086
        %v4105 = vadd.f32 %v3986, %v4091
        %v4106 = vadd.f32 %v3991, %v4096
        %4107 = vmatprep.subr.mxu0 0.0
        %4108 = vmatpush1.msra.mxu0 0.0
        %4109 = vmatprep.subr.mxu0 0.0
        %4110 = vmatpush1.msra.mxu0 0.0
        %4111 = vmatprep.subr.mxu0 0.0
        %4112 = vmatpush1.msra.mxu0 0.0
        %4113 = vmatprep.subr.mxu0 0.0
        %4114 = vmatpush1.msra.mxu0 0.0
        %4115 = vmatprep.subr.mxu0 0.0
        %4116 = vmatpush1.msra.mxu0 0.0
        %4117 = vmatprep.subr.mxu0 0.0
        %4118 = vmatpush1.msra.mxu0 0.0
        %4119 = vmatprep.subr.mxu0 0.0
        %4120 = vmatpush1.msra.mxu0 0.0
        %4121 = vmatprep.subr.mxu0 0.0
        %4122 = vmatpush1.msra.mxu0 0.0
        %4123 = vmatprep.subr.mxu0 0.0
        %4124 = vmatpush1.msra.mxu0 0.0
        %4125 = vmatprep.subr.mxu0 0.0
        %4126 = vmatpush1.msra.mxu0 0.0
        %4127 = vmatprep.subr.mxu0 0.0
        %4128 = vmatpush1.msra.mxu0 0.0
        %4129 = vmatprep.subr.mxu0 0.0
        %4130 = vmatpush1.msra.mxu0 0.0
        %4131 = vmatprep.subr.mxu0 0.0
        %4132 = vmatpush1.msra.mxu0 0.0
        %4133 = vmatprep.subr.mxu0 0.0
        %4134 = vmatpush1.msra.mxu0 0.0
        %4135 = vmatprep.subr.mxu0 0.0
        %4136 = vmatpush1.msra.mxu0 0.0
        %4137 = vmatprep.subr.mxu0 0.0
        %4138 = vmatpush1.msra.mxu0 %v642
        %4139 = vmatprep.subr.mxu0 0.0
        %4140 = vmatpush2.msra.mxu0 0.0
        %4141 = vmatprep.subr.mxu0 0.0
        %4142 = vmatpush2.msra.mxu0 0.0
        %4143 = vmatprep.subr.mxu0 0.0
        %4144 = vmatpush2.msra.mxu0 0.0
        %4145 = vmatprep.subr.mxu0 0.0
        %4146 = vmatpush2.msra.mxu0 0.0
        %4147 = vmatprep.subr.mxu0 0.0
        %4148 = vmatpush2.msra.mxu0 0.0
        %4149 = vmatprep.subr.mxu0 0.0
        %4150 = vmatpush2.msra.mxu0 0.0
        %4151 = vmatprep.subr.mxu0 0.0
        %4152 = vmatpush2.msra.mxu0 0.0
        %4153 = vmatprep.subr.mxu0 0.0
        %4154 = vmatpush2.msra.mxu0 0.0
        %4155 = vmatprep.subr.mxu0 0.0
        %4156 = vmatpush2.msra.mxu0 0.0
        %4157 = vmatprep.subr.mxu0 0.0
        %4158 = vmatpush2.msra.mxu0 0.0
        %4159 = vmatprep.subr.mxu0 0.0
        %4160 = vmatpush2.msra.mxu0 0.0
        %4161 = vmatprep.subr.mxu0 0.0
        %4162 = vmatpush2.msra.mxu0 0.0
        %4163 = vmatprep.subr.mxu0 0.0
        %4164 = vmatpush2.msra.mxu0 0.0
        %4165 = vmatprep.subr.mxu0 0.0
        %4166 = vmatpush2.msra.mxu0 0.0
        %4167 = vmatprep.subr.mxu0 0.0
        %4168 = vmatpush2.msra.mxu0 0.0
        %4169 = vmatprep.subr.mxu0 0.0
        %4170 = vmatpush2.msra.mxu0 0.0
        %4171 = vmatprep.mubr.f32.mxu0 0.0
        %4172 = vmatmul.mubr.f32.gmra.mxu0 %v1221
        %v4173 = vpop.f32.mrf.mxu0
        %v4174 = vadd.f32 0.0, %v4173
        %v4175 = vpop.f32.mrf.mxu0
        %4176 = vmatprep.mubr.f32.mxu0 0.0
        %4177 = vmatmul.mubr.f32.gmra.mxu0 %v1224
        %v4178 = vpop.f32.mrf.mxu0
        %v4179 = vadd.f32 0.0, %v4178
        %v4180 = vpop.f32.mrf.mxu0
        %4181 = vmatprep.mubr.f32.mxu0 0.0
        %4182 = vmatmul.mubr.f32.gmra.mxu0 %v1227
        %v4183 = vpop.f32.mrf.mxu0
        %v4184 = vadd.f32 0.0, %v4183
        %v4185 = vpop.f32.mrf.mxu0
        %4186 = vmatprep.mubr.f32.mxu0 0.0
        %4187 = vmatmul.mubr.f32.gmra.mxu0 %v1230
        %v4188 = vpop.f32.mrf.mxu0
        %v4189 = vadd.f32 0.0, %v4188
        %v4190 = vpop.f32.mrf.mxu0
        %4191 = vmatprep.mubr.f32.mxu0 0.0
        %4192 = vmatmul.mubr.f32.gmra.mxu0 %v1233
        %v4193 = vpop.f32.mrf.mxu0
        %v4194 = vadd.f32 0.0, %v4193
        %v4195 = vpop.f32.mrf.mxu0
        %4196 = vmatprep.mubr.f32.mxu0 0.0
        %4197 = vmatmul.mubr.f32.gmra.mxu0 %v1236
        %v4198 = vpop.f32.mrf.mxu0
        %v4199 = vadd.f32 0.0, %v4198
        %v4200 = vpop.f32.mrf.mxu0
        %4201 = vmatprep.mubr.f32.mxu0 0.0
        %4202 = vmatmul.mubr.f32.gmra.mxu0 %v1239
        %v4203 = vpop.f32.mrf.mxu0
        %v4204 = vadd.f32 0.0, %v4203
        %v4205 = vpop.f32.mrf.mxu0
        %4206 = vmatprep.mubr.f32.mxu0 0.0
        %4207 = vmatmul.mubr.f32.gmra.mxu0 %v1242
        %v4208 = vpop.f32.mrf.mxu0
        %v4209 = vadd.f32 0.0, %v4208
        %v4210 = vpop.f32.mrf.mxu0
        %4211 = vdwg.mxu0
        %v4212 = vadd.f32 %v4099, %v4174
        %v4213 = vadd.f32 %v4100, %v4179
        %v4214 = vadd.f32 %v4101, %v4184
        %v4215 = vadd.f32 %v4102, %v4189
        %v4216 = vadd.f32 %v4103, %v4194
        %v4217 = vadd.f32 %v4104, %v4199
        %v4218 = vadd.f32 %v4105, %v4204
        %v4219 = vadd.f32 %v4106, %v4209
        %4220 = vmatprep.subr.mxu0 0.0
        %4221 = vmatpush1.msra.mxu0 0.0
        %4222 = vmatprep.subr.mxu0 0.0
        %4223 = vmatpush1.msra.mxu0 0.0
        %4224 = vmatprep.subr.mxu0 0.0
        %4225 = vmatpush1.msra.mxu0 0.0
        %4226 = vmatprep.subr.mxu0 0.0
        %4227 = vmatpush1.msra.mxu0 0.0
        %4228 = vmatprep.subr.mxu0 0.0
        %4229 = vmatpush1.msra.mxu0 0.0
        %4230 = vmatprep.subr.mxu0 0.0
        %4231 = vmatpush1.msra.mxu0 0.0
        %4232 = vmatprep.subr.mxu0 0.0
        %4233 = vmatpush1.msra.mxu0 0.0
        %4234 = vmatprep.subr.mxu0 0.0
        %4235 = vmatpush1.msra.mxu0 0.0
        %4236 = vmatprep.subr.mxu0 0.0
        %4237 = vmatpush1.msra.mxu0 0.0
        %4238 = vmatprep.subr.mxu0 0.0
        %4239 = vmatpush1.msra.mxu0 0.0
        %4240 = vmatprep.subr.mxu0 0.0
        %4241 = vmatpush1.msra.mxu0 0.0
        %4242 = vmatprep.subr.mxu0 0.0
        %4243 = vmatpush1.msra.mxu0 0.0
        %4244 = vmatprep.subr.mxu0 0.0
        %4245 = vmatpush1.msra.mxu0 0.0
        %4246 = vmatprep.subr.mxu0 0.0
        %4247 = vmatpush1.msra.mxu0 0.0
        %4248 = vmatprep.subr.mxu0 0.0
        %4249 = vmatpush1.msra.mxu0 0.0
        %4250 = vmatprep.subr.mxu0 0.0
        %4251 = vmatpush1.msra.mxu0 %v793
        %4252 = vmatprep.subr.mxu0 0.0
        %4253 = vmatpush2.msra.mxu0 0.0
        %4254 = vmatprep.subr.mxu0 0.0
        %4255 = vmatpush2.msra.mxu0 0.0
        %4256 = vmatprep.subr.mxu0 0.0
        %4257 = vmatpush2.msra.mxu0 0.0
        %4258 = vmatprep.subr.mxu0 0.0
        %4259 = vmatpush2.msra.mxu0 0.0
        %4260 = vmatprep.subr.mxu0 0.0
        %4261 = vmatpush2.msra.mxu0 0.0
        %4262 = vmatprep.subr.mxu0 0.0
        %4263 = vmatpush2.msra.mxu0 0.0
        %4264 = vmatprep.subr.mxu0 0.0
        %4265 = vmatpush2.msra.mxu0 0.0
        %4266 = vmatprep.subr.mxu0 0.0
        %4267 = vmatpush2.msra.mxu0 0.0
        %4268 = vmatprep.subr.mxu0 0.0
        %4269 = vmatpush2.msra.mxu0 0.0
        %4270 = vmatprep.subr.mxu0 0.0
        %4271 = vmatpush2.msra.mxu0 0.0
        %4272 = vmatprep.subr.mxu0 0.0
        %4273 = vmatpush2.msra.mxu0 0.0
        %4274 = vmatprep.subr.mxu0 0.0
        %4275 = vmatpush2.msra.mxu0 0.0
        %4276 = vmatprep.subr.mxu0 0.0
        %4277 = vmatpush2.msra.mxu0 0.0
        %4278 = vmatprep.subr.mxu0 0.0
        %4279 = vmatpush2.msra.mxu0 0.0
        %4280 = vmatprep.subr.mxu0 0.0
        %4281 = vmatpush2.msra.mxu0 0.0
        %4282 = vmatprep.subr.mxu0 0.0
        %4283 = vmatpush2.msra.mxu0 0.0
        %4284 = vmatprep.mubr.f32.mxu0 0.0
        %4285 = vmatmul.mubr.f32.gmra.mxu0 %v1371
        %v4286 = vpop.f32.mrf.mxu0
        %v4287 = vadd.f32 0.0, %v4286
        %v4288 = vpop.f32.mrf.mxu0
        %4289 = vmatprep.mubr.f32.mxu0 0.0
        %4290 = vmatmul.mubr.f32.gmra.mxu0 %v1374
        %v4291 = vpop.f32.mrf.mxu0
        %v4292 = vadd.f32 0.0, %v4291
        %v4293 = vpop.f32.mrf.mxu0
        %4294 = vmatprep.mubr.f32.mxu0 0.0
        %4295 = vmatmul.mubr.f32.gmra.mxu0 %v1377
        %v4296 = vpop.f32.mrf.mxu0
        %v4297 = vadd.f32 0.0, %v4296
        %v4298 = vpop.f32.mrf.mxu0
        %4299 = vmatprep.mubr.f32.mxu0 0.0
        %4300 = vmatmul.mubr.f32.gmra.mxu0 %v1380
        %v4301 = vpop.f32.mrf.mxu0
        %v4302 = vadd.f32 0.0, %v4301
        %v4303 = vpop.f32.mrf.mxu0
        %4304 = vmatprep.mubr.f32.mxu0 0.0
        %4305 = vmatmul.mubr.f32.gmra.mxu0 %v1383
        %v4306 = vpop.f32.mrf.mxu0
        %v4307 = vadd.f32 0.0, %v4306
        %v4308 = vpop.f32.mrf.mxu0
        %4309 = vmatprep.mubr.f32.mxu0 0.0
        %4310 = vmatmul.mubr.f32.gmra.mxu0 %v1386
        %v4311 = vpop.f32.mrf.mxu0
        %v4312 = vadd.f32 0.0, %v4311
        %v4313 = vpop.f32.mrf.mxu0
        %4314 = vmatprep.mubr.f32.mxu0 0.0
        %4315 = vmatmul.mubr.f32.gmra.mxu0 %v1389
        %v4316 = vpop.f32.mrf.mxu0
        %v4317 = vadd.f32 0.0, %v4316
        %v4318 = vpop.f32.mrf.mxu0
        %4319 = vmatprep.mubr.f32.mxu0 0.0
        %4320 = vmatmul.mubr.f32.gmra.mxu0 %v1392
        %v4321 = vpop.f32.mrf.mxu0
        %v4322 = vadd.f32 0.0, %v4321
        %v4323 = vpop.f32.mrf.mxu0
        %4324 = vdwg.mxu0
        %v4325 = vadd.f32 %v4212, %v4287
        %v4326 = vadd.f32 %v4213, %v4292
        %v4327 = vadd.f32 %v4214, %v4297
        %v4328 = vadd.f32 %v4215, %v4302
        %v4329 = vadd.f32 %v4216, %v4307
        %v4330 = vadd.f32 %v4217, %v4312
        %v4331 = vadd.f32 %v4218, %v4317
        %v4332 = vadd.f32 %v4219, %v4322
        %4333 = vmatprep.subr.mxu0 0.0
        %4334 = vmatpush1.msra.mxu0 0.0
        %4335 = vmatprep.subr.mxu0 0.0
        %4336 = vmatpush1.msra.mxu0 0.0
        %4337 = vmatprep.subr.mxu0 0.0
        %4338 = vmatpush1.msra.mxu0 0.0
        %4339 = vmatprep.subr.mxu0 0.0
        %4340 = vmatpush1.msra.mxu0 0.0
        %4341 = vmatprep.subr.mxu0 0.0
        %4342 = vmatpush1.msra.mxu0 0.0
        %4343 = vmatprep.subr.mxu0 0.0
        %4344 = vmatpush1.msra.mxu0 0.0
        %4345 = vmatprep.subr.mxu0 0.0
        %4346 = vmatpush1.msra.mxu0 0.0
        %4347 = vmatprep.subr.mxu0 0.0
        %4348 = vmatpush1.msra.mxu0 0.0
        %4349 = vmatprep.subr.mxu0 0.0
        %4350 = vmatpush1.msra.mxu0 0.0
        %4351 = vmatprep.subr.mxu0 0.0
        %4352 = vmatpush1.msra.mxu0 0.0
        %4353 = vmatprep.subr.mxu0 0.0
        %4354 = vmatpush1.msra.mxu0 0.0
        %4355 = vmatprep.subr.mxu0 0.0
        %4356 = vmatpush1.msra.mxu0 0.0
        %4357 = vmatprep.subr.mxu0 0.0
        %4358 = vmatpush1.msra.mxu0 0.0
        %4359 = vmatprep.subr.mxu0 0.0
        %4360 = vmatpush1.msra.mxu0 0.0
        %4361 = vmatprep.subr.mxu0 0.0
        %4362 = vmatpush1.msra.mxu0 0.0
        %4363 = vmatprep.subr.mxu0 0.0
        %4364 = vmatpush1.msra.mxu0 %v943
        %4365 = vmatprep.subr.mxu0 0.0
        %4366 = vmatpush2.msra.mxu0 0.0
        %4367 = vmatprep.subr.mxu0 0.0
        %4368 = vmatpush2.msra.mxu0 0.0
        %4369 = vmatprep.subr.mxu0 0.0
        %4370 = vmatpush2.msra.mxu0 0.0
        %4371 = vmatprep.subr.mxu0 0.0
        %4372 = vmatpush2.msra.mxu0 0.0
        %4373 = vmatprep.subr.mxu0 0.0
        %4374 = vmatpush2.msra.mxu0 0.0
        %4375 = vmatprep.subr.mxu0 0.0
        %4376 = vmatpush2.msra.mxu0 0.0
        %4377 = vmatprep.subr.mxu0 0.0
        %4378 = vmatpush2.msra.mxu0 0.0
        %4379 = vmatprep.subr.mxu0 0.0
        %4380 = vmatpush2.msra.mxu0 0.0
        %4381 = vmatprep.subr.mxu0 0.0
        %4382 = vmatpush2.msra.mxu0 0.0
        %4383 = vmatprep.subr.mxu0 0.0
        %4384 = vmatpush2.msra.mxu0 0.0
        %4385 = vmatprep.subr.mxu0 0.0
        %4386 = vmatpush2.msra.mxu0 0.0
        %4387 = vmatprep.subr.mxu0 0.0
        %4388 = vmatpush2.msra.mxu0 0.0
        %4389 = vmatprep.subr.mxu0 0.0
        %4390 = vmatpush2.msra.mxu0 0.0
        %4391 = vmatprep.subr.mxu0 0.0
        %4392 = vmatpush2.msra.mxu0 0.0
        %4393 = vmatprep.subr.mxu0 0.0
        %4394 = vmatpush2.msra.mxu0 0.0
        %4395 = vmatprep.subr.mxu0 0.0
        %4396 = vmatpush2.msra.mxu0 0.0
        %4397 = vmatprep.mubr.f32.mxu0 0.0
        %4398 = vmatmul.mubr.f32.gmra.mxu0 %v2501
        %v4399 = vpop.f32.mrf.mxu0
        %v4400 = vadd.f32 0.0, %v4399
        %v4401 = vpop.f32.mrf.mxu0
        %4402 = vmatprep.mubr.f32.mxu0 0.0
        %4403 = vmatmul.mubr.f32.gmra.mxu0 %v2504
        %v4404 = vpop.f32.mrf.mxu0
        %v4405 = vadd.f32 0.0, %v4404
        %v4406 = vpop.f32.mrf.mxu0
        %4407 = vmatprep.mubr.f32.mxu0 0.0
        %4408 = vmatmul.mubr.f32.gmra.mxu0 %v2507
        %v4409 = vpop.f32.mrf.mxu0
        %v4410 = vadd.f32 0.0, %v4409
        %v4411 = vpop.f32.mrf.mxu0
        %4412 = vmatprep.mubr.f32.mxu0 0.0
        %4413 = vmatmul.mubr.f32.gmra.mxu0 %v2510
        %v4414 = vpop.f32.mrf.mxu0
        %v4415 = vadd.f32 0.0, %v4414
        %v4416 = vpop.f32.mrf.mxu0
        %4417 = vmatprep.mubr.f32.mxu0 0.0
        %4418 = vmatmul.mubr.f32.gmra.mxu0 %v2513
        %v4419 = vpop.f32.mrf.mxu0
        %v4420 = vadd.f32 0.0, %v4419
        %v4421 = vpop.f32.mrf.mxu0
        %4422 = vmatprep.mubr.f32.mxu0 0.0
        %4423 = vmatmul.mubr.f32.gmra.mxu0 %v2516
        %v4424 = vpop.f32.mrf.mxu0
        %v4425 = vadd.f32 0.0, %v4424
        %v4426 = vpop.f32.mrf.mxu0
        %4427 = vmatprep.mubr.f32.mxu0 0.0
        %4428 = vmatmul.mubr.f32.gmra.mxu0 %v2519
        %v4429 = vpop.f32.mrf.mxu0
        %v4430 = vadd.f32 0.0, %v4429
        %v4431 = vpop.f32.mrf.mxu0
        %4432 = vmatprep.mubr.f32.mxu0 0.0
        %4433 = vmatmul.mubr.f32.gmra.mxu0 %v2522
        %v4434 = vpop.f32.mrf.mxu0
        %v4435 = vadd.f32 0.0, %v4434
        %v4436 = vpop.f32.mrf.mxu0
        %4437 = vdwg.mxu0
        %v4438 = vadd.f32 %v4325, %v4400
        %v4439 = vadd.f32 %v4326, %v4405
        %v4440 = vadd.f32 %v4327, %v4410
        %v4441 = vadd.f32 %v4328, %v4415
        %v4442 = vadd.f32 %v4329, %v4420
        %v4443 = vadd.f32 %v4330, %v4425
        %v4444 = vadd.f32 %v4331, %v4430
        %v4445 = vadd.f32 %v4332, %v4435
        %4446 = vmatprep.subr.mxu0 0.0
        %4447 = vmatpush1.msra.mxu0 0.0
        %4448 = vmatprep.subr.mxu0 0.0
        %4449 = vmatpush1.msra.mxu0 0.0
        %4450 = vmatprep.subr.mxu0 0.0
        %4451 = vmatpush1.msra.mxu0 0.0
        %4452 = vmatprep.subr.mxu0 0.0
        %4453 = vmatpush1.msra.mxu0 0.0
        %4454 = vmatprep.subr.mxu0 0.0
        %4455 = vmatpush1.msra.mxu0 0.0
        %4456 = vmatprep.subr.mxu0 0.0
        %4457 = vmatpush1.msra.mxu0 0.0
        %4458 = vmatprep.subr.mxu0 0.0
        %4459 = vmatpush1.msra.mxu0 0.0
        %4460 = vmatprep.subr.mxu0 0.0
        %4461 = vmatpush1.msra.mxu0 0.0
        %4462 = vmatprep.subr.mxu0 0.0
        %4463 = vmatpush1.msra.mxu0 0.0
        %4464 = vmatprep.subr.mxu0 0.0
        %4465 = vmatpush1.msra.mxu0 0.0
        %4466 = vmatprep.subr.mxu0 0.0
        %4467 = vmatpush1.msra.mxu0 0.0
        %4468 = vmatprep.subr.mxu0 0.0
        %4469 = vmatpush1.msra.mxu0 0.0
        %4470 = vmatprep.subr.mxu0 0.0
        %4471 = vmatpush1.msra.mxu0 0.0
        %4472 = vmatprep.subr.mxu0 0.0
        %4473 = vmatpush1.msra.mxu0 0.0
        %4474 = vmatprep.subr.mxu0 0.0
        %4475 = vmatpush1.msra.mxu0 0.0
        %4476 = vmatprep.subr.mxu0 0.0
        %4477 = vmatpush1.msra.mxu0 %v1094
        %4478 = vmatprep.subr.mxu0 0.0
        %4479 = vmatpush2.msra.mxu0 0.0
        %4480 = vmatprep.subr.mxu0 0.0
        %4481 = vmatpush2.msra.mxu0 0.0
        %4482 = vmatprep.subr.mxu0 0.0
        %4483 = vmatpush2.msra.mxu0 0.0
        %4484 = vmatprep.subr.mxu0 0.0
        %4485 = vmatpush2.msra.mxu0 0.0
        %4486 = vmatprep.subr.mxu0 0.0
        %4487 = vmatpush2.msra.mxu0 0.0
        %4488 = vmatprep.subr.mxu0 0.0
        %4489 = vmatpush2.msra.mxu0 0.0
        %4490 = vmatprep.subr.mxu0 0.0
        %4491 = vmatpush2.msra.mxu0 0.0
        %4492 = vmatprep.subr.mxu0 0.0
        %4493 = vmatpush2.msra.mxu0 0.0
        %4494 = vmatprep.subr.mxu0 0.0
        %4495 = vmatpush2.msra.mxu0 0.0
        %4496 = vmatprep.subr.mxu0 0.0
        %4497 = vmatpush2.msra.mxu0 0.0
        %4498 = vmatprep.subr.mxu0 0.0
        %4499 = vmatpush2.msra.mxu0 0.0
        %4500 = vmatprep.subr.mxu0 0.0
        %4501 = vmatpush2.msra.mxu0 0.0
        %4502 = vmatprep.subr.mxu0 0.0
        %4503 = vmatpush2.msra.mxu0 0.0
        %4504 = vmatprep.subr.mxu0 0.0
        %4505 = vmatpush2.msra.mxu0 0.0
        %4506 = vmatprep.subr.mxu0 0.0
        %4507 = vmatpush2.msra.mxu0 0.0
        %4508 = vmatprep.subr.mxu0 0.0
        %4509 = vmatpush2.msra.mxu0 0.0
        %4510 = vmatprep.mubr.f32.mxu0 0.0
        %4511 = vmatmul.mubr.f32.gmra.mxu0 %v3479
        %v4512 = vpop.f32.mrf.mxu0
        %v4513 = vadd.f32 0.0, %v4512
        %v4514 = vpop.f32.mrf.mxu0
        %4515 = vmatprep.mubr.f32.mxu0 0.0
        %4516 = vmatmul.mubr.f32.gmra.mxu0 %v3482
        %v4517 = vpop.f32.mrf.mxu0
        %v4518 = vadd.f32 0.0, %v4517
        %v4519 = vpop.f32.mrf.mxu0
        %4520 = vmatprep.mubr.f32.mxu0 0.0
        %4521 = vmatmul.mubr.f32.gmra.mxu0 %v3485
        %v4522 = vpop.f32.mrf.mxu0
        %v4523 = vadd.f32 0.0, %v4522
        %v4524 = vpop.f32.mrf.mxu0
        %4525 = vmatprep.mubr.f32.mxu0 0.0
        %4526 = vmatmul.mubr.f32.gmra.mxu0 %v3488
        %v4527 = vpop.f32.mrf.mxu0
        %v4528 = vadd.f32 0.0, %v4527
        %v4529 = vpop.f32.mrf.mxu0
        %4530 = vmatprep.mubr.f32.mxu0 0.0
        %4531 = vmatmul.mubr.f32.gmra.mxu0 %v3491
        %v4532 = vpop.f32.mrf.mxu0
        %v4533 = vadd.f32 0.0, %v4532
        %v4534 = vpop.f32.mrf.mxu0
        %4535 = vmatprep.mubr.f32.mxu0 0.0
        %4536 = vmatmul.mubr.f32.gmra.mxu0 %v3494
        %v4537 = vpop.f32.mrf.mxu0
        %v4538 = vadd.f32 0.0, %v4537
        %v4539 = vpop.f32.mrf.mxu0
        %4540 = vmatprep.mubr.f32.mxu0 0.0
        %4541 = vmatmul.mubr.f32.gmra.mxu0 %v3497
        %v4542 = vpop.f32.mrf.mxu0
        %v4543 = vadd.f32 0.0, %v4542
        %v4544 = vpop.f32.mrf.mxu0
        %4545 = vmatprep.mubr.f32.mxu0 0.0
        %4546 = vmatmul.mubr.f32.gmra.mxu0 %v3500
        %v4547 = vpop.f32.mrf.mxu0
        %v4548 = vadd.f32 0.0, %v4547
        %v4549 = vpop.f32.mrf.mxu0
        %4550 = vdwg.mxu0
        %v4551 = vadd.f32 %v4438, %v4513
        %v4552 = vadd.f32 %v4439, %v4518
        %v4553 = vadd.f32 %v4440, %v4523
        %v4554 = vadd.f32 %v4441, %v4528
        %v4555 = vadd.f32 %v4442, %v4533
        %v4556 = vadd.f32 %v4443, %v4538
        %v4557 = vadd.f32 %v4444, %v4543
        %v4558 = vadd.f32 %v4445, %v4548
        %4559 = vmatprep.subr.mxu0 0.0
        %4560 = vmatpush1.msra.mxu0 0.0
        %4561 = vmatprep.subr.mxu0 0.0
        %4562 = vmatpush1.msra.mxu0 0.0
        %4563 = vmatprep.subr.mxu0 0.0
        %4564 = vmatpush1.msra.mxu0 0.0
        %4565 = vmatprep.subr.mxu0 0.0
        %4566 = vmatpush1.msra.mxu0 0.0
        %4567 = vmatprep.subr.mxu0 0.0
        %4568 = vmatpush1.msra.mxu0 0.0
        %4569 = vmatprep.subr.mxu0 0.0
        %4570 = vmatpush1.msra.mxu0 0.0
        %4571 = vmatprep.subr.mxu0 0.0
        %4572 = vmatpush1.msra.mxu0 0.0
        %4573 = vmatprep.subr.mxu0 0.0
        %4574 = vmatpush1.msra.mxu0 0.0
        %4575 = vmatprep.subr.mxu0 0.0
        %4576 = vmatpush1.msra.mxu0 0.0
        %4577 = vmatprep.subr.mxu0 0.0
        %4578 = vmatpush1.msra.mxu0 0.0
        %4579 = vmatprep.subr.mxu0 0.0
        %4580 = vmatpush1.msra.mxu0 0.0
        %4581 = vmatprep.subr.mxu0 0.0
        %4582 = vmatpush1.msra.mxu0 0.0
        %4583 = vmatprep.subr.mxu0 0.0
        %4584 = vmatpush1.msra.mxu0 0.0
        %4585 = vmatprep.subr.mxu0 0.0
        %4586 = vmatpush1.msra.mxu0 0.0
        %4587 = vmatprep.subr.mxu0 0.0
        %4588 = vmatpush1.msra.mxu0 0.0
        %4589 = vmatprep.subr.mxu0 0.0
        %4590 = vmatpush1.msra.mxu0 %v1245
        %4591 = vmatprep.subr.mxu0 0.0
        %4592 = vmatpush2.msra.mxu0 0.0
        %4593 = vmatprep.subr.mxu0 0.0
        %4594 = vmatpush2.msra.mxu0 0.0
        %4595 = vmatprep.subr.mxu0 0.0
        %4596 = vmatpush2.msra.mxu0 0.0
        %4597 = vmatprep.subr.mxu0 0.0
        %4598 = vmatpush2.msra.mxu0 0.0
        %4599 = vmatprep.subr.mxu0 0.0
        %4600 = vmatpush2.msra.mxu0 0.0
        %4601 = vmatprep.subr.mxu0 0.0
        %4602 = vmatpush2.msra.mxu0 0.0
        %4603 = vmatprep.subr.mxu0 0.0
        %4604 = vmatpush2.msra.mxu0 0.0
        %4605 = vmatprep.subr.mxu0 0.0
        %4606 = vmatpush2.msra.mxu0 0.0
        %4607 = vmatprep.subr.mxu0 0.0
        %4608 = vmatpush2.msra.mxu0 0.0
        %4609 = vmatprep.subr.mxu0 0.0
        %4610 = vmatpush2.msra.mxu0 0.0
        %4611 = vmatprep.subr.mxu0 0.0
        %4612 = vmatpush2.msra.mxu0 0.0
        %4613 = vmatprep.subr.mxu0 0.0
        %4614 = vmatpush2.msra.mxu0 0.0
        %4615 = vmatprep.subr.mxu0 0.0
        %4616 = vmatpush2.msra.mxu0 0.0
        %4617 = vmatprep.subr.mxu0 0.0
        %4618 = vmatpush2.msra.mxu0 0.0
        %4619 = vmatprep.subr.mxu0 0.0
        %4620 = vmatpush2.msra.mxu0 0.0
        %4621 = vmatprep.subr.mxu0 0.0
        %4622 = vmatpush2.msra.mxu0 0.0
        %4623 = vmatprep.mubr.f32.mxu0 0.0
        %4624 = vmatmul.mubr.f32.gmra.mxu0 %v3624
        %v4625 = vpop.f32.mrf.mxu0
        %v4626 = vadd.f32 0.0, %v4625
        %v4627 = vpop.f32.mrf.mxu0
        %4628 = vmatprep.mubr.f32.mxu0 0.0
        %4629 = vmatmul.mubr.f32.gmra.mxu0 %v3627
        %v4630 = vpop.f32.mrf.mxu0
        %v4631 = vadd.f32 0.0, %v4630
        %v4632 = vpop.f32.mrf.mxu0
        %4633 = vmatprep.mubr.f32.mxu0 0.0
        %4634 = vmatmul.mubr.f32.gmra.mxu0 %v3630
        %v4635 = vpop.f32.mrf.mxu0
        %v4636 = vadd.f32 0.0, %v4635
        %v4637 = vpop.f32.mrf.mxu0
        %4638 = vmatprep.mubr.f32.mxu0 0.0
        %4639 = vmatmul.mubr.f32.gmra.mxu0 %v3633
        %v4640 = vpop.f32.mrf.mxu0
        %v4641 = vadd.f32 0.0, %v4640
        %v4642 = vpop.f32.mrf.mxu0
        %4643 = vmatprep.mubr.f32.mxu0 0.0
        %4644 = vmatmul.mubr.f32.gmra.mxu0 %v3636
        %v4645 = vpop.f32.mrf.mxu0
        %v4646 = vadd.f32 0.0, %v4645
        %v4647 = vpop.f32.mrf.mxu0
        %4648 = vmatprep.mubr.f32.mxu0 0.0
        %4649 = vmatmul.mubr.f32.gmra.mxu0 %v3639
        %v4650 = vpop.f32.mrf.mxu0
        %v4651 = vadd.f32 0.0, %v4650
        %v4652 = vpop.f32.mrf.mxu0
        %4653 = vmatprep.mubr.f32.mxu0 0.0
        %4654 = vmatmul.mubr.f32.gmra.mxu0 %v3642
        %v4655 = vpop.f32.mrf.mxu0
        %v4656 = vadd.f32 0.0, %v4655
        %v4657 = vpop.f32.mrf.mxu0
        %4658 = vmatprep.mubr.f32.mxu0 0.0
        %4659 = vmatmul.mubr.f32.gmra.mxu0 %v3645
        %v4660 = vpop.f32.mrf.mxu0
        %v4661 = vadd.f32 0.0, %v4660
        %v4662 = vpop.f32.mrf.mxu0
        %4663 = vdwg.mxu0
        %v4664 = vadd.f32 %v4551, %v4626
        %v4665 = vadd.f32 %v4552, %v4631
        %v4666 = vadd.f32 %v4553, %v4636
        %v4667 = vadd.f32 %v4554, %v4641
        %v4668 = vadd.f32 %v4555, %v4646
        %v4669 = vadd.f32 %v4556, %v4651
        %v4670 = vadd.f32 %v4557, %v4656
        %v4671 = vadd.f32 %v4558, %v4661
        %v4672 = vld [vmem:[%s3469 + $0x1] sm:$0xff]
        %v4673 = vld [vmem:[%s3469 + $0x11] sm:$0xff]
        %v4674 = vld [vmem:[%s3469 + $0x21] sm:$0xff]
        %v4675 = vld [vmem:[%s3469 + $0x31] sm:$0xff]
        %v4676 = vld [vmem:[%s3469 + $0x41] sm:$0xff]
        %v4677 = vld [vmem:[%s3469 + $0x51] sm:$0xff]
        %v4678 = vld [vmem:[%s3469 + $0x61] sm:$0xff]
        %v4679 = vld [vmem:[%s3469 + $0x71] sm:$0xff]
        %v4681 = vsel %vm190, %v4672, 0
        %v4684 = vsel %vm190, %v4673, 0
        %v4687 = vsel %vm190, %v4674, 0
        %v4690 = vsel %vm190, %v4675, 0
        %v4693 = vsel %vm190, %v4676, 0
        %v4696 = vsel %vm190, %v4677, 0
        %v4699 = vsel %vm190, %v4678, 0
        %v4702 = vsel %vm190, %v4679, 0
        %4704 = vmatprep.subr.mxu0 0.0
        %4705 = vmatpush1.msra.mxu0 0.0
        %4706 = vmatprep.subr.mxu0 0.0
        %4707 = vmatpush1.msra.mxu0 0.0
        %4708 = vmatprep.subr.mxu0 0.0
        %4709 = vmatpush1.msra.mxu0 0.0
        %4710 = vmatprep.subr.mxu0 0.0
        %4711 = vmatpush1.msra.mxu0 0.0
        %4712 = vmatprep.subr.mxu0 0.0
        %4713 = vmatpush1.msra.mxu0 0.0
        %4714 = vmatprep.subr.mxu0 0.0
        %4715 = vmatpush1.msra.mxu0 0.0
        %4716 = vmatprep.subr.mxu0 0.0
        %4717 = vmatpush1.msra.mxu0 0.0
        %4718 = vmatprep.subr.mxu0 0.0
        %4719 = vmatpush1.msra.mxu0 0.0
        %4720 = vmatprep.subr.mxu0 0.0
        %4721 = vmatpush1.msra.mxu0 0.0
        %4722 = vmatprep.subr.mxu0 0.0
        %4723 = vmatpush1.msra.mxu0 0.0
        %4724 = vmatprep.subr.mxu0 0.0
        %4725 = vmatpush1.msra.mxu0 0.0
        %4726 = vmatprep.subr.mxu0 0.0
        %4727 = vmatpush1.msra.mxu0 0.0
        %4728 = vmatprep.subr.mxu0 0.0
        %4729 = vmatpush1.msra.mxu0 0.0
        %4730 = vmatprep.subr.mxu0 0.0
        %4731 = vmatpush1.msra.mxu0 0.0
        %4732 = vmatprep.subr.mxu0 0.0
        %4733 = vmatpush1.msra.mxu0 0.0
        %4734 = vmatprep.subr.mxu0 0.0
        %4735 = vmatpush1.msra.mxu0 %v1395
        %4736 = vmatprep.subr.mxu0 0.0
        %4737 = vmatpush2.msra.mxu0 0.0
        %4738 = vmatprep.subr.mxu0 0.0
        %4739 = vmatpush2.msra.mxu0 0.0
        %4740 = vmatprep.subr.mxu0 0.0
        %4741 = vmatpush2.msra.mxu0 0.0
        %4742 = vmatprep.subr.mxu0 0.0
        %4743 = vmatpush2.msra.mxu0 0.0
        %4744 = vmatprep.subr.mxu0 0.0
        %4745 = vmatpush2.msra.mxu0 0.0
        %4746 = vmatprep.subr.mxu0 0.0
        %4747 = vmatpush2.msra.mxu0 0.0
        %4748 = vmatprep.subr.mxu0 0.0
        %4749 = vmatpush2.msra.mxu0 0.0
        %4750 = vmatprep.subr.mxu0 0.0
        %4751 = vmatpush2.msra.mxu0 0.0
        %4752 = vmatprep.subr.mxu0 0.0
        %4753 = vmatpush2.msra.mxu0 0.0
        %4754 = vmatprep.subr.mxu0 0.0
        %4755 = vmatpush2.msra.mxu0 0.0
        %4756 = vmatprep.subr.mxu0 0.0
        %4757 = vmatpush2.msra.mxu0 0.0
        %4758 = vmatprep.subr.mxu0 0.0
        %4759 = vmatpush2.msra.mxu0 0.0
        %4760 = vmatprep.subr.mxu0 0.0
        %4761 = vmatpush2.msra.mxu0 0.0
        %4762 = vmatprep.subr.mxu0 0.0
        %4763 = vmatpush2.msra.mxu0 0.0
        %4764 = vmatprep.subr.mxu0 0.0
        %4765 = vmatpush2.msra.mxu0 0.0
        %4766 = vmatprep.subr.mxu0 0.0
        %4767 = vmatpush2.msra.mxu0 0.0
        %4768 = vmatprep.mubr.f32.mxu0 0.0
        %4769 = vmatmul.mubr.f32.gmra.mxu0 %v4681
        %v4770 = vpop.f32.mrf.mxu0
        %v4771 = vadd.f32 0.0, %v4770
        %v4772 = vpop.f32.mrf.mxu0
        %4773 = vmatprep.mubr.f32.mxu0 0.0
        %4774 = vmatmul.mubr.f32.gmra.mxu0 %v4684
        %v4775 = vpop.f32.mrf.mxu0
        %v4776 = vadd.f32 0.0, %v4775
        %v4777 = vpop.f32.mrf.mxu0
        %4778 = vmatprep.mubr.f32.mxu0 0.0
        %4779 = vmatmul.mubr.f32.gmra.mxu0 %v4687
        %v4780 = vpop.f32.mrf.mxu0
        %v4781 = vadd.f32 0.0, %v4780
        %v4782 = vpop.f32.mrf.mxu0
        %4783 = vmatprep.mubr.f32.mxu0 0.0
        %4784 = vmatmul.mubr.f32.gmra.mxu0 %v4690
        %v4785 = vpop.f32.mrf.mxu0
        %v4786 = vadd.f32 0.0, %v4785
        %v4787 = vpop.f32.mrf.mxu0
        %4788 = vmatprep.mubr.f32.mxu0 0.0
        %4789 = vmatmul.mubr.f32.gmra.mxu0 %v4693
        %v4790 = vpop.f32.mrf.mxu0
        %v4791 = vadd.f32 0.0, %v4790
        %v4792 = vpop.f32.mrf.mxu0
        %4793 = vmatprep.mubr.f32.mxu0 0.0
        %4794 = vmatmul.mubr.f32.gmra.mxu0 %v4696
        %v4795 = vpop.f32.mrf.mxu0
        %v4796 = vadd.f32 0.0, %v4795
        %v4797 = vpop.f32.mrf.mxu0
        %4798 = vmatprep.mubr.f32.mxu0 0.0
        %4799 = vmatmul.mubr.f32.gmra.mxu0 %v4699
        %v4800 = vpop.f32.mrf.mxu0
        %v4801 = vadd.f32 0.0, %v4800
        %v4802 = vpop.f32.mrf.mxu0
        %4803 = vmatprep.mubr.f32.mxu0 0.0
        %4804 = vmatmul.mubr.f32.gmra.mxu0 %v4702
        %v4805 = vpop.f32.mrf.mxu0
        %v4806 = vadd.f32 0.0, %v4805
        %v4807 = vpop.f32.mrf.mxu0
        %4808 = vdwg.mxu0
        %v4809 = vadd.f32 %v4664, %v4771
        %v4810 = vadd.f32 %v4665, %v4776
        %v4811 = vadd.f32 %v4666, %v4781
        %v4812 = vadd.f32 %v4667, %v4786
        %v4813 = vadd.f32 %v4668, %v4791
        %v4814 = vadd.f32 %v4669, %v4796
        %v4815 = vadd.f32 %v4670, %v4801
        %v4816 = vadd.f32 %v4671, %v4806
        %v4817 = vadd.f32 %v4809, %v1514
        %v4818 = vadd.f32 %v4810, %v1514
        %v4819 = vadd.f32 %v4811, %v1514
        %v4820 = vadd.f32 %v4812, %v1514
        %v4821 = vadd.f32 %v4813, %v1514
        %v4822 = vadd.f32 %v4814, %v1514
        %v4823 = vadd.f32 %v4815, %v1514
        %v4824 = vadd.f32 %v4816, %v1514
        %v4825 = vmax.f32 %v4817, 0.0
        %v4826 = vmax.f32 %v4818, 0.0
        %v4827 = vmax.f32 %v4819, 0.0
        %v4828 = vmax.f32 %v4820, 0.0
        %v4829 = vmax.f32 %v4821, 0.0
        %v4830 = vmax.f32 %v4822, 0.0
        %v4831 = vmax.f32 %v4823, 0.0
        %v4832 = vmax.f32 %v4824, 0.0
        %v4833 = vadd.f32 %v3776, %v4825
        %v4834 = vadd.f32 %v3777, %v4826
        %v4835 = vadd.f32 %v3778, %v4827
        %v4836 = vadd.f32 %v3779, %v4828
        %v4837 = vadd.f32 %v3780, %v4829
        %v4838 = vadd.f32 %v3781, %v4830
        %v4839 = vadd.f32 %v3782, %v4831
        %v4840 = vadd.f32 %v3783, %v4832
        %v4841 = vmul.f32 %v4833, 0.25
        %v4842 = vmul.f32 %v4834, 0.25
        %v4843 = vmul.f32 %v4835, 0.25
        %v4844 = vmul.f32 %v4836, 0.25
        %v4845 = vmul.f32 %v4837, 0.25
        %v4846 = vmul.f32 %v4838, 0.25
        %v4847 = vmul.f32 %v4839, 0.25
        %v4848 = vmul.f32 %v4840, 0.25
        %4849 = vxpose.xlu0.b32.start [1/16] %v4841, 128
        %4850 = vxpose.xlu0.b32.cont [2/16] %v4842, 128
        %4851 = vxpose.xlu0.b32.cont [3/16] %v4843, 128
        %4852 = vxpose.xlu0.b32.cont [4/16] %v4844, 128
        %4853 = vxpose.xlu0.b32.cont [5/16] %v4845, 128
        %4854 = vxpose.xlu0.b32.cont [6/16] %v4846, 128
        %4855 = vxpose.xlu0.b32.cont [7/16] %v4847, 128
        %4856 = vxpose.xlu0.b32.cont [8/16] %v4848, 128
        %4857 = vxpose.xlu0.b32.cont [9/16] 0.0, 128
        %4858 = vxpose.xlu0.b32.cont [10/16] 0.0, 128
        %4859 = vxpose.xlu0.b32.cont [11/16] 0.0, 128
        %4860 = vxpose.xlu0.b32.cont [12/16] 0.0, 128
        %4861 = vxpose.xlu0.b32.cont [13/16] 0.0, 128
        %4862 = vxpose.xlu0.b32.cont [14/16] 0.0, 128
        %4863 = vxpose.xlu0.b32.cont [15/16] 0.0, 128
        %4864 = vxpose.xlu0.b32.end [16/16] 0.0, 128
        %v4865 = vpop.trf.xlu0
        %v4866 = vpop.trf.xlu0
        %v4867 = vpop.trf.xlu0
        %v4868 = vpop.trf.xlu0
        %v4869 = vpop.trf.xlu0
        %v4870 = vpop.trf.xlu0
        %v4871 = vpop.trf.xlu0
        %v4872 = vpop.trf.xlu0
        %v4873 = vpop.trf.xlu0
        %v4874 = vpop.trf.xlu0
        %v4875 = vpop.trf.xlu0
        %v4876 = vpop.trf.xlu0
        %v4877 = vpop.trf.xlu0
        %v4878 = vpop.trf.xlu0
        %v4879 = vpop.trf.xlu0
        %v4880 = vpop.trf.xlu0
        %vm4881 = vcmask 523264
        %4882 = vst.msk [vmem:[%s163] sm:$0xff] %vm4881, %v4865
        %s4883 = sand.u32 %s93, 1
        %s4884 = scalar_lea.sflag [#allocation3], %s4883
        %s4885 = sand.u32 %s93, 1
        %s4886 = smul.addr %s4885, 8
        %s4887 = scalar_lea.vmem [#allocation2], %s4886
        // Predicated region
        $region33: #{tpu_custom_call.1} parent=31 // pred_check
          %p4888 = pneg %p103
        $region34: #{tpu_custom_call.1} parent=31 // pred_check_branch
          %4890 = sbr.rel (%p4888) target = $region36
        $region35: #{tpu_custom_call.1} parent=31 // pred_region
          %s4892 = ssub.s32 128, 128
          %4893 = vsyncadd %s4884, %s4892
          %s4894 = smul.addr %s17, 128
          %s4895 = scalar_lea.hbm %s3, %s4894
          %s4897 = sshll.u32 %s4887, 4
          %s4898 = int_to_ptr.vmem [resolvable:$true] %s4897
          %4900 = dma.vmem_to_hbm [thread:$0]  %s4898, 128, %s4895, %s4884
        $region36: #{tpu_custom_call.1} parent=31 // pred_fallthru
          _
      $region32: #{tpu_custom_call.1} parent=5 // pred_fallthru
        _
      %p4901 = scmp.le.s32.totalorder 2, %s12
      // Predicated region
      $region37: #{tpu_custom_call.1} parent=5 // pred_check
        %p4902 = pneg %p4901
      $region38: #{tpu_custom_call.1} parent=5 // pred_check_branch
        %4904 = sbr.rel (%p4902) target = $region40
      $region39: #{tpu_custom_call.1} parent=5 // pred_region
        %s4905 = ssub.s32 %s12, 2
        // Predicated region
        $region41: #{tpu_custom_call.1} parent=39 // pred_check
          %p4906 = pneg %p109
        $region42: #{tpu_custom_call.1} parent=39 // pred_check_branch
          %4908 = sbr.rel (%p4906) target = $region44
        $region43: #{tpu_custom_call.1} parent=39 // pred_region
          %s4909 = sand.u32 %s94, 1
          %s4910 = scalar_lea.sflag [#allocation3], %s4909
          %s4911 = sand.u32 %s94, 1
          %s4912 = smul.addr %s4911, 8
          %s4913 = scalar_lea.vmem [#allocation2], %s4912
          %4914 = dma.done %s4910, 128
        $region44: #{tpu_custom_call.1} parent=39 // pred_fallthru
          _
      $region40: #{tpu_custom_call.1} parent=5 // pred_fallthru
        _
    $region6: #{tpu_custom_call.1} parent=1 // loop_footer
      %s16 = sadd.s32 1, %s12
    $region7: #{tpu_custom_call.1} parent=1 // loop_footer_branch
      %11 = sbr.rel target = $region3
    $region8: #{tpu_custom_call.1} parent=1 // loop_exit
      _
    %4915 = vsyncpa [#allocation3], 1
    %s4916 = scalar_lea.sflag [#allocation3], 1
    %4917 = vsyncpa %s4916, 1

</llo_original>
